<compile_context>
chip_gen: v6e
topology: v6e:2x2x1
jax: 0.10.0
libtpu: 0.0.40
codegen_flags: <defaults>
</compile_context>

<pallas_src>
import functools
import math

import jax
import jax.numpy as jnp
from jax.experimental import pallas as pl
from jax.experimental.pallas import tpu as pltpu


# ----------------------------------------------------------------------------
# Config (small, consistent with ModelConfig semantics)
# ----------------------------------------------------------------------------
N_DIM = 64
N_LAYERS = 2
N_HEADS = 4
N_KV_HEADS = 2
VOCAB_SIZE = 128
NORM_EPS = 1e-6
SEQ_LEN = 8
BATCH = 2
MULTIPLE_OF = 64
FFN_DIM_MULTIPLE = None
ROPE_THETA = 10000.0

HEAD_DIM = N_DIM // N_HEADS                     # 16
N_REP = N_HEADS // N_KV_HEADS                   # 2
QKV_N = (N_HEADS + 2 * N_KV_HEADS) * HEAD_DIM   # 128 (lane-dense)


def ffn_hidden_dim(dim, multiple_of, ffn_dim_multiple):
    hidden = 4 * dim
    hidden = int(2 * hidden / 3)
    if ffn_dim_multiple is not None:
        hidden = int(ffn_dim_multiple * hidden)
    hidden = multiple_of * ((hidden + multiple_of - 1) // multiple_of)
    return hidden


FFN_HIDDEN = ffn_hidden_dim(N_DIM, MULTIPLE_OF, FFN_DIM_MULTIPLE)   # 192


# ----------------------------------------------------------------------------
# Single fused kernel: all layers + final norm + LM head (one batch element)
# ----------------------------------------------------------------------------
def _rmsnorm_f32(x, w, eps):
    var = jnp.mean(x * x, axis=-1, keepdims=True)
    return x * jax.lax.rsqrt(var + eps) * w


def _llama_kernel(h_ref, cos_ref, sin_ref,
                  attn_nw_ref, wqkv_ref, wo_ref,
                  ffn_nw_ref, w1_ref, w3_ref, w2_ref,
                  out_nw_ref, wout_ref, o_ref,
                  *, eps, scale, n_layers, n_heads, n_kv_heads, head_dim):
    x = h_ref[0].astype(jnp.float32)                       # (S, D)
    S, D = x.shape
    hd = head_dim
    half = hd // 2
    n_rep = n_heads // n_kv_heads
    wdt = wqkv_ref.dtype                                   # bf16
    q_dim = n_heads * hd
    kv_dim = n_kv_heads * hd

    cos = cos_ref[...]                                     # (S, hd//2) f32
    sin = sin_ref[...]

    # --- causal mask computed once, reused across all layers ---
    row = jax.lax.broadcasted_iota(jnp.int32, (S, S), 0)
    col = jax.lax.broadcasted_iota(jnp.int32, (S, S), 1)
    causal = col <= row

    dn = (((1,), (1,)), ((), ()))                          # contract last dims

    # RoPE on half-slices (rotate-half pairing: dim i <-> i + hd/2).
    # TODO(synk): Meta-Llama uses interleaved pairs; with random weights the two
    # conventions are equivalent up to a fixed lane permutation of Wq/Wk.
    def rope_halves(a1, a2):
        return a1 * cos - a2 * sin, a2 * cos + a1 * sin

    for li in range(n_layers):                             # static unroll
        # ------------------- attention block -------------------
        xn = _rmsnorm_f32(x, attn_nw_ref[li].astype(jnp.float32), eps)
        qkv = jnp.dot(xn.astype(wdt), wqkv_ref[li],
                      preferred_element_type=jnp.float32)  # (S, 128) f32
        q = qkv[:, :q_dim]
        k = qkv[:, q_dim:q_dim + kv_dim]
        v = qkv[:, q_dim + kv_dim:q_dim + 2 * kv_dim]

        # pre-rotate K and stage V per kv head (GQA: indexed reuse, no repeat)
        k_rot, v_heads = [], []
        for kv_h in range(n_kv_heads):
            kh = k[:, kv_h * hd:(kv_h + 1) * hd]
            k1, k2 = rope_halves(kh[:, :half], kh[:, half:])
            k_rot.append((k1.astype(wdt), k2.astype(wdt)))
            v_heads.append(v[:, kv_h * hd:(kv_h + 1) * hd].astype(wdt))

        attn_out = jnp.zeros((S, D), jnp.float32)
        for hq in range(n_heads):
            kv_h = hq // n_rep
            qh = q[:, hq * hd:(hq + 1) * hd]
            q1, q2 = rope_halves(qh[:, :half], qh[:, half:])
            k1, k2 = k_rot[kv_h]
            # q @ k^T without materializing a transpose (sum of the two halves)
            s = (jax.lax.dot_general(q1.astype(wdt), k1, dn,
                                     preferred_element_type=jnp.float32) +
                 jax.lax.dot_general(q2.astype(wdt), k2, dn,
                                     preferred_element_type=jnp.float32)) * scale
            s = jnp.where(causal, s, jnp.float32(-1e30))
            m = jnp.max(s, axis=-1, keepdims=True)
            p = jnp.exp(s - m)
            p = p * pl.reciprocal(jnp.sum(p, axis=-1, keepdims=True), approx=True)
            oh = jnp.dot(p.astype(wdt), v_heads[kv_h],
                         preferred_element_type=jnp.float32)        # (S, hd)
            # fold the output projection per head (avoids a lane concat)
            attn_out = attn_out + jnp.dot(
                oh.astype(wdt), wo_ref[li, hq * hd:(hq + 1) * hd, :],
                preferred_element_type=jnp.float32)

        x = x + attn_out

        # ------------------- feed-forward block -------------------
        xn = _rmsnorm_f32(x, ffn_nw_ref[li].astype(jnp.float32), eps)
        xb = xn.astype(wdt)
        h1 = jnp.dot(xb, w1_ref[li], preferred_element_type=jnp.float32)
        h3 = jnp.dot(xb, w3_ref[li], preferred_element_type=jnp.float32)
        g = (h1 * jax.nn.sigmoid(h1)) * h3                 # SwiGLU in f32
        x = x + jnp.dot(g.astype(wdt), w2_ref[li],
                        preferred_element_type=jnp.float32)

    # ------------------- final norm + LM head -------------------
    xn = _rmsnorm_f32(x, out_nw_ref[...].astype(jnp.float32), eps)
    o_ref[0] = jnp.dot(xn.astype(wout_ref.dtype), wout_ref[...],
                       preferred_element_type=jnp.float32).astype(o_ref.dtype)


def llama_fused(h, cos, sin, attn_nw, wqkv, wo, ffn_nw, w1, w3, w2,
                out_nw, wout):
    B, S, D = h.shape
    L = wqkv.shape[0]
    V = wout.shape[1]
    kern = functools.partial(
        _llama_kernel, eps=NORM_EPS, scale=1.0 / math.sqrt(HEAD_DIM),
        n_layers=L, n_heads=N_HEADS, n_kv_heads=N_KV_HEADS, head_dim=HEAD_DIM)
    return pl.pallas_call(
        kern,
        out_shape=jax.ShapeDtypeStruct((B, S, V), jnp.float32),
        grid=(B,),
        in_specs=[
            pl.BlockSpec((1, S, D), lambda b: (b, 0, 0)),                 # h
            pl.BlockSpec((S, HEAD_DIM // 2), lambda b: (0, 0)),           # cos
            pl.BlockSpec((S, HEAD_DIM // 2), lambda b: (0, 0)),           # sin
            pl.BlockSpec((L, 1, D), lambda b: (0, 0, 0)),                 # att norms
            pl.BlockSpec((L, D, QKV_N), lambda b: (0, 0, 0)),             # wqkv
            pl.BlockSpec((L, N_HEADS * HEAD_DIM, D), lambda b: (0, 0, 0)),# wo
            pl.BlockSpec((L, 1, D), lambda b: (0, 0, 0)),                 # ffn norms
            pl.BlockSpec((L, D, FFN_HIDDEN), lambda b: (0, 0, 0)),        # w1
            pl.BlockSpec((L, D, FFN_HIDDEN), lambda b: (0, 0, 0)),        # w3
            pl.BlockSpec((L, FFN_HIDDEN, D), lambda b: (0, 0, 0)),        # w2
            pl.BlockSpec((1, D), lambda b: (0, 0)),                       # out norm
            pl.BlockSpec((D, V), lambda b: (0, 0)),                       # output_w
        ],
        out_specs=pl.BlockSpec((1, S, V), lambda b: (b, 0, 0)),
        compiler_params=pltpu.CompilerParams(dimension_semantics=("parallel",)),
    )(h, cos, sin, attn_nw, wqkv, wo, ffn_nw, w1, w3, w2, out_nw, wout)


# ----------------------------------------------------------------------------
# Plain-JAX glue: RoPE tables, params, model assembly
# ----------------------------------------------------------------------------
def precompute_rope(seq_len, head_dim, theta):
    half = head_dim // 2
    inv_freq = 1.0 / (theta ** (jnp.arange(half, dtype=jnp.float32) * 2.0 / head_dim))
    t = jnp.arange(seq_len, dtype=jnp.float32)
    freqs = jnp.outer(t, inv_freq)          # (S, Dh/2)
    return jnp.cos(freqs), jnp.sin(freqs)


def init_params(key):
    keys = jax.random.split(key, 2 + N_LAYERS)
    scale = 0.02
    params = {
        "embedding": jax.random.normal(keys[0], (VOCAB_SIZE, N_DIM), jnp.float32) * scale,
        "out_norm": jnp.ones((1, N_DIM), jnp.float32),
        "output_w": (jax.random.normal(keys[1], (N_DIM, VOCAB_SIZE), jnp.float32)
                     * scale).astype(jnp.bfloat16),
    }
    att_norms, wqkvs, wos, ff_norms, w1s, w3s, w2s = [], [], [], [], [], [], []
    for li in range(N_LAYERS):
        kl = jax.random.split(keys[2 + li], 7)
        wq = jax.random.normal(kl[0], (N_DIM, N_HEADS * HEAD_DIM), jnp.float32) * scale
        wk = jax.random.normal(kl[1], (N_DIM, N_KV_HEADS * HEAD_DIM), jnp.float32) * scale
        wv = jax.random.normal(kl[2], (N_DIM, N_KV_HEADS * HEAD_DIM), jnp.float32) * scale
        att_norms.append(jnp.ones((1, N_DIM), jnp.float32))
        # concatenated Wq|Wk|Wv -> (D, 128): single lane-dense QKV matmul
        wqkvs.append(jnp.concatenate([wq, wk, wv], axis=1).astype(jnp.bfloat16))
        wos.append((jax.random.normal(kl[3], (N_HEADS * HEAD_DIM, N_DIM), jnp.float32)
                    * scale).astype(jnp.bfloat16))
        ff_norms.append(jnp.ones((1, N_DIM), jnp.float32))
        w1s.append((jax.random.normal(kl[4], (N_DIM, FFN_HIDDEN), jnp.float32)
                    * scale).astype(jnp.bfloat16))
        w3s.append((jax.random.normal(kl[5], (N_DIM, FFN_HIDDEN), jnp.float32)
                    * scale).astype(jnp.bfloat16))
        w2s.append((jax.random.normal(kl[6], (FFN_HIDDEN, N_DIM), jnp.float32)
                    * scale).astype(jnp.bfloat16))
    # stack per-layer weights along a leading layer axis (one fused kernel)
    params["attn_norm"] = jnp.stack(att_norms)   # (L, 1, D) f32
    params["wqkv"] = jnp.stack(wqkvs)            # (L, D, 128) bf16
    params["wo"] = jnp.stack(wos)                # (L, 64, D) bf16
    params["ffn_norm"] = jnp.stack(ff_norms)     # (L, 1, D) f32
    params["w1"] = jnp.stack(w1s)                # (L, D, F) bf16
    params["w3"] = jnp.stack(w3s)                # (L, D, F) bf16
    params["w2"] = jnp.stack(w2s)                # (L, F, D) bf16
    return params


def llama_forward(params, tokens, start_pos=0, is_infer=False):
    """tokens: (B, S) int32 -> logits (B, S, VOCAB_SIZE).
    # TODO(synk): is_infer=True KV-cache decode path not implemented; this is
    # the full-sequence (training/prefill) causal forward with start_pos=0.
    """
    B, S = tokens.shape
    h = jnp.take(params["embedding"], tokens, axis=0)     # (B, S, D) f32
    cos, sin = precompute_rope(S, HEAD_DIM, ROPE_THETA)
    return llama_fused(h, cos, sin,
                       params["attn_norm"], params["wqkv"], params["wo"],
                       params["ffn_norm"], params["w1"], params["w3"], params["w2"],
                       params["out_norm"], params["output_w"])


if __name__ == "__main__":
    key = jax.random.PRNGKey(0)
    pkey, tkey = jax.random.split(key)
    params = init_params(pkey)
    tokens = jax.random.randint(tkey, (BATCH, SEQ_LEN), 0, VOCAB_SIZE, dtype=jnp.int32)

    logits = jax.jit(llama_forward)(params, tokens)
    jax.block_until_ready(logits)

    assert logits.shape == (BATCH, SEQ_LEN, VOCAB_SIZE)
    assert bool(jnp.all(jnp.isfinite(logits)))
    print("KERNEL_OK")
</pallas_src>

<mosaic_0001>
module attributes {stable_mosaic.version = 11 : i64} {
  func.func @_llama_kernel(%arg0: i32, %arg1: memref<1x8x64xf32, #tpu.memory_space<vmem>>, %arg2: memref<8x8xf32, #tpu.memory_space<vmem>>, %arg3: memref<8x8xf32, #tpu.memory_space<vmem>>, %arg4: memref<2x1x64xf32, #tpu.memory_space<vmem>>, %arg5: memref<2x64x128xbf16, #tpu.memory_space<vmem>>, %arg6: memref<2x64x64xbf16, #tpu.memory_space<vmem>>, %arg7: memref<2x1x64xf32, #tpu.memory_space<vmem>>, %arg8: memref<2x64x192xbf16, #tpu.memory_space<vmem>>, %arg9: memref<2x64x192xbf16, #tpu.memory_space<vmem>>, %arg10: memref<2x192x64xbf16, #tpu.memory_space<vmem>>, %arg11: memref<1x64xf32, #tpu.memory_space<vmem>>, %arg12: memref<64x128xbf16, #tpu.memory_space<vmem>>, %arg13: memref<1x8x128xf32, #tpu.memory_space<vmem>>) attributes {dimension_semantics = [#tpu.dimension_semantics<parallel>], iteration_bounds = array<i64: 2>, scalar_prefetch = 0 : i64, scratch_operands = 0 : i64, tpu.core_type = #tpu.core_type<tc>, window_params = [{transform_indices = @transform_0, window_bounds = array<i64: 1, 8, 64>}, {pipeline_mode = #tpu.pipeline_mode<synchronous>, transform_indices = @transform_1, window_bounds = array<i64: 8, 8>}, {pipeline_mode = #tpu.pipeline_mode<synchronous>, transform_indices = @transform_2, window_bounds = array<i64: 8, 8>}, {pipeline_mode = #tpu.pipeline_mode<synchronous>, transform_indices = @transform_3, window_bounds = array<i64: 2, 1, 64>}, {pipeline_mode = #tpu.pipeline_mode<synchronous>, transform_indices = @transform_4, window_bounds = array<i64: 2, 64, 128>}, {pipeline_mode = #tpu.pipeline_mode<synchronous>, transform_indices = @transform_5, window_bounds = array<i64: 2, 64, 64>}, {pipeline_mode = #tpu.pipeline_mode<synchronous>, transform_indices = @transform_6, window_bounds = array<i64: 2, 1, 64>}, {pipeline_mode = #tpu.pipeline_mode<synchronous>, transform_indices = @transform_7, window_bounds = array<i64: 2, 64, 192>}, {pipeline_mode = #tpu.pipeline_mode<synchronous>, transform_indices = @transform_8, window_bounds = array<i64: 2, 64, 192>}, {pipeline_mode = #tpu.pipeline_mode<synchronous>, transform_indices = @transform_9, window_bounds = array<i64: 2, 192, 64>}, {pipeline_mode = #tpu.pipeline_mode<synchronous>, transform_indices = @transform_10, window_bounds = array<i64: 1, 64>}, {pipeline_mode = #tpu.pipeline_mode<synchronous>, transform_indices = @transform_11, window_bounds = array<i64: 64, 128>}, {transform_indices = @transform_12, window_bounds = array<i64: 1, 8, 128>}]} {
    %c0 = arith.constant 0 : index
    %c0_0 = arith.constant 0 : index
    %c0_1 = arith.constant 0 : index
    %0 = vector.load %arg1[%c0, %c0_0, %c0_1] : memref<1x8x64xf32, #tpu.memory_space<vmem>>, vector<1x8x64xf32>
    %1 = vector.shape_cast %0 : vector<1x8x64xf32> to vector<8x64xf32>
    %c0_2 = arith.constant 0 : index
    %c0_3 = arith.constant 0 : index
    %2 = vector.load %arg2[%c0_2, %c0_3] : memref<8x8xf32, #tpu.memory_space<vmem>>, vector<8x8xf32>
    %c0_4 = arith.constant 0 : index
    %c0_5 = arith.constant 0 : index
    %3 = vector.load %arg3[%c0_4, %c0_5] : memref<8x8xf32, #tpu.memory_space<vmem>>, vector<8x8xf32>
    %4 = tpu.iota {dimensions = array<i32: 0>} : vector<8x8xi32>
    %5 = tpu.iota {dimensions = array<i32: 1>} : vector<8x8xi32>
    %6 = arith.cmpi sle, %5, %4 : vector<8x8xi32>
    %c0_6 = arith.constant 0 : index
    %c0_7 = arith.constant 0 : index
    %c0_8 = arith.constant 0 : index
    %7 = vector.load %arg4[%c0_6, %c0_7, %c0_8] : memref<2x1x64xf32, #tpu.memory_space<vmem>>, vector<1x1x64xf32>
    %8 = vector.shape_cast %7 : vector<1x1x64xf32> to vector<1x64xf32>
    %9 = arith.mulf %1, %1 : vector<8x64xf32>
    %cst = arith.constant dense<0.000000e+00> : vector<8xf32>
    %10 = vector.multi_reduction <add>, %9, %cst [1] : vector<8x64xf32> to vector<8xf32>
    %11 = vector.shape_cast %10 : vector<8xf32> to vector<8x1xf32>
    %cst_9 = arith.constant 6.400000e+01 : f32
    %12 = vector.broadcast %cst_9 : f32 to vector<8x1xf32>
    %13 = arith.divf %11, %12 : vector<8x1xf32>
    %cst_10 = arith.constant 9.99999997E-7 : f32
    %14 = vector.broadcast %cst_10 : f32 to vector<8x1xf32>
    %15 = arith.addf %13, %14 : vector<8x1xf32>
    %16 = math.rsqrt %15 : vector<8x1xf32>
    %17 = vector.broadcast %16 : vector<8x1xf32> to vector<8x64xf32>
    %18 = arith.mulf %1, %17 : vector<8x64xf32>
    %19 = vector.broadcast %8 : vector<1x64xf32> to vector<8x64xf32>
    %20 = arith.mulf %18, %19 : vector<8x64xf32>
    %21 = arith.truncf %20 : vector<8x64xf32> to vector<8x64xbf16>
    %c0_11 = arith.constant 0 : index
    %c0_12 = arith.constant 0 : index
    %c0_13 = arith.constant 0 : index
    %22 = vector.load %arg5[%c0_11, %c0_12, %c0_13] : memref<2x64x128xbf16, #tpu.memory_space<vmem>>, vector<1x64x128xbf16>
    %23 = vector.shape_cast %22 : vector<1x64x128xbf16> to vector<64x128xbf16>
    %cst_14 = arith.constant dense<0.000000e+00> : vector<8x128xf32>
    %24 = tpu.matmul %21, %23, %cst_14 {dimension_numbers = #tpu.dot_dimension_numbers<[1], [0], [0], [1], [0, 0, 1, 1], [], []>} : vector<8x64xbf16>, vector<64x128xbf16>, vector<8x128xf32> -> vector<8x128xf32>
    %25 = vector.extract_strided_slice %24 {offsets = [0, 0], sizes = [8, 64], strides = [1, 1]} : vector<8x128xf32> to vector<8x64xf32>
    %26 = vector.extract_strided_slice %24 {offsets = [0, 64], sizes = [8, 32], strides = [1, 1]} : vector<8x128xf32> to vector<8x32xf32>
    %27 = vector.extract_strided_slice %24 {offsets = [0, 96], sizes = [8, 32], strides = [1, 1]} : vector<8x128xf32> to vector<8x32xf32>
    %28 = vector.extract_strided_slice %26 {offsets = [0, 0], sizes = [8, 16], strides = [1, 1]} : vector<8x32xf32> to vector<8x16xf32>
    %29 = vector.extract_strided_slice %28 {offsets = [0, 0], sizes = [8, 8], strides = [1, 1]} : vector<8x16xf32> to vector<8x8xf32>
    %30 = vector.extract_strided_slice %28 {offsets = [0, 8], sizes = [8, 8], strides = [1, 1]} : vector<8x16xf32> to vector<8x8xf32>
    %31 = arith.mulf %29, %2 : vector<8x8xf32>
    %32 = arith.mulf %30, %3 : vector<8x8xf32>
    %33 = arith.subf %31, %32 : vector<8x8xf32>
    %34 = arith.mulf %30, %2 : vector<8x8xf32>
    %35 = arith.mulf %29, %3 : vector<8x8xf32>
    %36 = arith.addf %34, %35 : vector<8x8xf32>
    %37 = arith.truncf %33 : vector<8x8xf32> to vector<8x8xbf16>
    %38 = arith.truncf %36 : vector<8x8xf32> to vector<8x8xbf16>
    %39 = vector.extract_strided_slice %27 {offsets = [0, 0], sizes = [8, 16], strides = [1, 1]} : vector<8x32xf32> to vector<8x16xf32>
    %40 = arith.truncf %39 : vector<8x16xf32> to vector<8x16xbf16>
    %41 = vector.extract_strided_slice %26 {offsets = [0, 16], sizes = [8, 16], strides = [1, 1]} : vector<8x32xf32> to vector<8x16xf32>
    %42 = vector.extract_strided_slice %41 {offsets = [0, 0], sizes = [8, 8], strides = [1, 1]} : vector<8x16xf32> to vector<8x8xf32>
    %43 = vector.extract_strided_slice %41 {offsets = [0, 8], sizes = [8, 8], strides = [1, 1]} : vector<8x16xf32> to vector<8x8xf32>
    %44 = arith.mulf %42, %2 : vector<8x8xf32>
    %45 = arith.mulf %43, %3 : vector<8x8xf32>
    %46 = arith.subf %44, %45 : vector<8x8xf32>
    %47 = arith.mulf %43, %2 : vector<8x8xf32>
    %48 = arith.mulf %42, %3 : vector<8x8xf32>
    %49 = arith.addf %47, %48 : vector<8x8xf32>
    %50 = arith.truncf %46 : vector<8x8xf32> to vector<8x8xbf16>
    %51 = arith.truncf %49 : vector<8x8xf32> to vector<8x8xbf16>
    %52 = vector.extract_strided_slice %27 {offsets = [0, 16], sizes = [8, 16], strides = [1, 1]} : vector<8x32xf32> to vector<8x16xf32>
    %53 = arith.truncf %52 : vector<8x16xf32> to vector<8x16xbf16>
    %cst_15 = arith.constant 0.000000e+00 : f32
    %54 = vector.broadcast %cst_15 : f32 to vector<8x64xf32>
    %55 = vector.extract_strided_slice %25 {offsets = [0, 0], sizes = [8, 16], strides = [1, 1]} : vector<8x64xf32> to vector<8x16xf32>
    %56 = vector.extract_strided_slice %55 {offsets = [0, 0], sizes = [8, 8], strides = [1, 1]} : vector<8x16xf32> to vector<8x8xf32>
    %57 = vector.extract_strided_slice %55 {offsets = [0, 8], sizes = [8, 8], strides = [1, 1]} : vector<8x16xf32> to vector<8x8xf32>
    %58 = arith.mulf %56, %2 : vector<8x8xf32>
    %59 = arith.mulf %57, %3 : vector<8x8xf32>
    %60 = arith.subf %58, %59 : vector<8x8xf32>
    %61 = arith.mulf %57, %2 : vector<8x8xf32>
    %62 = arith.mulf %56, %3 : vector<8x8xf32>
    %63 = arith.addf %61, %62 : vector<8x8xf32>
    %64 = arith.truncf %60 : vector<8x8xf32> to vector<8x8xbf16>
    %cst_16 = arith.constant dense<0.000000e+00> : vector<8x8xf32>
    %65 = tpu.matmul %64, %37, %cst_16 {dimension_numbers = #tpu.dot_dimension_numbers<[1], [1], [0], [0], [0, 0, 1, 0], [], []>} : vector<8x8xbf16>, vector<8x8xbf16>, vector<8x8xf32> -> vector<8x8xf32>
    %66 = arith.truncf %63 : vector<8x8xf32> to vector<8x8xbf16>
    %cst_17 = arith.constant dense<0.000000e+00> : vector<8x8xf32>
    %67 = tpu.matmul %66, %38, %cst_17 {dimension_numbers = #tpu.dot_dimension_numbers<[1], [1], [0], [0], [0, 0, 1, 0], [], []>} : vector<8x8xbf16>, vector<8x8xbf16>, vector<8x8xf32> -> vector<8x8xf32>
    %68 = arith.addf %65, %67 : vector<8x8xf32>
    %cst_18 = arith.constant 2.500000e-01 : f32
    %69 = vector.broadcast %cst_18 : f32 to vector<8x8xf32>
    %70 = arith.mulf %68, %69 : vector<8x8xf32>
    %cst_19 = arith.constant -1.000000e+30 : f32
    %71 = vector.broadcast %cst_19 : f32 to vector<8x8xf32>
    %72 = arith.select %6, %70, %71 : vector<8x8xi1>, vector<8x8xf32>
    %cst_20 = arith.constant dense<0xFF800000> : vector<8xf32>
    %73 = vector.multi_reduction <maximumf>, %72, %cst_20 [1] : vector<8x8xf32> to vector<8xf32>
    %74 = vector.shape_cast %73 : vector<8xf32> to vector<8x1xf32>
    %75 = vector.broadcast %74 : vector<8x1xf32> to vector<8x8xf32>
    %76 = arith.subf %72, %75 : vector<8x8xf32>
    %77 = math.exp %76 : vector<8x8xf32>
    %cst_21 = arith.constant dense<0.000000e+00> : vector<8xf32>
    %78 = vector.multi_reduction <add>, %77, %cst_21 [1] : vector<8x8xf32> to vector<8xf32>
    %79 = vector.shape_cast %78 : vector<8xf32> to vector<8x1xf32>
    %80 = tpu.reciprocal %79 {approx = true} : vector<8x1xf32> -> vector<8x1xf32>
    %81 = vector.broadcast %80 : vector<8x1xf32> to vector<8x8xf32>
    %82 = arith.mulf %77, %81 : vector<8x8xf32>
    %83 = arith.truncf %82 : vector<8x8xf32> to vector<8x8xbf16>
    %cst_22 = arith.constant dense<0.000000e+00> : vector<8x16xf32>
    %84 = tpu.matmul %83, %40, %cst_22 {dimension_numbers = #tpu.dot_dimension_numbers<[1], [0], [0], [1], [0, 0, 1, 1], [], []>} : vector<8x8xbf16>, vector<8x16xbf16>, vector<8x16xf32> -> vector<8x16xf32>
    %85 = arith.truncf %84 : vector<8x16xf32> to vector<8x16xbf16>
    %c0_23 = arith.constant 0 : index
    %c0_24 = arith.constant 0 : index
    %c0_25 = arith.constant 0 : index
    %86 = vector.load %arg6[%c0_23, %c0_24, %c0_25] : memref<2x64x64xbf16, #tpu.memory_space<vmem>>, vector<1x16x64xbf16>
    %87 = vector.shape_cast %86 : vector<1x16x64xbf16> to vector<16x64xbf16>
    %cst_26 = arith.constant dense<0.000000e+00> : vector<8x64xf32>
    %88 = tpu.matmul %85, %87, %cst_26 {dimension_numbers = #tpu.dot_dimension_numbers<[1], [0], [0], [1], [0, 0, 1, 1], [], []>} : vector<8x16xbf16>, vector<16x64xbf16>, vector<8x64xf32> -> vector<8x64xf32>
    %89 = arith.addf %54, %88 : vector<8x64xf32>
    %90 = vector.extract_strided_slice %25 {offsets = [0, 16], sizes = [8, 16], strides = [1, 1]} : vector<8x64xf32> to vector<8x16xf32>
    %91 = vector.extract_strided_slice %90 {offsets = [0, 0], sizes = [8, 8], strides = [1, 1]} : vector<8x16xf32> to vector<8x8xf32>
    %92 = vector.extract_strided_slice %90 {offsets = [0, 8], sizes = [8, 8], strides = [1, 1]} : vector<8x16xf32> to vector<8x8xf32>
    %93 = arith.mulf %91, %2 : vector<8x8xf32>
    %94 = arith.mulf %92, %3 : vector<8x8xf32>
    %95 = arith.subf %93, %94 : vector<8x8xf32>
    %96 = arith.mulf %92, %2 : vector<8x8xf32>
    %97 = arith.mulf %91, %3 : vector<8x8xf32>
    %98 = arith.addf %96, %97 : vector<8x8xf32>
    %99 = arith.truncf %95 : vector<8x8xf32> to vector<8x8xbf16>
    %cst_27 = arith.constant dense<0.000000e+00> : vector<8x8xf32>
    %100 = tpu.matmul %99, %37, %cst_27 {dimension_numbers = #tpu.dot_dimension_numbers<[1], [1], [0], [0], [0, 0, 1, 0], [], []>} : vector<8x8xbf16>, vector<8x8xbf16>, vector<8x8xf32> -> vector<8x8xf32>
    %101 = arith.truncf %98 : vector<8x8xf32> to vector<8x8xbf16>
    %cst_28 = arith.constant dense<0.000000e+00> : vector<8x8xf32>
    %102 = tpu.matmul %101, %38, %cst_28 {dimension_numbers = #tpu.dot_dimension_numbers<[1], [1], [0], [0], [0, 0, 1, 0], [], []>} : vector<8x8xbf16>, vector<8x8xbf16>, vector<8x8xf32> -> vector<8x8xf32>
    %103 = arith.addf %100, %102 : vector<8x8xf32>
    %cst_29 = arith.constant 2.500000e-01 : f32
    %104 = vector.broadcast %cst_29 : f32 to vector<8x8xf32>
    %105 = arith.mulf %103, %104 : vector<8x8xf32>
    %cst_30 = arith.constant -1.000000e+30 : f32
    %106 = vector.broadcast %cst_30 : f32 to vector<8x8xf32>
    %107 = arith.select %6, %105, %106 : vector<8x8xi1>, vector<8x8xf32>
    %cst_31 = arith.constant dense<0xFF800000> : vector<8xf32>
    %108 = vector.multi_reduction <maximumf>, %107, %cst_31 [1] : vector<8x8xf32> to vector<8xf32>
    %109 = vector.shape_cast %108 : vector<8xf32> to vector<8x1xf32>
    %110 = vector.broadcast %109 : vector<8x1xf32> to vector<8x8xf32>
    %111 = arith.subf %107, %110 : vector<8x8xf32>
    %112 = math.exp %111 : vector<8x8xf32>
    %cst_32 = arith.constant dense<0.000000e+00> : vector<8xf32>
    %113 = vector.multi_reduction <add>, %112, %cst_32 [1] : vector<8x8xf32> to vector<8xf32>
    %114 = vector.shape_cast %113 : vector<8xf32> to vector<8x1xf32>
    %115 = tpu.reciprocal %114 {approx = true} : vector<8x1xf32> -> vector<8x1xf32>
    %116 = vector.broadcast %115 : vector<8x1xf32> to vector<8x8xf32>
    %117 = arith.mulf %112, %116 : vector<8x8xf32>
    %118 = arith.truncf %117 : vector<8x8xf32> to vector<8x8xbf16>
    %cst_33 = arith.constant dense<0.000000e+00> : vector<8x16xf32>
    %119 = tpu.matmul %118, %40, %cst_33 {dimension_numbers = #tpu.dot_dimension_numbers<[1], [0], [0], [1], [0, 0, 1, 1], [], []>} : vector<8x8xbf16>, vector<8x16xbf16>, vector<8x16xf32> -> vector<8x16xf32>
    %120 = arith.truncf %119 : vector<8x16xf32> to vector<8x16xbf16>
    %c0_34 = arith.constant 0 : index
    %c16 = arith.constant 16 : index
    %c0_35 = arith.constant 0 : index
    %121 = vector.load %arg6[%c0_34, %c16, %c0_35] : memref<2x64x64xbf16, #tpu.memory_space<vmem>>, vector<1x16x64xbf16>
    %122 = vector.shape_cast %121 : vector<1x16x64xbf16> to vector<16x64xbf16>
    %cst_36 = arith.constant dense<0.000000e+00> : vector<8x64xf32>
    %123 = tpu.matmul %120, %122, %cst_36 {dimension_numbers = #tpu.dot_dimension_numbers<[1], [0], [0], [1], [0, 0, 1, 1], [], []>} : vector<8x16xbf16>, vector<16x64xbf16>, vector<8x64xf32> -> vector<8x64xf32>
    %124 = arith.addf %89, %123 : vector<8x64xf32>
    %125 = vector.extract_strided_slice %25 {offsets = [0, 32], sizes = [8, 16], strides = [1, 1]} : vector<8x64xf32> to vector<8x16xf32>
    %126 = vector.extract_strided_slice %125 {offsets = [0, 0], sizes = [8, 8], strides = [1, 1]} : vector<8x16xf32> to vector<8x8xf32>
    %127 = vector.extract_strided_slice %125 {offsets = [0, 8], sizes = [8, 8], strides = [1, 1]} : vector<8x16xf32> to vector<8x8xf32>
    %128 = arith.mulf %126, %2 : vector<8x8xf32>
    %129 = arith.mulf %127, %3 : vector<8x8xf32>
    %130 = arith.subf %128, %129 : vector<8x8xf32>
    %131 = arith.mulf %127, %2 : vector<8x8xf32>
    %132 = arith.mulf %126, %3 : vector<8x8xf32>
    %133 = arith.addf %131, %132 : vector<8x8xf32>
    %134 = arith.truncf %130 : vector<8x8xf32> to vector<8x8xbf16>
    %cst_37 = arith.constant dense<0.000000e+00> : vector<8x8xf32>
    %135 = tpu.matmul %134, %50, %cst_37 {dimension_numbers = #tpu.dot_dimension_numbers<[1], [1], [0], [0], [0, 0, 1, 0], [], []>} : vector<8x8xbf16>, vector<8x8xbf16>, vector<8x8xf32> -> vector<8x8xf32>
    %136 = arith.truncf %133 : vector<8x8xf32> to vector<8x8xbf16>
    %cst_38 = arith.constant dense<0.000000e+00> : vector<8x8xf32>
    %137 = tpu.matmul %136, %51, %cst_38 {dimension_numbers = #tpu.dot_dimension_numbers<[1], [1], [0], [0], [0, 0, 1, 0], [], []>} : vector<8x8xbf16>, vector<8x8xbf16>, vector<8x8xf32> -> vector<8x8xf32>
    %138 = arith.addf %135, %137 : vector<8x8xf32>
    %cst_39 = arith.constant 2.500000e-01 : f32
    %139 = vector.broadcast %cst_39 : f32 to vector<8x8xf32>
    %140 = arith.mulf %138, %139 : vector<8x8xf32>
    %cst_40 = arith.constant -1.000000e+30 : f32
    %141 = vector.broadcast %cst_40 : f32 to vector<8x8xf32>
    %142 = arith.select %6, %140, %141 : vector<8x8xi1>, vector<8x8xf32>
    %cst_41 = arith.constant dense<0xFF800000> : vector<8xf32>
    %143 = vector.multi_reduction <maximumf>, %142, %cst_41 [1] : vector<8x8xf32> to vector<8xf32>
    %144 = vector.shape_cast %143 : vector<8xf32> to vector<8x1xf32>
    %145 = vector.broadcast %144 : vector<8x1xf32> to vector<8x8xf32>
    %146 = arith.subf %142, %145 : vector<8x8xf32>
    %147 = math.exp %146 : vector<8x8xf32>
    %cst_42 = arith.constant dense<0.000000e+00> : vector<8xf32>
    %148 = vector.multi_reduction <add>, %147, %cst_42 [1] : vector<8x8xf32> to vector<8xf32>
    %149 = vector.shape_cast %148 : vector<8xf32> to vector<8x1xf32>
    %150 = tpu.reciprocal %149 {approx = true} : vector<8x1xf32> -> vector<8x1xf32>
    %151 = vector.broadcast %150 : vector<8x1xf32> to vector<8x8xf32>
    %152 = arith.mulf %147, %151 : vector<8x8xf32>
    %153 = arith.truncf %152 : vector<8x8xf32> to vector<8x8xbf16>
    %cst_43 = arith.constant dense<0.000000e+00> : vector<8x16xf32>
    %154 = tpu.matmul %153, %53, %cst_43 {dimension_numbers = #tpu.dot_dimension_numbers<[1], [0], [0], [1], [0, 0, 1, 1], [], []>} : vector<8x8xbf16>, vector<8x16xbf16>, vector<8x16xf32> -> vector<8x16xf32>
    %155 = arith.truncf %154 : vector<8x16xf32> to vector<8x16xbf16>
    %c0_44 = arith.constant 0 : index
    %c32 = arith.constant 32 : index
    %c0_45 = arith.constant 0 : index
    %156 = vector.load %arg6[%c0_44, %c32, %c0_45] : memref<2x64x64xbf16, #tpu.memory_space<vmem>>, vector<1x16x64xbf16>
    %157 = vector.shape_cast %156 : vector<1x16x64xbf16> to vector<16x64xbf16>
    %cst_46 = arith.constant dense<0.000000e+00> : vector<8x64xf32>
    %158 = tpu.matmul %155, %157, %cst_46 {dimension_numbers = #tpu.dot_dimension_numbers<[1], [0], [0], [1], [0, 0, 1, 1], [], []>} : vector<8x16xbf16>, vector<16x64xbf16>, vector<8x64xf32> -> vector<8x64xf32>
    %159 = arith.addf %124, %158 : vector<8x64xf32>
    %160 = vector.extract_strided_slice %25 {offsets = [0, 48], sizes = [8, 16], strides = [1, 1]} : vector<8x64xf32> to vector<8x16xf32>
    %161 = vector.extract_strided_slice %160 {offsets = [0, 0], sizes = [8, 8], strides = [1, 1]} : vector<8x16xf32> to vector<8x8xf32>
    %162 = vector.extract_strided_slice %160 {offsets = [0, 8], sizes = [8, 8], strides = [1, 1]} : vector<8x16xf32> to vector<8x8xf32>
    %163 = arith.mulf %161, %2 : vector<8x8xf32>
    %164 = arith.mulf %162, %3 : vector<8x8xf32>
    %165 = arith.subf %163, %164 : vector<8x8xf32>
    %166 = arith.mulf %162, %2 : vector<8x8xf32>
    %167 = arith.mulf %161, %3 : vector<8x8xf32>
    %168 = arith.addf %166, %167 : vector<8x8xf32>
    %169 = arith.truncf %165 : vector<8x8xf32> to vector<8x8xbf16>
    %cst_47 = arith.constant dense<0.000000e+00> : vector<8x8xf32>
    %170 = tpu.matmul %169, %50, %cst_47 {dimension_numbers = #tpu.dot_dimension_numbers<[1], [1], [0], [0], [0, 0, 1, 0], [], []>} : vector<8x8xbf16>, vector<8x8xbf16>, vector<8x8xf32> -> vector<8x8xf32>
    %171 = arith.truncf %168 : vector<8x8xf32> to vector<8x8xbf16>
    %cst_48 = arith.constant dense<0.000000e+00> : vector<8x8xf32>
    %172 = tpu.matmul %171, %51, %cst_48 {dimension_numbers = #tpu.dot_dimension_numbers<[1], [1], [0], [0], [0, 0, 1, 0], [], []>} : vector<8x8xbf16>, vector<8x8xbf16>, vector<8x8xf32> -> vector<8x8xf32>
    %173 = arith.addf %170, %172 : vector<8x8xf32>
    %cst_49 = arith.constant 2.500000e-01 : f32
    %174 = vector.broadcast %cst_49 : f32 to vector<8x8xf32>
    %175 = arith.mulf %173, %174 : vector<8x8xf32>
    %cst_50 = arith.constant -1.000000e+30 : f32
    %176 = vector.broadcast %cst_50 : f32 to vector<8x8xf32>
    %177 = arith.select %6, %175, %176 : vector<8x8xi1>, vector<8x8xf32>
    %cst_51 = arith.constant dense<0xFF800000> : vector<8xf32>
    %178 = vector.multi_reduction <maximumf>, %177, %cst_51 [1] : vector<8x8xf32> to vector<8xf32>
    %179 = vector.shape_cast %178 : vector<8xf32> to vector<8x1xf32>
    %180 = vector.broadcast %179 : vector<8x1xf32> to vector<8x8xf32>
    %181 = arith.subf %177, %180 : vector<8x8xf32>
    %182 = math.exp %181 : vector<8x8xf32>
    %cst_52 = arith.constant dense<0.000000e+00> : vector<8xf32>
    %183 = vector.multi_reduction <add>, %182, %cst_52 [1] : vector<8x8xf32> to vector<8xf32>
    %184 = vector.shape_cast %183 : vector<8xf32> to vector<8x1xf32>
    %185 = tpu.reciprocal %184 {approx = true} : vector<8x1xf32> -> vector<8x1xf32>
    %186 = vector.broadcast %185 : vector<8x1xf32> to vector<8x8xf32>
    %187 = arith.mulf %182, %186 : vector<8x8xf32>
    %188 = arith.truncf %187 : vector<8x8xf32> to vector<8x8xbf16>
    %cst_53 = arith.constant dense<0.000000e+00> : vector<8x16xf32>
    %189 = tpu.matmul %188, %53, %cst_53 {dimension_numbers = #tpu.dot_dimension_numbers<[1], [0], [0], [1], [0, 0, 1, 1], [], []>} : vector<8x8xbf16>, vector<8x16xbf16>, vector<8x16xf32> -> vector<8x16xf32>
    %190 = arith.truncf %189 : vector<8x16xf32> to vector<8x16xbf16>
    %c0_54 = arith.constant 0 : index
    %c48 = arith.constant 48 : index
    %c0_55 = arith.constant 0 : index
    %191 = vector.load %arg6[%c0_54, %c48, %c0_55] : memref<2x64x64xbf16, #tpu.memory_space<vmem>>, vector<1x16x64xbf16>
    %192 = vector.shape_cast %191 : vector<1x16x64xbf16> to vector<16x64xbf16>
    %cst_56 = arith.constant dense<0.000000e+00> : vector<8x64xf32>
    %193 = tpu.matmul %190, %192, %cst_56 {dimension_numbers = #tpu.dot_dimension_numbers<[1], [0], [0], [1], [0, 0, 1, 1], [], []>} : vector<8x16xbf16>, vector<16x64xbf16>, vector<8x64xf32> -> vector<8x64xf32>
    %194 = arith.addf %159, %193 : vector<8x64xf32>
    %195 = arith.addf %1, %194 : vector<8x64xf32>
    %c0_57 = arith.constant 0 : index
    %c0_58 = arith.constant 0 : index
    %c0_59 = arith.constant 0 : index
    %196 = vector.load %arg7[%c0_57, %c0_58, %c0_59] : memref<2x1x64xf32, #tpu.memory_space<vmem>>, vector<1x1x64xf32>
    %197 = vector.shape_cast %196 : vector<1x1x64xf32> to vector<1x64xf32>
    %198 = arith.mulf %195, %195 : vector<8x64xf32>
    %cst_60 = arith.constant dense<0.000000e+00> : vector<8xf32>
    %199 = vector.multi_reduction <add>, %198, %cst_60 [1] : vector<8x64xf32> to vector<8xf32>
    %200 = vector.shape_cast %199 : vector<8xf32> to vector<8x1xf32>
    %cst_61 = arith.constant 6.400000e+01 : f32
    %201 = vector.broadcast %cst_61 : f32 to vector<8x1xf32>
    %202 = arith.divf %200, %201 : vector<8x1xf32>
    %cst_62 = arith.constant 9.99999997E-7 : f32
    %203 = vector.broadcast %cst_62 : f32 to vector<8x1xf32>
    %204 = arith.addf %202, %203 : vector<8x1xf32>
    %205 = math.rsqrt %204 : vector<8x1xf32>
    %206 = vector.broadcast %205 : vector<8x1xf32> to vector<8x64xf32>
    %207 = arith.mulf %195, %206 : vector<8x64xf32>
    %208 = vector.broadcast %197 : vector<1x64xf32> to vector<8x64xf32>
    %209 = arith.mulf %207, %208 : vector<8x64xf32>
    %210 = arith.truncf %209 : vector<8x64xf32> to vector<8x64xbf16>
    %c0_63 = arith.constant 0 : index
    %c0_64 = arith.constant 0 : index
    %c0_65 = arith.constant 0 : index
    %211 = vector.load %arg8[%c0_63, %c0_64, %c0_65] : memref<2x64x192xbf16, #tpu.memory_space<vmem>>, vector<1x64x192xbf16>
    %212 = vector.shape_cast %211 : vector<1x64x192xbf16> to vector<64x192xbf16>
    %cst_66 = arith.constant dense<0.000000e+00> : vector<8x192xf32>
    %213 = tpu.matmul %210, %212, %cst_66 {dimension_numbers = #tpu.dot_dimension_numbers<[1], [0], [0], [1], [0, 0, 1, 1], [], []>} : vector<8x64xbf16>, vector<64x192xbf16>, vector<8x192xf32> -> vector<8x192xf32>
    %c0_67 = arith.constant 0 : index
    %c0_68 = arith.constant 0 : index
    %c0_69 = arith.constant 0 : index
    %214 = vector.load %arg9[%c0_67, %c0_68, %c0_69] : memref<2x64x192xbf16, #tpu.memory_space<vmem>>, vector<1x64x192xbf16>
    %215 = vector.shape_cast %214 : vector<1x64x192xbf16> to vector<64x192xbf16>
    %cst_70 = arith.constant dense<0.000000e+00> : vector<8x192xf32>
    %216 = tpu.matmul %210, %215, %cst_70 {dimension_numbers = #tpu.dot_dimension_numbers<[1], [0], [0], [1], [0, 0, 1, 1], [], []>} : vector<8x64xbf16>, vector<64x192xbf16>, vector<8x192xf32> -> vector<8x192xf32>
    %217 = arith.negf %213 : vector<8x192xf32>
    %218 = math.exp %217 : vector<8x192xf32>
    %cst_71 = arith.constant 1.000000e+00 : f32
    %219 = vector.broadcast %cst_71 : f32 to vector<8x192xf32>
    %220 = arith.addf %219, %218 : vector<8x192xf32>
    %221 = arith.divf %219, %220 : vector<8x192xf32>
    %222 = arith.mulf %213, %221 : vector<8x192xf32>
    %223 = arith.mulf %222, %216 : vector<8x192xf32>
    %224 = arith.truncf %223 : vector<8x192xf32> to vector<8x192xbf16>
    %c0_72 = arith.constant 0 : index
    %c0_73 = arith.constant 0 : index
    %c0_74 = arith.constant 0 : index
    %225 = vector.load %arg10[%c0_72, %c0_73, %c0_74] : memref<2x192x64xbf16, #tpu.memory_space<vmem>>, vector<1x192x64xbf16>
    %226 = vector.shape_cast %225 : vector<1x192x64xbf16> to vector<192x64xbf16>
    %cst_75 = arith.constant dense<0.000000e+00> : vector<8x64xf32>
    %227 = tpu.matmul %224, %226, %cst_75 {dimension_numbers = #tpu.dot_dimension_numbers<[1], [0], [0], [1], [0, 0, 1, 1], [], []>} : vector<8x192xbf16>, vector<192x64xbf16>, vector<8x64xf32> -> vector<8x64xf32>
    %228 = arith.addf %195, %227 : vector<8x64xf32>
    %c1 = arith.constant 1 : index
    %c0_76 = arith.constant 0 : index
    %c0_77 = arith.constant 0 : index
    %229 = vector.load %arg4[%c1, %c0_76, %c0_77] : memref<2x1x64xf32, #tpu.memory_space<vmem>>, vector<1x1x64xf32>
    %230 = vector.shape_cast %229 : vector<1x1x64xf32> to vector<1x64xf32>
    %231 = arith.mulf %228, %228 : vector<8x64xf32>
    %cst_78 = arith.constant dense<0.000000e+00> : vector<8xf32>
    %232 = vector.multi_reduction <add>, %231, %cst_78 [1] : vector<8x64xf32> to vector<8xf32>
    %233 = vector.shape_cast %232 : vector<8xf32> to vector<8x1xf32>
    %cst_79 = arith.constant 6.400000e+01 : f32
    %234 = vector.broadcast %cst_79 : f32 to vector<8x1xf32>
    %235 = arith.divf %233, %234 : vector<8x1xf32>
    %cst_80 = arith.constant 9.99999997E-7 : f32
    %236 = vector.broadcast %cst_80 : f32 to vector<8x1xf32>
    %237 = arith.addf %235, %236 : vector<8x1xf32>
    %238 = math.rsqrt %237 : vector<8x1xf32>
    %239 = vector.broadcast %238 : vector<8x1xf32> to vector<8x64xf32>
    %240 = arith.mulf %228, %239 : vector<8x64xf32>
    %241 = vector.broadcast %230 : vector<1x64xf32> to vector<8x64xf32>
    %242 = arith.mulf %240, %241 : vector<8x64xf32>
    %243 = arith.truncf %242 : vector<8x64xf32> to vector<8x64xbf16>
    %c1_81 = arith.constant 1 : index
    %c0_82 = arith.constant 0 : index
    %c0_83 = arith.constant 0 : index
    %244 = vector.load %arg5[%c1_81, %c0_82, %c0_83] : memref<2x64x128xbf16, #tpu.memory_space<vmem>>, vector<1x64x128xbf16>
    %245 = vector.shape_cast %244 : vector<1x64x128xbf16> to vector<64x128xbf16>
    %cst_84 = arith.constant dense<0.000000e+00> : vector<8x128xf32>
    %246 = tpu.matmul %243, %245, %cst_84 {dimension_numbers = #tpu.dot_dimension_numbers<[1], [0], [0], [1], [0, 0, 1, 1], [], []>} : vector<8x64xbf16>, vector<64x128xbf16>, vector<8x128xf32> -> vector<8x128xf32>
    %247 = vector.extract_strided_slice %246 {offsets = [0, 0], sizes = [8, 64], strides = [1, 1]} : vector<8x128xf32> to vector<8x64xf32>
    %248 = vector.extract_strided_slice %246 {offsets = [0, 64], sizes = [8, 32], strides = [1, 1]} : vector<8x128xf32> to vector<8x32xf32>
    %249 = vector.extract_strided_slice %246 {offsets = [0, 96], sizes = [8, 32], strides = [1, 1]} : vector<8x128xf32> to vector<8x32xf32>
    %250 = vector.extract_strided_slice %248 {offsets = [0, 0], sizes = [8, 16], strides = [1, 1]} : vector<8x32xf32> to vector<8x16xf32>
    %251 = vector.extract_strided_slice %250 {offsets = [0, 0], sizes = [8, 8], strides = [1, 1]} : vector<8x16xf32> to vector<8x8xf32>
    %252 = vector.extract_strided_slice %250 {offsets = [0, 8], sizes = [8, 8], strides = [1, 1]} : vector<8x16xf32> to vector<8x8xf32>
    %253 = arith.mulf %251, %2 : vector<8x8xf32>
    %254 = arith.mulf %252, %3 : vector<8x8xf32>
    %255 = arith.subf %253, %254 : vector<8x8xf32>
    %256 = arith.mulf %252, %2 : vector<8x8xf32>
    %257 = arith.mulf %251, %3 : vector<8x8xf32>
    %258 = arith.addf %256, %257 : vector<8x8xf32>
    %259 = arith.truncf %255 : vector<8x8xf32> to vector<8x8xbf16>
    %260 = arith.truncf %258 : vector<8x8xf32> to vector<8x8xbf16>
    %261 = vector.extract_strided_slice %249 {offsets = [0, 0], sizes = [8, 16], strides = [1, 1]} : vector<8x32xf32> to vector<8x16xf32>
    %262 = arith.truncf %261 : vector<8x16xf32> to vector<8x16xbf16>
    %263 = vector.extract_strided_slice %248 {offsets = [0, 16], sizes = [8, 16], strides = [1, 1]} : vector<8x32xf32> to vector<8x16xf32>
    %264 = vector.extract_strided_slice %263 {offsets = [0, 0], sizes = [8, 8], strides = [1, 1]} : vector<8x16xf32> to vector<8x8xf32>
    %265 = vector.extract_strided_slice %263 {offsets = [0, 8], sizes = [8, 8], strides = [1, 1]} : vector<8x16xf32> to vector<8x8xf32>
    %266 = arith.mulf %264, %2 : vector<8x8xf32>
    %267 = arith.mulf %265, %3 : vector<8x8xf32>
    %268 = arith.subf %266, %267 : vector<8x8xf32>
    %269 = arith.mulf %265, %2 : vector<8x8xf32>
    %270 = arith.mulf %264, %3 : vector<8x8xf32>
    %271 = arith.addf %269, %270 : vector<8x8xf32>
    %272 = arith.truncf %268 : vector<8x8xf32> to vector<8x8xbf16>
    %273 = arith.truncf %271 : vector<8x8xf32> to vector<8x8xbf16>
    %274 = vector.extract_strided_slice %249 {offsets = [0, 16], sizes = [8, 16], strides = [1, 1]} : vector<8x32xf32> to vector<8x16xf32>
    %275 = arith.truncf %274 : vector<8x16xf32> to vector<8x16xbf16>
    %cst_85 = arith.constant 0.000000e+00 : f32
    %276 = vector.broadcast %cst_85 : f32 to vector<8x64xf32>
    %277 = vector.extract_strided_slice %247 {offsets = [0, 0], sizes = [8, 16], strides = [1, 1]} : vector<8x64xf32> to vector<8x16xf32>
    %278 = vector.extract_strided_slice %277 {offsets = [0, 0], sizes = [8, 8], strides = [1, 1]} : vector<8x16xf32> to vector<8x8xf32>
    %279 = vector.extract_strided_slice %277 {offsets = [0, 8], sizes = [8, 8], strides = [1, 1]} : vector<8x16xf32> to vector<8x8xf32>
    %280 = arith.mulf %278, %2 : vector<8x8xf32>
    %281 = arith.mulf %279, %3 : vector<8x8xf32>
    %282 = arith.subf %280, %281 : vector<8x8xf32>
    %283 = arith.mulf %279, %2 : vector<8x8xf32>
    %284 = arith.mulf %278, %3 : vector<8x8xf32>
    %285 = arith.addf %283, %284 : vector<8x8xf32>
    %286 = arith.truncf %282 : vector<8x8xf32> to vector<8x8xbf16>
    %cst_86 = arith.constant dense<0.000000e+00> : vector<8x8xf32>
    %287 = tpu.matmul %286, %259, %cst_86 {dimension_numbers = #tpu.dot_dimension_numbers<[1], [1], [0], [0], [0, 0, 1, 0], [], []>} : vector<8x8xbf16>, vector<8x8xbf16>, vector<8x8xf32> -> vector<8x8xf32>
    %288 = arith.truncf %285 : vector<8x8xf32> to vector<8x8xbf16>
    %cst_87 = arith.constant dense<0.000000e+00> : vector<8x8xf32>
    %289 = tpu.matmul %288, %260, %cst_87 {dimension_numbers = #tpu.dot_dimension_numbers<[1], [1], [0], [0], [0, 0, 1, 0], [], []>} : vector<8x8xbf16>, vector<8x8xbf16>, vector<8x8xf32> -> vector<8x8xf32>
    %290 = arith.addf %287, %289 : vector<8x8xf32>
    %cst_88 = arith.constant 2.500000e-01 : f32
    %291 = vector.broadcast %cst_88 : f32 to vector<8x8xf32>
    %292 = arith.mulf %290, %291 : vector<8x8xf32>
    %cst_89 = arith.constant -1.000000e+30 : f32
    %293 = vector.broadcast %cst_89 : f32 to vector<8x8xf32>
    %294 = arith.select %6, %292, %293 : vector<8x8xi1>, vector<8x8xf32>
    %cst_90 = arith.constant dense<0xFF800000> : vector<8xf32>
    %295 = vector.multi_reduction <maximumf>, %294, %cst_90 [1] : vector<8x8xf32> to vector<8xf32>
    %296 = vector.shape_cast %295 : vector<8xf32> to vector<8x1xf32>
    %297 = vector.broadcast %296 : vector<8x1xf32> to vector<8x8xf32>
    %298 = arith.subf %294, %297 : vector<8x8xf32>
    %299 = math.exp %298 : vector<8x8xf32>
    %cst_91 = arith.constant dense<0.000000e+00> : vector<8xf32>
    %300 = vector.multi_reduction <add>, %299, %cst_91 [1] : vector<8x8xf32> to vector<8xf32>
    %301 = vector.shape_cast %300 : vector<8xf32> to vector<8x1xf32>
    %302 = tpu.reciprocal %301 {approx = true} : vector<8x1xf32> -> vector<8x1xf32>
    %303 = vector.broadcast %302 : vector<8x1xf32> to vector<8x8xf32>
    %304 = arith.mulf %299, %303 : vector<8x8xf32>
    %305 = arith.truncf %304 : vector<8x8xf32> to vector<8x8xbf16>
    %cst_92 = arith.constant dense<0.000000e+00> : vector<8x16xf32>
    %306 = tpu.matmul %305, %262, %cst_92 {dimension_numbers = #tpu.dot_dimension_numbers<[1], [0], [0], [1], [0, 0, 1, 1], [], []>} : vector<8x8xbf16>, vector<8x16xbf16>, vector<8x16xf32> -> vector<8x16xf32>
    %307 = arith.truncf %306 : vector<8x16xf32> to vector<8x16xbf16>
    %c1_93 = arith.constant 1 : index
    %c0_94 = arith.constant 0 : index
    %c0_95 = arith.constant 0 : index
    %308 = vector.load %arg6[%c1_93, %c0_94, %c0_95] : memref<2x64x64xbf16, #tpu.memory_space<vmem>>, vector<1x16x64xbf16>
    %309 = vector.shape_cast %308 : vector<1x16x64xbf16> to vector<16x64xbf16>
    %cst_96 = arith.constant dense<0.000000e+00> : vector<8x64xf32>
    %310 = tpu.matmul %307, %309, %cst_96 {dimension_numbers = #tpu.dot_dimension_numbers<[1], [0], [0], [1], [0, 0, 1, 1], [], []>} : vector<8x16xbf16>, vector<16x64xbf16>, vector<8x64xf32> -> vector<8x64xf32>
    %311 = arith.addf %276, %310 : vector<8x64xf32>
    %312 = vector.extract_strided_slice %247 {offsets = [0, 16], sizes = [8, 16], strides = [1, 1]} : vector<8x64xf32> to vector<8x16xf32>
    %313 = vector.extract_strided_slice %312 {offsets = [0, 0], sizes = [8, 8], strides = [1, 1]} : vector<8x16xf32> to vector<8x8xf32>
    %314 = vector.extract_strided_slice %312 {offsets = [0, 8], sizes = [8, 8], strides = [1, 1]} : vector<8x16xf32> to vector<8x8xf32>
    %315 = arith.mulf %313, %2 : vector<8x8xf32>
    %316 = arith.mulf %314, %3 : vector<8x8xf32>
    %317 = arith.subf %315, %316 : vector<8x8xf32>
    %318 = arith.mulf %314, %2 : vector<8x8xf32>
    %319 = arith.mulf %313, %3 : vector<8x8xf32>
    %320 = arith.addf %318, %319 : vector<8x8xf32>
    %321 = arith.truncf %317 : vector<8x8xf32> to vector<8x8xbf16>
    %cst_97 = arith.constant dense<0.000000e+00> : vector<8x8xf32>
    %322 = tpu.matmul %321, %259, %cst_97 {dimension_numbers = #tpu.dot_dimension_numbers<[1], [1], [0], [0], [0, 0, 1, 0], [], []>} : vector<8x8xbf16>, vector<8x8xbf16>, vector<8x8xf32> -> vector<8x8xf32>
    %323 = arith.truncf %320 : vector<8x8xf32> to vector<8x8xbf16>
    %cst_98 = arith.constant dense<0.000000e+00> : vector<8x8xf32>
    %324 = tpu.matmul %323, %260, %cst_98 {dimension_numbers = #tpu.dot_dimension_numbers<[1], [1], [0], [0], [0, 0, 1, 0], [], []>} : vector<8x8xbf16>, vector<8x8xbf16>, vector<8x8xf32> -> vector<8x8xf32>
    %325 = arith.addf %322, %324 : vector<8x8xf32>
    %cst_99 = arith.constant 2.500000e-01 : f32
    %326 = vector.broadcast %cst_99 : f32 to vector<8x8xf32>
    %327 = arith.mulf %325, %326 : vector<8x8xf32>
    %cst_100 = arith.constant -1.000000e+30 : f32
    %328 = vector.broadcast %cst_100 : f32 to vector<8x8xf32>
    %329 = arith.select %6, %327, %328 : vector<8x8xi1>, vector<8x8xf32>
    %cst_101 = arith.constant dense<0xFF800000> : vector<8xf32>
    %330 = vector.multi_reduction <maximumf>, %329, %cst_101 [1] : vector<8x8xf32> to vector<8xf32>
    %331 = vector.shape_cast %330 : vector<8xf32> to vector<8x1xf32>
    %332 = vector.broadcast %331 : vector<8x1xf32> to vector<8x8xf32>
    %333 = arith.subf %329, %332 : vector<8x8xf32>
    %334 = math.exp %333 : vector<8x8xf32>
    %cst_102 = arith.constant dense<0.000000e+00> : vector<8xf32>
    %335 = vector.multi_reduction <add>, %334, %cst_102 [1] : vector<8x8xf32> to vector<8xf32>
    %336 = vector.shape_cast %335 : vector<8xf32> to vector<8x1xf32>
    %337 = tpu.reciprocal %336 {approx = true} : vector<8x1xf32> -> vector<8x1xf32>
    %338 = vector.broadcast %337 : vector<8x1xf32> to vector<8x8xf32>
    %339 = arith.mulf %334, %338 : vector<8x8xf32>
    %340 = arith.truncf %339 : vector<8x8xf32> to vector<8x8xbf16>
    %cst_103 = arith.constant dense<0.000000e+00> : vector<8x16xf32>
    %341 = tpu.matmul %340, %262, %cst_103 {dimension_numbers = #tpu.dot_dimension_numbers<[1], [0], [0], [1], [0, 0, 1, 1], [], []>} : vector<8x8xbf16>, vector<8x16xbf16>, vector<8x16xf32> -> vector<8x16xf32>
    %342 = arith.truncf %341 : vector<8x16xf32> to vector<8x16xbf16>
    %c1_104 = arith.constant 1 : index
    %c16_105 = arith.constant 16 : index
    %c0_106 = arith.constant 0 : index
    %343 = vector.load %arg6[%c1_104, %c16_105, %c0_106] : memref<2x64x64xbf16, #tpu.memory_space<vmem>>, vector<1x16x64xbf16>
    %344 = vector.shape_cast %343 : vector<1x16x64xbf16> to vector<16x64xbf16>
    %cst_107 = arith.constant dense<0.000000e+00> : vector<8x64xf32>
    %345 = tpu.matmul %342, %344, %cst_107 {dimension_numbers = #tpu.dot_dimension_numbers<[1], [0], [0], [1], [0, 0, 1, 1], [], []>} : vector<8x16xbf16>, vector<16x64xbf16>, vector<8x64xf32> -> vector<8x64xf32>
    %346 = arith.addf %311, %345 : vector<8x64xf32>
    %347 = vector.extract_strided_slice %247 {offsets = [0, 32], sizes = [8, 16], strides = [1, 1]} : vector<8x64xf32> to vector<8x16xf32>
    %348 = vector.extract_strided_slice %347 {offsets = [0, 0], sizes = [8, 8], strides = [1, 1]} : vector<8x16xf32> to vector<8x8xf32>
    %349 = vector.extract_strided_slice %347 {offsets = [0, 8], sizes = [8, 8], strides = [1, 1]} : vector<8x16xf32> to vector<8x8xf32>
    %350 = arith.mulf %348, %2 : vector<8x8xf32>
    %351 = arith.mulf %349, %3 : vector<8x8xf32>
    %352 = arith.subf %350, %351 : vector<8x8xf32>
    %353 = arith.mulf %349, %2 : vector<8x8xf32>
    %354 = arith.mulf %348, %3 : vector<8x8xf32>
    %355 = arith.addf %353, %354 : vector<8x8xf32>
    %356 = arith.truncf %352 : vector<8x8xf32> to vector<8x8xbf16>
    %cst_108 = arith.constant dense<0.000000e+00> : vector<8x8xf32>
    %357 = tpu.matmul %356, %272, %cst_108 {dimension_numbers = #tpu.dot_dimension_numbers<[1], [1], [0], [0], [0, 0, 1, 0], [], []>} : vector<8x8xbf16>, vector<8x8xbf16>, vector<8x8xf32> -> vector<8x8xf32>
    %358 = arith.truncf %355 : vector<8x8xf32> to vector<8x8xbf16>
    %cst_109 = arith.constant dense<0.000000e+00> : vector<8x8xf32>
    %359 = tpu.matmul %358, %273, %cst_109 {dimension_numbers = #tpu.dot_dimension_numbers<[1], [1], [0], [0], [0, 0, 1, 0], [], []>} : vector<8x8xbf16>, vector<8x8xbf16>, vector<8x8xf32> -> vector<8x8xf32>
    %360 = arith.addf %357, %359 : vector<8x8xf32>
    %cst_110 = arith.constant 2.500000e-01 : f32
    %361 = vector.broadcast %cst_110 : f32 to vector<8x8xf32>
    %362 = arith.mulf %360, %361 : vector<8x8xf32>
    %cst_111 = arith.constant -1.000000e+30 : f32
    %363 = vector.broadcast %cst_111 : f32 to vector<8x8xf32>
    %364 = arith.select %6, %362, %363 : vector<8x8xi1>, vector<8x8xf32>
    %cst_112 = arith.constant dense<0xFF800000> : vector<8xf32>
    %365 = vector.multi_reduction <maximumf>, %364, %cst_112 [1] : vector<8x8xf32> to vector<8xf32>
    %366 = vector.shape_cast %365 : vector<8xf32> to vector<8x1xf32>
    %367 = vector.broadcast %366 : vector<8x1xf32> to vector<8x8xf32>
    %368 = arith.subf %364, %367 : vector<8x8xf32>
    %369 = math.exp %368 : vector<8x8xf32>
    %cst_113 = arith.constant dense<0.000000e+00> : vector<8xf32>
    %370 = vector.multi_reduction <add>, %369, %cst_113 [1] : vector<8x8xf32> to vector<8xf32>
    %371 = vector.shape_cast %370 : vector<8xf32> to vector<8x1xf32>
    %372 = tpu.reciprocal %371 {approx = true} : vector<8x1xf32> -> vector<8x1xf32>
    %373 = vector.broadcast %372 : vector<8x1xf32> to vector<8x8xf32>
    %374 = arith.mulf %369, %373 : vector<8x8xf32>
    %375 = arith.truncf %374 : vector<8x8xf32> to vector<8x8xbf16>
    %cst_114 = arith.constant dense<0.000000e+00> : vector<8x16xf32>
    %376 = tpu.matmul %375, %275, %cst_114 {dimension_numbers = #tpu.dot_dimension_numbers<[1], [0], [0], [1], [0, 0, 1, 1], [], []>} : vector<8x8xbf16>, vector<8x16xbf16>, vector<8x16xf32> -> vector<8x16xf32>
    %377 = arith.truncf %376 : vector<8x16xf32> to vector<8x16xbf16>
    %c1_115 = arith.constant 1 : index
    %c32_116 = arith.constant 32 : index
    %c0_117 = arith.constant 0 : index
    %378 = vector.load %arg6[%c1_115, %c32_116, %c0_117] : memref<2x64x64xbf16, #tpu.memory_space<vmem>>, vector<1x16x64xbf16>
    %379 = vector.shape_cast %378 : vector<1x16x64xbf16> to vector<16x64xbf16>
    %cst_118 = arith.constant dense<0.000000e+00> : vector<8x64xf32>
    %380 = tpu.matmul %377, %379, %cst_118 {dimension_numbers = #tpu.dot_dimension_numbers<[1], [0], [0], [1], [0, 0, 1, 1], [], []>} : vector<8x16xbf16>, vector<16x64xbf16>, vector<8x64xf32> -> vector<8x64xf32>
    %381 = arith.addf %346, %380 : vector<8x64xf32>
    %382 = vector.extract_strided_slice %247 {offsets = [0, 48], sizes = [8, 16], strides = [1, 1]} : vector<8x64xf32> to vector<8x16xf32>
    %383 = vector.extract_strided_slice %382 {offsets = [0, 0], sizes = [8, 8], strides = [1, 1]} : vector<8x16xf32> to vector<8x8xf32>
    %384 = vector.extract_strided_slice %382 {offsets = [0, 8], sizes = [8, 8], strides = [1, 1]} : vector<8x16xf32> to vector<8x8xf32>
    %385 = arith.mulf %383, %2 : vector<8x8xf32>
    %386 = arith.mulf %384, %3 : vector<8x8xf32>
    %387 = arith.subf %385, %386 : vector<8x8xf32>
    %388 = arith.mulf %384, %2 : vector<8x8xf32>
    %389 = arith.mulf %383, %3 : vector<8x8xf32>
    %390 = arith.addf %388, %389 : vector<8x8xf32>
    %391 = arith.truncf %387 : vector<8x8xf32> to vector<8x8xbf16>
    %cst_119 = arith.constant dense<0.000000e+00> : vector<8x8xf32>
    %392 = tpu.matmul %391, %272, %cst_119 {dimension_numbers = #tpu.dot_dimension_numbers<[1], [1], [0], [0], [0, 0, 1, 0], [], []>} : vector<8x8xbf16>, vector<8x8xbf16>, vector<8x8xf32> -> vector<8x8xf32>
    %393 = arith.truncf %390 : vector<8x8xf32> to vector<8x8xbf16>
    %cst_120 = arith.constant dense<0.000000e+00> : vector<8x8xf32>
    %394 = tpu.matmul %393, %273, %cst_120 {dimension_numbers = #tpu.dot_dimension_numbers<[1], [1], [0], [0], [0, 0, 1, 0], [], []>} : vector<8x8xbf16>, vector<8x8xbf16>, vector<8x8xf32> -> vector<8x8xf32>
    %395 = arith.addf %392, %394 : vector<8x8xf32>
    %cst_121 = arith.constant 2.500000e-01 : f32
    %396 = vector.broadcast %cst_121 : f32 to vector<8x8xf32>
    %397 = arith.mulf %395, %396 : vector<8x8xf32>
    %cst_122 = arith.constant -1.000000e+30 : f32
    %398 = vector.broadcast %cst_122 : f32 to vector<8x8xf32>
    %399 = arith.select %6, %397, %398 : vector<8x8xi1>, vector<8x8xf32>
    %cst_123 = arith.constant dense<0xFF800000> : vector<8xf32>
    %400 = vector.multi_reduction <maximumf>, %399, %cst_123 [1] : vector<8x8xf32> to vector<8xf32>
    %401 = vector.shape_cast %400 : vector<8xf32> to vector<8x1xf32>
    %402 = vector.broadcast %401 : vector<8x1xf32> to vector<8x8xf32>
    %403 = arith.subf %399, %402 : vector<8x8xf32>
    %404 = math.exp %403 : vector<8x8xf32>
    %cst_124 = arith.constant dense<0.000000e+00> : vector<8xf32>
    %405 = vector.multi_reduction <add>, %404, %cst_124 [1] : vector<8x8xf32> to vector<8xf32>
    %406 = vector.shape_cast %405 : vector<8xf32> to vector<8x1xf32>
    %407 = tpu.reciprocal %406 {approx = true} : vector<8x1xf32> -> vector<8x1xf32>
    %408 = vector.broadcast %407 : vector<8x1xf32> to vector<8x8xf32>
    %409 = arith.mulf %404, %408 : vector<8x8xf32>
    %410 = arith.truncf %409 : vector<8x8xf32> to vector<8x8xbf16>
    %cst_125 = arith.constant dense<0.000000e+00> : vector<8x16xf32>
    %411 = tpu.matmul %410, %275, %cst_125 {dimension_numbers = #tpu.dot_dimension_numbers<[1], [0], [0], [1], [0, 0, 1, 1], [], []>} : vector<8x8xbf16>, vector<8x16xbf16>, vector<8x16xf32> -> vector<8x16xf32>
    %412 = arith.truncf %411 : vector<8x16xf32> to vector<8x16xbf16>
    %c1_126 = arith.constant 1 : index
    %c48_127 = arith.constant 48 : index
    %c0_128 = arith.constant 0 : index
    %413 = vector.load %arg6[%c1_126, %c48_127, %c0_128] : memref<2x64x64xbf16, #tpu.memory_space<vmem>>, vector<1x16x64xbf16>
    %414 = vector.shape_cast %413 : vector<1x16x64xbf16> to vector<16x64xbf16>
    %cst_129 = arith.constant dense<0.000000e+00> : vector<8x64xf32>
    %415 = tpu.matmul %412, %414, %cst_129 {dimension_numbers = #tpu.dot_dimension_numbers<[1], [0], [0], [1], [0, 0, 1, 1], [], []>} : vector<8x16xbf16>, vector<16x64xbf16>, vector<8x64xf32> -> vector<8x64xf32>
    %416 = arith.addf %381, %415 : vector<8x64xf32>
    %417 = arith.addf %228, %416 : vector<8x64xf32>
    %c1_130 = arith.constant 1 : index
    %c0_131 = arith.constant 0 : index
    %c0_132 = arith.constant 0 : index
    %418 = vector.load %arg7[%c1_130, %c0_131, %c0_132] : memref<2x1x64xf32, #tpu.memory_space<vmem>>, vector<1x1x64xf32>
    %419 = vector.shape_cast %418 : vector<1x1x64xf32> to vector<1x64xf32>
    %420 = arith.mulf %417, %417 : vector<8x64xf32>
    %cst_133 = arith.constant dense<0.000000e+00> : vector<8xf32>
    %421 = vector.multi_reduction <add>, %420, %cst_133 [1] : vector<8x64xf32> to vector<8xf32>
    %422 = vector.shape_cast %421 : vector<8xf32> to vector<8x1xf32>
    %cst_134 = arith.constant 6.400000e+01 : f32
    %423 = vector.broadcast %cst_134 : f32 to vector<8x1xf32>
    %424 = arith.divf %422, %423 : vector<8x1xf32>
    %cst_135 = arith.constant 9.99999997E-7 : f32
    %425 = vector.broadcast %cst_135 : f32 to vector<8x1xf32>
    %426 = arith.addf %424, %425 : vector<8x1xf32>
    %427 = math.rsqrt %426 : vector<8x1xf32>
    %428 = vector.broadcast %427 : vector<8x1xf32> to vector<8x64xf32>
    %429 = arith.mulf %417, %428 : vector<8x64xf32>
    %430 = vector.broadcast %419 : vector<1x64xf32> to vector<8x64xf32>
    %431 = arith.mulf %429, %430 : vector<8x64xf32>
    %432 = arith.truncf %431 : vector<8x64xf32> to vector<8x64xbf16>
    %c1_136 = arith.constant 1 : index
    %c0_137 = arith.constant 0 : index
    %c0_138 = arith.constant 0 : index
    %433 = vector.load %arg8[%c1_136, %c0_137, %c0_138] : memref<2x64x192xbf16, #tpu.memory_space<vmem>>, vector<1x64x192xbf16>
    %434 = vector.shape_cast %433 : vector<1x64x192xbf16> to vector<64x192xbf16>
    %cst_139 = arith.constant dense<0.000000e+00> : vector<8x192xf32>
    %435 = tpu.matmul %432, %434, %cst_139 {dimension_numbers = #tpu.dot_dimension_numbers<[1], [0], [0], [1], [0, 0, 1, 1], [], []>} : vector<8x64xbf16>, vector<64x192xbf16>, vector<8x192xf32> -> vector<8x192xf32>
    %c1_140 = arith.constant 1 : index
    %c0_141 = arith.constant 0 : index
    %c0_142 = arith.constant 0 : index
    %436 = vector.load %arg9[%c1_140, %c0_141, %c0_142] : memref<2x64x192xbf16, #tpu.memory_space<vmem>>, vector<1x64x192xbf16>
    %437 = vector.shape_cast %436 : vector<1x64x192xbf16> to vector<64x192xbf16>
    %cst_143 = arith.constant dense<0.000000e+00> : vector<8x192xf32>
    %438 = tpu.matmul %432, %437, %cst_143 {dimension_numbers = #tpu.dot_dimension_numbers<[1], [0], [0], [1], [0, 0, 1, 1], [], []>} : vector<8x64xbf16>, vector<64x192xbf16>, vector<8x192xf32> -> vector<8x192xf32>
    %439 = arith.negf %435 : vector<8x192xf32>
    %440 = math.exp %439 : vector<8x192xf32>
    %cst_144 = arith.constant 1.000000e+00 : f32
    %441 = vector.broadcast %cst_144 : f32 to vector<8x192xf32>
    %442 = arith.addf %441, %440 : vector<8x192xf32>
    %443 = arith.divf %441, %442 : vector<8x192xf32>
    %444 = arith.mulf %435, %443 : vector<8x192xf32>
    %445 = arith.mulf %444, %438 : vector<8x192xf32>
    %446 = arith.truncf %445 : vector<8x192xf32> to vector<8x192xbf16>
    %c1_145 = arith.constant 1 : index
    %c0_146 = arith.constant 0 : index
    %c0_147 = arith.constant 0 : index
    %447 = vector.load %arg10[%c1_145, %c0_146, %c0_147] : memref<2x192x64xbf16, #tpu.memory_space<vmem>>, vector<1x192x64xbf16>
    %448 = vector.shape_cast %447 : vector<1x192x64xbf16> to vector<192x64xbf16>
    %cst_148 = arith.constant dense<0.000000e+00> : vector<8x64xf32>
    %449 = tpu.matmul %446, %448, %cst_148 {dimension_numbers = #tpu.dot_dimension_numbers<[1], [0], [0], [1], [0, 0, 1, 1], [], []>} : vector<8x192xbf16>, vector<192x64xbf16>, vector<8x64xf32> -> vector<8x64xf32>
    %450 = arith.addf %417, %449 : vector<8x64xf32>
    %c0_149 = arith.constant 0 : index
    %c0_150 = arith.constant 0 : index
    %451 = vector.load %arg11[%c0_149, %c0_150] : memref<1x64xf32, #tpu.memory_space<vmem>>, vector<1x64xf32>
    %452 = arith.mulf %450, %450 : vector<8x64xf32>
    %cst_151 = arith.constant dense<0.000000e+00> : vector<8xf32>
    %453 = vector.multi_reduction <add>, %452, %cst_151 [1] : vector<8x64xf32> to vector<8xf32>
    %454 = vector.shape_cast %453 : vector<8xf32> to vector<8x1xf32>
    %cst_152 = arith.constant 6.400000e+01 : f32
    %455 = vector.broadcast %cst_152 : f32 to vector<8x1xf32>
    %456 = arith.divf %454, %455 : vector<8x1xf32>
    %cst_153 = arith.constant 9.99999997E-7 : f32
    %457 = vector.broadcast %cst_153 : f32 to vector<8x1xf32>
    %458 = arith.addf %456, %457 : vector<8x1xf32>
    %459 = math.rsqrt %458 : vector<8x1xf32>
    %460 = vector.broadcast %459 : vector<8x1xf32> to vector<8x64xf32>
    %461 = arith.mulf %450, %460 : vector<8x64xf32>
    %462 = vector.broadcast %451 : vector<1x64xf32> to vector<8x64xf32>
    %463 = arith.mulf %461, %462 : vector<8x64xf32>
    %464 = arith.truncf %463 : vector<8x64xf32> to vector<8x64xbf16>
    %c0_154 = arith.constant 0 : index
    %c0_155 = arith.constant 0 : index
    %465 = vector.load %arg12[%c0_154, %c0_155] : memref<64x128xbf16, #tpu.memory_space<vmem>>, vector<64x128xbf16>
    %cst_156 = arith.constant dense<0.000000e+00> : vector<8x128xf32>
    %466 = tpu.matmul %464, %465, %cst_156 {dimension_numbers = #tpu.dot_dimension_numbers<[1], [0], [0], [1], [0, 0, 1, 1], [], []>} : vector<8x64xbf16>, vector<64x128xbf16>, vector<8x128xf32> -> vector<8x128xf32>
    %c0_157 = arith.constant 0 : index
    %c0_158 = arith.constant 0 : index
    %c0_159 = arith.constant 0 : index
    %467 = vector.load %arg13[%c0_157, %c0_158, %c0_159] : memref<1x8x128xf32, #tpu.memory_space<vmem>>, vector<1x8x128xf32>
    %468 = vector.shape_cast %467 : vector<1x8x128xf32> to vector<8x128xf32>
    %469 = vector.shape_cast %466 : vector<8x128xf32> to vector<1x8x128xf32>
    tpu.vector_store %arg13[%c0_157, %c0_158, %c0_159], %469 {strides = array<i32>} : memref<1x8x128xf32, #tpu.memory_space<vmem>>, vector<1x8x128xf32>,
    return
  }
  func.func @transform_0(%arg0: i32) -> (i32, i32, i32) {
    %c0_i32 = arith.constant 0 : i32
    %c0_i32_0 = arith.constant 0 : i32
    %c0_i32_1 = arith.constant 0 : i32
    return %arg0, %c0_i32, %c0_i32_0 : i32, i32, i32
  }
  func.func @transform_1(%arg0: i32) -> (i32, i32) {
    %c0_i32 = arith.constant 0 : i32
    %c0_i32_0 = arith.constant 0 : i32
    %c0_i32_1 = arith.constant 0 : i32
    return %c0_i32, %c0_i32_0 : i32, i32
  }
  func.func @transform_2(%arg0: i32) -> (i32, i32) {
    %c0_i32 = arith.constant 0 : i32
    %c0_i32_0 = arith.constant 0 : i32
    %c0_i32_1 = arith.constant 0 : i32
    return %c0_i32, %c0_i32_0 : i32, i32
  }
  func.func @transform_3(%arg0: i32) -> (i32, i32, i32) {
    %c0_i32 = arith.constant 0 : i32
    %c0_i32_0 = arith.constant 0 : i32
    %c0_i32_1 = arith.constant 0 : i32
    %c0_i32_2 = arith.constant 0 : i32
    return %c0_i32, %c0_i32_0, %c0_i32_1 : i32, i32, i32
  }
  func.func @transform_4(%arg0: i32) -> (i32, i32, i32) {
    %c0_i32 = arith.constant 0 : i32
    %c0_i32_0 = arith.constant 0 : i32
    %c0_i32_1 = arith.constant 0 : i32
    %c0_i32_2 = arith.constant 0 : i32
    return %c0_i32, %c0_i32_0, %c0_i32_1 : i32, i32, i32
  }
  func.func @transform_5(%arg0: i32) -> (i32, i32, i32) {
    %c0_i32 = arith.constant 0 : i32
    %c0_i32_0 = arith.constant 0 : i32
    %c0_i32_1 = arith.constant 0 : i32
    %c0_i32_2 = arith.constant 0 : i32
    return %c0_i32, %c0_i32_0, %c0_i32_1 : i32, i32, i32
  }
  func.func @transform_6(%arg0: i32) -> (i32, i32, i32) {
    %c0_i32 = arith.constant 0 : i32
    %c0_i32_0 = arith.constant 0 : i32
    %c0_i32_1 = arith.constant 0 : i32
    %c0_i32_2 = arith.constant 0 : i32
    return %c0_i32, %c0_i32_0, %c0_i32_1 : i32, i32, i32
  }
  func.func @transform_7(%arg0: i32) -> (i32, i32, i32) {
    %c0_i32 = arith.constant 0 : i32
    %c0_i32_0 = arith.constant 0 : i32
    %c0_i32_1 = arith.constant 0 : i32
    %c0_i32_2 = arith.constant 0 : i32
    return %c0_i32, %c0_i32_0, %c0_i32_1 : i32, i32, i32
  }
  func.func @transform_8(%arg0: i32) -> (i32, i32, i32) {
    %c0_i32 = arith.constant 0 : i32
    %c0_i32_0 = arith.constant 0 : i32
    %c0_i32_1 = arith.constant 0 : i32
    %c0_i32_2 = arith.constant 0 : i32
    return %c0_i32, %c0_i32_0, %c0_i32_1 : i32, i32, i32
  }
  func.func @transform_9(%arg0: i32) -> (i32, i32, i32) {
    %c0_i32 = arith.constant 0 : i32
    %c0_i32_0 = arith.constant 0 : i32
    %c0_i32_1 = arith.constant 0 : i32
    %c0_i32_2 = arith.constant 0 : i32
    return %c0_i32, %c0_i32_0, %c0_i32_1 : i32, i32, i32
  }
  func.func @transform_10(%arg0: i32) -> (i32, i32) {
    %c0_i32 = arith.constant 0 : i32
    %c0_i32_0 = arith.constant 0 : i32
    %c0_i32_1 = arith.constant 0 : i32
    return %c0_i32, %c0_i32_0 : i32, i32
  }
  func.func @transform_11(%arg0: i32) -> (i32, i32) {
    %c0_i32 = arith.constant 0 : i32
    %c0_i32_0 = arith.constant 0 : i32
    %c0_i32_1 = arith.constant 0 : i32
    return %c0_i32, %c0_i32_0 : i32, i32
  }
  func.func @transform_12(%arg0: i32) -> (i32, i32, i32) {
    %c0_i32 = arith.constant 0 : i32
    %c0_i32_0 = arith.constant 0 : i32
    %c0_i32_1 = arith.constant 0 : i32
    return %arg0, %c0_i32, %c0_i32_0 : i32, i32, i32
  }
}

</mosaic_0001>

<llo_original>
// kernel: llama_forward.1
$region0: #{llama_forward.1}
  #allocation0 [shape = 'u32[]', space=smem, size = 0x4, offset = 0x4, fixed_abs, tag = 'smem constant byte address 0x4 - core index']
  #allocation1 [shape = 'u32[144,128]{1,0:T(1,128)}', space=vmem, size = 0x12000, scoped, tag = 'internal scratch']
  %s0 = inlined_call_operand.vmem [shape: f32[2,8,64], index: 0, kind: input, shape index: {}]
  %s1 = inlined_call_operand.vmem [shape: f32[8,8], index: 1, kind: input, shape index: {}]
  %s2 = inlined_call_operand.vmem [shape: f32[8,8], index: 2, kind: input, shape index: {}]
  %s3 = inlined_call_operand.vmem [shape: f32[2,1,64], index: 3, kind: input, shape index: {}]
  %s4 = inlined_call_operand.vmem [shape: bf16[2,64,128], index: 4, kind: input, shape index: {}]
  %s5 = inlined_call_operand.vmem [shape: bf16[2,64,64], index: 5, kind: input, shape index: {}]
  %s6 = inlined_call_operand.vmem [shape: f32[2,1,64], index: 6, kind: input, shape index: {}]
  %s7 = inlined_call_operand.vmem [shape: bf16[2,64,192], index: 7, kind: input, shape index: {}]
  %s8 = inlined_call_operand.vmem [shape: bf16[2,64,192], index: 8, kind: input, shape index: {}]
  %s9 = inlined_call_operand.vmem [shape: bf16[2,192,64], index: 9, kind: input, shape index: {}]
  %s10 = inlined_call_operand.vmem [shape: f32[1,64], index: 10, kind: input, shape index: {}]
  %s11 = inlined_call_operand.vmem [shape: bf16[64,128], index: 11, kind: input, shape index: {}]
  %s12 = inlined_call_operand.hbm [shape: f32[2,8,128], index: 12, kind: output, shape index: {}]
  %s13 = sld [smem:[#allocation0]]
  $region81: #{llama_forward.1} parent=0
    _
  %s15 = ssub.s32 1, %s13
  %s16 = scalar_select 0, %s15, %s13
  $region1: #{llama_forward.1} parent=0
    #allocation2 [shape = 'u8[8192]{0}', space=vmem, size = 0x2000, scoped, tag = 'output window, operand 0']
    #allocation3 [shape = 's32[2]{0}', space=sflag, size = 0x8, scoped, tag = 'scoped memory for llama_forward.1']
    %17 = vsyncpa [#allocation3], 0
    %s18 = scalar_lea.sflag [#allocation3], 1
    %19 = vsyncpa %s18, 0
    loop: start=0, step=1, limit=4
    $region2: #{llama_forward.1} parent=1 // loop_pre_header
      _
    $region3: #{llama_forward.1} parent=1 // loop_header
      %s21 = sphi 0, %s25
      %p22 = scmp.ge.s32.totalorder %s21, 4
      %s31 = sphi 0, %s33
      %s34 = sphi 0, %s31
      %s35 = sphi 0, %s34
      %s51 = sphi 0, %s35
      %s55 = sphi 0, %s55
      %s57 = sphi 0, %s55
      %s58 = sphi 0, %s57
      %s72 = sphi 0, %s58
      %s76 = sphi 0, %s76
      %s78 = sphi 0, %s76
      %s79 = sphi 0, %s78
      %s93 = sphi 0, %s79
      %s97 = sphi 0, %s97
      %s99 = sphi 0, %s97
      %s100 = sphi 0, %s99
      %s114 = sphi 0, %s100
      %s118 = sphi 0, %s118
      %s120 = sphi 0, %s118
      %s121 = sphi 0, %s120
      %s135 = sphi 0, %s121
      %s139 = sphi 0, %s139
      %s141 = sphi 0, %s139
      %s142 = sphi 0, %s141
      %s156 = sphi 0, %s142
      %s160 = sphi 0, %s160
      %s162 = sphi 0, %s160
      %s163 = sphi 0, %s162
      %s177 = sphi 0, %s163
      %s181 = sphi 0, %s181
      %s183 = sphi 0, %s181
      %s184 = sphi 0, %s183
      %s198 = sphi 0, %s184
      %s202 = sphi 0, %s202
      %s204 = sphi 0, %s202
      %s205 = sphi 0, %s204
      %s219 = sphi 0, %s205
      %s223 = sphi 0, %s223
      %s225 = sphi 0, %s223
      %s226 = sphi 0, %s225
      %s240 = sphi 0, %s226
      %s244 = sphi 0, %s244
      %s246 = sphi 0, %s244
      %s247 = sphi 0, %s246
      %s261 = sphi 0, %s247
      %s265 = sphi 0, %s265
      %s267 = sphi 0, %s265
      %s268 = sphi 0, %s267
      %s282 = sphi 0, %s268
      %s288 = sphi 0, %s290
      %s291 = sphi 0, %s288
      %s292 = sphi 0, %s291
      %s308 = sphi 0, %s292
    $region4: #{llama_forward.1} parent=1 // loop_header_branch
      %24 = sbr.rel (%p22) target = $region8
    $region5: #{llama_forward.1} parent=1 // loop_body
      %s26 = ssub.s32 %s21, 1
      %s27 = ssub.s32 %s21, 2
      %s28 = sadd.s32 %s21, 1
      %s29 = ssub.s32 %s21, %s28
      %p30 = scmp.eq.s32.totalorder %s29, 0
      %s32 = sadd.s32 %s31, 1
      %s33 = scalar_select %p30, %s31, %s32
      %p36 = pneg %p30
      %p37 = scmp.eq.s32.totalorder %s21, 1
      %p38 = por %p36, %p37
      %p39 = scmp.ne.s32.totalorder %s31, %s34
      %p40 = scmp.eq.s32.totalorder %s21, 0
      %p41 = por %p39, %p40
      %p42 = scmp.ne.s32.totalorder %s31, %s34
      %p43 = scmp.eq.s32.totalorder %s26, 1
      %p44 = por %p42, %p43
      %p45 = scmp.ne.s32.totalorder %s34, %s35
      %p46 = scmp.eq.s32.totalorder %s26, 0
      %p47 = por %p45, %p46
      %p48 = scmp.ne.s32.totalorder %s34, %s35
      %p49 = scmp.eq.s32.totalorder %s27, 1
      %p50 = por %p48, %p49
      %p52 = scmp.ne.s32.totalorder %s35, %s51
      %p53 = scmp.eq.s32.totalorder %s27, 0
      %p54 = por %p52, %p53
      %s56 = sadd.s32 %s55, 1
      %p59 = scmp.eq.s32.totalorder %s21, 1
      %p60 = scmp.ne.s32.totalorder %s55, %s57
      %p61 = scmp.eq.s32.totalorder %s21, 0
      %p62 = por %p60, %p61
      %p63 = scmp.ne.s32.totalorder %s55, %s57
      %p64 = scmp.eq.s32.totalorder %s26, 1
      %p65 = por %p63, %p64
      %p66 = scmp.ne.s32.totalorder %s57, %s58
      %p67 = scmp.eq.s32.totalorder %s26, 0
      %p68 = por %p66, %p67
      %p69 = scmp.ne.s32.totalorder %s57, %s58
      %p70 = scmp.eq.s32.totalorder %s27, 1
      %p71 = por %p69, %p70
      %p73 = scmp.ne.s32.totalorder %s58, %s72
      %p74 = scmp.eq.s32.totalorder %s27, 0
      %p75 = por %p73, %p74
      %s77 = sadd.s32 %s76, 1
      %p80 = scmp.eq.s32.totalorder %s21, 1
      %p81 = scmp.ne.s32.totalorder %s76, %s78
      %p82 = scmp.eq.s32.totalorder %s21, 0
      %p83 = por %p81, %p82
      %p84 = scmp.ne.s32.totalorder %s76, %s78
      %p85 = scmp.eq.s32.totalorder %s26, 1
      %p86 = por %p84, %p85
      %p87 = scmp.ne.s32.totalorder %s78, %s79
      %p88 = scmp.eq.s32.totalorder %s26, 0
      %p89 = por %p87, %p88
      %p90 = scmp.ne.s32.totalorder %s78, %s79
      %p91 = scmp.eq.s32.totalorder %s27, 1
      %p92 = por %p90, %p91
      %p94 = scmp.ne.s32.totalorder %s79, %s93
      %p95 = scmp.eq.s32.totalorder %s27, 0
      %p96 = por %p94, %p95
      %s98 = sadd.s32 %s97, 1
      %p101 = scmp.eq.s32.totalorder %s21, 1
      %p102 = scmp.ne.s32.totalorder %s97, %s99
      %p103 = scmp.eq.s32.totalorder %s21, 0
      %p104 = por %p102, %p103
      %p105 = scmp.ne.s32.totalorder %s97, %s99
      %p106 = scmp.eq.s32.totalorder %s26, 1
      %p107 = por %p105, %p106
      %p108 = scmp.ne.s32.totalorder %s99, %s100
      %p109 = scmp.eq.s32.totalorder %s26, 0
      %p110 = por %p108, %p109
      %p111 = scmp.ne.s32.totalorder %s99, %s100
      %p112 = scmp.eq.s32.totalorder %s27, 1
      %p113 = por %p111, %p112
      %p115 = scmp.ne.s32.totalorder %s100, %s114
      %p116 = scmp.eq.s32.totalorder %s27, 0
      %p117 = por %p115, %p116
      %s119 = sadd.s32 %s118, 1
      %p122 = scmp.eq.s32.totalorder %s21, 1
      %p123 = scmp.ne.s32.totalorder %s118, %s120
      %p124 = scmp.eq.s32.totalorder %s21, 0
      %p125 = por %p123, %p124
      %p126 = scmp.ne.s32.totalorder %s118, %s120
      %p127 = scmp.eq.s32.totalorder %s26, 1
      %p128 = por %p126, %p127
      %p129 = scmp.ne.s32.totalorder %s120, %s121
      %p130 = scmp.eq.s32.totalorder %s26, 0
      %p131 = por %p129, %p130
      %p132 = scmp.ne.s32.totalorder %s120, %s121
      %p133 = scmp.eq.s32.totalorder %s27, 1
      %p134 = por %p132, %p133
      %p136 = scmp.ne.s32.totalorder %s121, %s135
      %p137 = scmp.eq.s32.totalorder %s27, 0
      %p138 = por %p136, %p137
      %s140 = sadd.s32 %s139, 1
      %p143 = scmp.eq.s32.totalorder %s21, 1
      %p144 = scmp.ne.s32.totalorder %s139, %s141
      %p145 = scmp.eq.s32.totalorder %s21, 0
      %p146 = por %p144, %p145
      %p147 = scmp.ne.s32.totalorder %s139, %s141
      %p148 = scmp.eq.s32.totalorder %s26, 1
      %p149 = por %p147, %p148
      %p150 = scmp.ne.s32.totalorder %s141, %s142
      %p151 = scmp.eq.s32.totalorder %s26, 0
      %p152 = por %p150, %p151
      %p153 = scmp.ne.s32.totalorder %s141, %s142
      %p154 = scmp.eq.s32.totalorder %s27, 1
      %p155 = por %p153, %p154
      %p157 = scmp.ne.s32.totalorder %s142, %s156
      %p158 = scmp.eq.s32.totalorder %s27, 0
      %p159 = por %p157, %p158
      %s161 = sadd.s32 %s160, 1
      %p164 = scmp.eq.s32.totalorder %s21, 1
      %p165 = scmp.ne.s32.totalorder %s160, %s162
      %p166 = scmp.eq.s32.totalorder %s21, 0
      %p167 = por %p165, %p166
      %p168 = scmp.ne.s32.totalorder %s160, %s162
      %p169 = scmp.eq.s32.totalorder %s26, 1
      %p170 = por %p168, %p169
      %p171 = scmp.ne.s32.totalorder %s162, %s163
      %p172 = scmp.eq.s32.totalorder %s26, 0
      %p173 = por %p171, %p172
      %p174 = scmp.ne.s32.totalorder %s162, %s163
      %p175 = scmp.eq.s32.totalorder %s27, 1
      %p176 = por %p174, %p175
      %p178 = scmp.ne.s32.totalorder %s163, %s177
      %p179 = scmp.eq.s32.totalorder %s27, 0
      %p180 = por %p178, %p179
      %s182 = sadd.s32 %s181, 1
      %p185 = scmp.eq.s32.totalorder %s21, 1
      %p186 = scmp.ne.s32.totalorder %s181, %s183
      %p187 = scmp.eq.s32.totalorder %s21, 0
      %p188 = por %p186, %p187
      %p189 = scmp.ne.s32.totalorder %s181, %s183
      %p190 = scmp.eq.s32.totalorder %s26, 1
      %p191 = por %p189, %p190
      %p192 = scmp.ne.s32.totalorder %s183, %s184
      %p193 = scmp.eq.s32.totalorder %s26, 0
      %p194 = por %p192, %p193
      %p195 = scmp.ne.s32.totalorder %s183, %s184
      %p196 = scmp.eq.s32.totalorder %s27, 1
      %p197 = por %p195, %p196
      %p199 = scmp.ne.s32.totalorder %s184, %s198
      %p200 = scmp.eq.s32.totalorder %s27, 0
      %p201 = por %p199, %p200
      %s203 = sadd.s32 %s202, 1
      %p206 = scmp.eq.s32.totalorder %s21, 1
      %p207 = scmp.ne.s32.totalorder %s202, %s204
      %p208 = scmp.eq.s32.totalorder %s21, 0
      %p209 = por %p207, %p208
      %p210 = scmp.ne.s32.totalorder %s202, %s204
      %p211 = scmp.eq.s32.totalorder %s26, 1
      %p212 = por %p210, %p211
      %p213 = scmp.ne.s32.totalorder %s204, %s205
      %p214 = scmp.eq.s32.totalorder %s26, 0
      %p215 = por %p213, %p214
      %p216 = scmp.ne.s32.totalorder %s204, %s205
      %p217 = scmp.eq.s32.totalorder %s27, 1
      %p218 = por %p216, %p217
      %p220 = scmp.ne.s32.totalorder %s205, %s219
      %p221 = scmp.eq.s32.totalorder %s27, 0
      %p222 = por %p220, %p221
      %s224 = sadd.s32 %s223, 1
      %p227 = scmp.eq.s32.totalorder %s21, 1
      %p228 = scmp.ne.s32.totalorder %s223, %s225
      %p229 = scmp.eq.s32.totalorder %s21, 0
      %p230 = por %p228, %p229
      %p231 = scmp.ne.s32.totalorder %s223, %s225
      %p232 = scmp.eq.s32.totalorder %s26, 1
      %p233 = por %p231, %p232
      %p234 = scmp.ne.s32.totalorder %s225, %s226
      %p235 = scmp.eq.s32.totalorder %s26, 0
      %p236 = por %p234, %p235
      %p237 = scmp.ne.s32.totalorder %s225, %s226
      %p238 = scmp.eq.s32.totalorder %s27, 1
      %p239 = por %p237, %p238
      %p241 = scmp.ne.s32.totalorder %s226, %s240
      %p242 = scmp.eq.s32.totalorder %s27, 0
      %p243 = por %p241, %p242
      %s245 = sadd.s32 %s244, 1
      %p248 = scmp.eq.s32.totalorder %s21, 1
      %p249 = scmp.ne.s32.totalorder %s244, %s246
      %p250 = scmp.eq.s32.totalorder %s21, 0
      %p251 = por %p249, %p250
      %p252 = scmp.ne.s32.totalorder %s244, %s246
      %p253 = scmp.eq.s32.totalorder %s26, 1
      %p254 = por %p252, %p253
      %p255 = scmp.ne.s32.totalorder %s246, %s247
      %p256 = scmp.eq.s32.totalorder %s26, 0
      %p257 = por %p255, %p256
      %p258 = scmp.ne.s32.totalorder %s246, %s247
      %p259 = scmp.eq.s32.totalorder %s27, 1
      %p260 = por %p258, %p259
      %p262 = scmp.ne.s32.totalorder %s247, %s261
      %p263 = scmp.eq.s32.totalorder %s27, 0
      %p264 = por %p262, %p263
      %s266 = sadd.s32 %s265, 1
      %p269 = scmp.eq.s32.totalorder %s21, 1
      %p270 = scmp.ne.s32.totalorder %s265, %s267
      %p271 = scmp.eq.s32.totalorder %s21, 0
      %p272 = por %p270, %p271
      %p273 = scmp.ne.s32.totalorder %s265, %s267
      %p274 = scmp.eq.s32.totalorder %s26, 1
      %p275 = por %p273, %p274
      %p276 = scmp.ne.s32.totalorder %s267, %s268
      %p277 = scmp.eq.s32.totalorder %s26, 0
      %p278 = por %p276, %p277
      %p279 = scmp.ne.s32.totalorder %s267, %s268
      %p280 = scmp.eq.s32.totalorder %s27, 1
      %p281 = por %p279, %p280
      %p283 = scmp.ne.s32.totalorder %s268, %s282
      %p284 = scmp.eq.s32.totalorder %s27, 0
      %p285 = por %p283, %p284
      %s286 = ssub.s32 %s21, %s28
      %p287 = scmp.eq.s32.totalorder %s286, 0
      %s289 = sadd.s32 %s288, 1
      %s290 = scalar_select %p287, %s288, %s289
      %p293 = pneg %p287
      %p294 = scmp.eq.s32.totalorder %s21, 1
      %p295 = por %p293, %p294
      %p296 = scmp.ne.s32.totalorder %s288, %s291
      %p297 = scmp.eq.s32.totalorder %s21, 0
      %p298 = por %p296, %p297
      %p299 = scmp.ne.s32.totalorder %s288, %s291
      %p300 = scmp.eq.s32.totalorder %s26, 1
      %p301 = por %p299, %p300
      %p302 = scmp.ne.s32.totalorder %s291, %s292
      %p303 = scmp.eq.s32.totalorder %s26, 0
      %p304 = por %p302, %p303
      %p305 = scmp.ne.s32.totalorder %s291, %s292
      %p306 = scmp.eq.s32.totalorder %s27, 1
      %p307 = por %p305, %p306
      %p309 = scmp.ne.s32.totalorder %s292, %s308
      %p310 = scmp.eq.s32.totalorder %s27, 0
      %p311 = por %p309, %p310
      %p312 = scmp.le.s32.totalorder 1, %s21
      %p313 = scmp.lt.s32.totalorder %s21, 3
      %p314 = pnand %p312, %p313
      %p315 = pneg %p314
      // Predicated region
      $region9: #{llama_forward.1} parent=5 // pred_check
        _
      $region10: #{llama_forward.1} parent=5 // pred_check_branch
        %317 = sbr.rel (%p314) target = $region12
      $region11: #{llama_forward.1} parent=5 // pred_region
        %s318 = ssub.s32 %s21, 1
        // Predicated region
        $region13: #{llama_forward.1} parent=11 // pred_check
          %p319 = pneg %p68
        $region14: #{llama_forward.1} parent=11 // pred_check_branch
          %321 = sbr.rel (%p319) target = $region16
        $region15: #{llama_forward.1} parent=11 // pred_region
          _
        $region16: #{llama_forward.1} parent=11 // pred_fallthru
          _
        // Predicated region
        $region17: #{llama_forward.1} parent=11 // pred_check
          %p322 = pneg %p89
        $region18: #{llama_forward.1} parent=11 // pred_check_branch
          %324 = sbr.rel (%p322) target = $region20
        $region19: #{llama_forward.1} parent=11 // pred_region
          _
        $region20: #{llama_forward.1} parent=11 // pred_fallthru
          _
        // Predicated region
        $region21: #{llama_forward.1} parent=11 // pred_check
          %p325 = pneg %p110
        $region22: #{llama_forward.1} parent=11 // pred_check_branch
          %327 = sbr.rel (%p325) target = $region24
        $region23: #{llama_forward.1} parent=11 // pred_region
          _
        $region24: #{llama_forward.1} parent=11 // pred_fallthru
          _
        // Predicated region
        $region25: #{llama_forward.1} parent=11 // pred_check
          %p328 = pneg %p131
        $region26: #{llama_forward.1} parent=11 // pred_check_branch
          %330 = sbr.rel (%p328) target = $region28
        $region27: #{llama_forward.1} parent=11 // pred_region
          _
        $region28: #{llama_forward.1} parent=11 // pred_fallthru
          _
        // Predicated region
        $region29: #{llama_forward.1} parent=11 // pred_check
          %p331 = pneg %p152
        $region30: #{llama_forward.1} parent=11 // pred_check_branch
          %333 = sbr.rel (%p331) target = $region32
        $region31: #{llama_forward.1} parent=11 // pred_region
          _
        $region32: #{llama_forward.1} parent=11 // pred_fallthru
          _
        // Predicated region
        $region33: #{llama_forward.1} parent=11 // pred_check
          %p334 = pneg %p173
        $region34: #{llama_forward.1} parent=11 // pred_check_branch
          %336 = sbr.rel (%p334) target = $region36
        $region35: #{llama_forward.1} parent=11 // pred_region
          _
        $region36: #{llama_forward.1} parent=11 // pred_fallthru
          _
        // Predicated region
        $region37: #{llama_forward.1} parent=11 // pred_check
          %p337 = pneg %p194
        $region38: #{llama_forward.1} parent=11 // pred_check_branch
          %339 = sbr.rel (%p337) target = $region40
        $region39: #{llama_forward.1} parent=11 // pred_region
          _
        $region40: #{llama_forward.1} parent=11 // pred_fallthru
          _
        // Predicated region
        $region41: #{llama_forward.1} parent=11 // pred_check
          %p340 = pneg %p215
        $region42: #{llama_forward.1} parent=11 // pred_check_branch
          %342 = sbr.rel (%p340) target = $region44
        $region43: #{llama_forward.1} parent=11 // pred_region
          _
        $region44: #{llama_forward.1} parent=11 // pred_fallthru
          _
        // Predicated region
        $region45: #{llama_forward.1} parent=11 // pred_check
          %p343 = pneg %p236
        $region46: #{llama_forward.1} parent=11 // pred_check_branch
          %345 = sbr.rel (%p343) target = $region48
        $region47: #{llama_forward.1} parent=11 // pred_region
          _
        $region48: #{llama_forward.1} parent=11 // pred_fallthru
          _
        // Predicated region
        $region49: #{llama_forward.1} parent=11 // pred_check
          %p346 = pneg %p257
        $region50: #{llama_forward.1} parent=11 // pred_check_branch
          %348 = sbr.rel (%p346) target = $region52
        $region51: #{llama_forward.1} parent=11 // pred_region
          _
        $region52: #{llama_forward.1} parent=11 // pred_fallthru
          _
        // Predicated region
        $region53: #{llama_forward.1} parent=11 // pred_check
          %p349 = pneg %p278
        $region54: #{llama_forward.1} parent=11 // pred_check_branch
          %351 = sbr.rel (%p349) target = $region56
        $region55: #{llama_forward.1} parent=11 // pred_region
          _
        $region56: #{llama_forward.1} parent=11 // pred_fallthru
          _
      $region12: #{llama_forward.1} parent=5 // pred_fallthru
        _
      %p352 = scmp.lt.s32.totalorder %s21, 2
      // Predicated region
      $region57: #{llama_forward.1} parent=5 // pred_check
        %p353 = pneg %p352
      $region58: #{llama_forward.1} parent=5 // pred_check_branch
        %355 = sbr.rel (%p353) target = $region60
      $region59: #{llama_forward.1} parent=5 // pred_region
        // Predicated region
        $region61: #{llama_forward.1} parent=59 // pred_check
          %p356 = pneg %p41
        $region62: #{llama_forward.1} parent=59 // pred_check_branch
          %358 = sbr.rel (%p356) target = $region64
        $region63: #{llama_forward.1} parent=59 // pred_region
          %p359 = scmp.lt.s32.totalorder %s21, 1
          %s360 = scalar_select %p359, %s21, 1
          %s361 = smul.addr %s360, 8
          %s362 = scalar_lea.vmem %s0, %s361
        $region64: #{llama_forward.1} parent=59 // pred_fallthru
          _
      $region60: #{llama_forward.1} parent=5 // pred_fallthru
        _
      %p363 = scmp.le.s32.totalorder 1, %s21
      %p364 = scmp.lt.s32.totalorder %s21, 3
      %p365 = pnand %p363, %p364
      %p366 = pneg %p365
      // Predicated region
      $region65: #{llama_forward.1} parent=5 // pred_check
        _
      $region66: #{llama_forward.1} parent=5 // pred_check_branch
        %368 = sbr.rel (%p365) target = $region68
      $region67: #{llama_forward.1} parent=5 // pred_region
        %s369 = ssub.s32 %s21, 1
        %p370 = scmp.lt.s32.totalorder %s26, 1
        %s371 = scalar_select %p370, %s26, 1
        %s372 = smul.addr %s371, 8
        %s373 = scalar_lea.vmem %s0, %s372
        %p374 = pneg %p47
        %p375 = pneg %p44
        %p376 = pneg %p68
        %p377 = pneg %p65
        %p378 = pneg %p89
        %p379 = pneg %p86
        %p380 = pneg %p110
        %p381 = pneg %p107
        %p382 = pneg %p131
        %p383 = pneg %p128
        %p384 = pneg %p152
        %p385 = pneg %p149
        %p386 = pneg %p173
        %p387 = pneg %p170
        %p388 = pneg %p194
        %p389 = pneg %p191
        %p390 = pneg %p215
        %p391 = pneg %p212
        %p392 = pneg %p236
        %p393 = pneg %p233
        %p394 = pneg %p257
        %p395 = pneg %p254
        %p396 = pneg %p278
        %p397 = pneg %p275
        %p398 = pneg %p304
        %p399 = pneg %p301
        %s400 = sand.u32 %s291, 1
        %s401 = scalar_lea.sflag [#allocation3], %s400
        %s402 = sand.u32 %s291, 1
        %s403 = smul.addr %s402, 8
        %s404 = scalar_lea.vmem [#allocation2], %s403
        %p405 = scmp.lt.s32.totalorder %s26, 1
        %s406 = scalar_select %p405, %s26, 1
        %s407 = smul.addr %s406, 8
        %s408 = scalar_lea.vmem %s0, %s407
        %v410 = vld [vmem:[%s408] sm:$0xff]
        %v411 = vld [vmem:[%s1] sm:$0xff]
        %v412 = vld [vmem:[%s2] sm:$0xff]
        %v413 = vlaneseq
        %v414 = vshrl.u32 %v413, 7
        %v415 = vlaneseq
        %v416 = vand.u32 %v415, 127
        %vm417 = vcmp.le.s32.totalorder %v416, %v414
        %v418 = vld [vmem:[%s3] sm:$0x1]
        %v419 = vmul.f32 %v410, %v410
        %vm420 = vcmask 523264
        %v421 = vsel %vm420, %v419, 0.0
        %422 = vadd.xlane.f32.xlu0 %v421
        %v423 = vpop.xlane.xlu0 %422
        %v424 = vrcp.pop 64.0
        %v425 = vmul.f32 %v423, %v424
        %v426 = vadd.f32 %v425, 1e-06
        %v427 = vrsqrt.pop %v426
        %v428 = vmul.f32 %v410, %v427
        %v430 = vlaneseq
        %v431 = vshrl.u32 %v430, 7
        %v432 = vsub.s32 0, %v431
        %v433 = vrot.slane %v418, %v432
        %v435 = vmul.f32 %v428, %v433
        %v436 = vpack.c.bf16 %v435, %v435
        %v437 = vld [vmem:[%s4] sm:$0xf]
        %v438 = vld [vmem:[%s4 + $0x4] sm:$0xf]
        %v439 = vld [vmem:[%s4 + $0x8] sm:$0xf]
        %v440 = vld [vmem:[%s4 + $0xc] sm:$0xf]
        %v441 = vld [vmem:[%s4 + $0x10] sm:$0xf]
        %v442 = vld [vmem:[%s4 + $0x14] sm:$0xf]
        %v443 = vld [vmem:[%s4 + $0x18] sm:$0xf]
        %v444 = vld [vmem:[%s4 + $0x1c] sm:$0xf]
        %v453 = vunpack.c.l.b16 %v437
        %v454 = vunpack.c.l.b16 %v438
        %v455 = vunpack.c.l.b16 %v439
        %v456 = vunpack.c.l.b16 %v440
        %v457 = vunpack.c.l.b16 %v441
        %v458 = vunpack.c.l.b16 %v442
        %v459 = vunpack.c.l.b16 %v443
        %v460 = vunpack.c.l.b16 %v444
        %v461 = vpack.c.b16 %v454, %v453
        %v462 = vpack.c.b16 %v456, %v455
        %v463 = vpack.c.b16 %v458, %v457
        %v464 = vpack.c.b16 %v460, %v459
        %v470 = vsel %vm420, %v436, 0
        %472 = vmatprep.subr.bf16.mxu0 0
        %473 = vmatpush1.bf16.msra.mxu0 0
        %474 = vmatprep.subr.bf16.mxu0 0
        %475 = vmatpush1.bf16.msra.mxu0 0
        %476 = vmatprep.subr.bf16.mxu0 0
        %477 = vmatpush1.bf16.msra.mxu0 0
        %478 = vmatprep.subr.bf16.mxu0 0
        %479 = vmatpush1.bf16.msra.mxu0 0
        %480 = vmatprep.subr.bf16.mxu0 0
        %481 = vmatpush1.bf16.msra.mxu0 %v464
        %482 = vmatprep.subr.bf16.mxu0 0
        %483 = vmatpush1.bf16.msra.mxu0 %v463
        %484 = vmatprep.subr.bf16.mxu0 0
        %485 = vmatpush1.bf16.msra.mxu0 %v462
        %486 = vmatprep.subr.bf16.mxu0 0
        %487 = vmatpush1.bf16.msra.mxu0 %v461
        %488 = vmatprep.subr.bf16.mxu0 0
        %489 = vmatpush2.bf16.msra.mxu0 0
        %490 = vmatprep.subr.bf16.mxu0 0
        %491 = vmatpush2.bf16.msra.mxu0 0
        %492 = vmatprep.subr.bf16.mxu0 0
        %493 = vmatpush2.bf16.msra.mxu0 0
        %494 = vmatprep.subr.bf16.mxu0 0
        %495 = vmatpush2.bf16.msra.mxu0 0
        %496 = vmatprep.subr.bf16.mxu0 0
        %497 = vmatpush2.bf16.msra.mxu0 0
        %498 = vmatprep.subr.bf16.mxu0 0
        %499 = vmatpush2.bf16.msra.mxu0 0
        %500 = vmatprep.subr.bf16.mxu0 0
        %501 = vmatpush2.bf16.msra.mxu0 0
        %502 = vmatprep.subr.bf16.mxu0 0
        %503 = vmatpush2.bf16.msra.mxu0 0
        %504 = vmatprep.mubr.bf16.mxu0 0
        %505 = vmatmul.mubr.bf16.gmra.mxu0 %v470
        %v506 = vpop.f32.mrf.mxu0
        %v507 = vadd.f32 0.0, %v506
        %v508 = vpop.f32.mrf.mxu0
        %v509 = vpop.f32.mrf.mxu0
        %v510 = vpop.f32.mrf.mxu0
        %511 = vdwg.mxu0
        %513 = vrot.lane.b32.xlu0 %v411, 64
        %v514 = vpop.permute.xlu0 %513
        %v516 = vmul.f32 %v507, %v514
        %518 = vrot.lane.b32.xlu0 %v412, 72
        %v519 = vpop.permute.xlu0 %518
        %v521 = vmul.f32 %v507, %v519
        %523 = vrot.lane.b32.xlu0 %v521, 120
        %v524 = vpop.permute.xlu0 %523
        %v526 = vsub.f32 %v516, %v524
        %527 = vrot.lane.b32.xlu0 %v411, 72
        %v528 = vpop.permute.xlu0 %527
        %v530 = vmul.f32 %v507, %v528
        %531 = vrot.lane.b32.xlu0 %v412, 64
        %v532 = vpop.permute.xlu0 %531
        %v534 = vmul.f32 %v507, %v532
        %536 = vrot.lane.b32.xlu0 %v534, 8
        %v537 = vpop.permute.xlu0 %536
        %v539 = vadd.f32 %v530, %v537
        %v540 = vpack.c.bf16 %v526, %v526
        %v541 = vpack.c.bf16 %v539, %v539
        %v542 = vpack.c.bf16 %v507, %v507
        %543 = vrot.lane.b32.xlu0 %v411, 80
        %v544 = vpop.permute.xlu0 %543
        %v546 = vmul.f32 %v507, %v544
        %547 = vrot.lane.b32.xlu0 %v412, 88
        %v548 = vpop.permute.xlu0 %547
        %v550 = vmul.f32 %v507, %v548
        %552 = vrot.lane.b32.xlu0 %v550, 120
        %v553 = vpop.permute.xlu0 %552
        %v555 = vsub.f32 %v546, %v553
        %556 = vrot.lane.b32.xlu0 %v411, 88
        %v557 = vpop.permute.xlu0 %556
        %v559 = vmul.f32 %v507, %v557
        %560 = vrot.lane.b32.xlu0 %v412, 80
        %v561 = vpop.permute.xlu0 %560
        %v563 = vmul.f32 %v507, %v561
        %565 = vrot.lane.b32.xlu0 %v563, 8
        %v566 = vpop.permute.xlu0 %565
        %v568 = vadd.f32 %v559, %v566
        %v569 = vpack.c.bf16 %v555, %v555
        %v570 = vpack.c.bf16 %v568, %v568
        %v571 = vmul.f32 %v507, %v411
        %572 = vrot.lane.b32.xlu0 %v412, 8
        %v573 = vpop.permute.xlu0 %572
        %v575 = vmul.f32 %v507, %v573
        %577 = vrot.lane.b32.xlu0 %v575, 120
        %v578 = vpop.permute.xlu0 %577
        %v580 = vsub.f32 %v571, %v578
        %581 = vrot.lane.b32.xlu0 %v411, 8
        %v582 = vpop.permute.xlu0 %581
        %v584 = vmul.f32 %v507, %v582
        %v585 = vmul.f32 %v507, %v412
        %587 = vrot.lane.b32.xlu0 %v585, 8
        %v588 = vpop.permute.xlu0 %587
        %v590 = vadd.f32 %v584, %v588
        %v591 = vpack.c.bf16 %v580, %v580
        %v592 = vpack.c.bf16 %v590, %v590
        %594 = vrot.lane.b32.xlu0 %v592, 120
        %v595 = vpop.permute.xlu0 %594
        %597 = vrot.lane.b32.xlu0 %v541, 56
        %v598 = vpop.permute.xlu0 %597
        %vm599 = vcmask 64512
        %v601 = vsel %vm599, %v595, 0
        %v604 = vsel %vm599, %v598, 0
        %606 = vmatprep.subr.bf16.mxu0 0
        %607 = vmatpush1.bf16.xpose.msra.mxu0 0
        %608 = vmatprep.subr.bf16.mxu0 0
        %609 = vmatpush1.bf16.xpose.msra.mxu0 0
        %610 = vmatprep.subr.bf16.mxu0 0
        %611 = vmatpush1.bf16.xpose.msra.mxu0 0
        %612 = vmatprep.subr.bf16.mxu0 0
        %613 = vmatpush1.bf16.xpose.msra.mxu0 0
        %614 = vmatprep.subr.bf16.mxu0 0
        %615 = vmatpush1.bf16.xpose.msra.mxu0 0
        %616 = vmatprep.subr.bf16.mxu0 0
        %617 = vmatpush1.bf16.xpose.msra.mxu0 0
        %618 = vmatprep.subr.bf16.mxu0 0
        %619 = vmatpush1.bf16.xpose.msra.mxu0 0
        %620 = vmatprep.subr.bf16.mxu0 0
        %621 = vmatpush1.bf16.xpose.msra.mxu0 %v604
        %622 = vmatprep.subr.bf16.mxu0 0
        %623 = vmatpush2.bf16.xpose.msra.mxu0 0
        %624 = vmatprep.subr.bf16.mxu0 0
        %625 = vmatpush2.bf16.xpose.msra.mxu0 0
        %626 = vmatprep.subr.bf16.mxu0 0
        %627 = vmatpush2.bf16.xpose.msra.mxu0 0
        %628 = vmatprep.subr.bf16.mxu0 0
        %629 = vmatpush2.bf16.xpose.msra.mxu0 0
        %630 = vmatprep.subr.bf16.mxu0 0
        %631 = vmatpush2.bf16.xpose.msra.mxu0 0
        %632 = vmatprep.subr.bf16.mxu0 0
        %633 = vmatpush2.bf16.xpose.msra.mxu0 0
        %634 = vmatprep.subr.bf16.mxu0 0
        %635 = vmatpush2.bf16.xpose.msra.mxu0 0
        %636 = vmatprep.subr.bf16.mxu0 0
        %637 = vmatpush2.bf16.xpose.msra.mxu0 0
        %638 = vmatprep.mubr.bf16.mxu0 0
        %639 = vmatmul.mubr.bf16.gmra.mxu0 %v601
        %v640 = vpop.f32.mrf.mxu0
        %v641 = vadd.f32 0.0, %v640
        %v642 = vpop.f32.mrf.mxu0
        %v643 = vpop.f32.mrf.mxu0
        %v644 = vpop.f32.mrf.mxu0
        %645 = vdwg.mxu0
        %647 = vrot.lane.b32.xlu0 %v540, 64
        %v648 = vpop.permute.xlu0 %647
        %v650 = vsel %vm599, %v591, 0
        %v653 = vsel %vm599, %v648, 0
        %655 = vmatprep.subr.bf16.mxu0 0
        %656 = vmatpush1.bf16.xpose.msra.mxu0 0
        %657 = vmatprep.subr.bf16.mxu0 0
        %658 = vmatpush1.bf16.xpose.msra.mxu0 0
        %659 = vmatprep.subr.bf16.mxu0 0
        %660 = vmatpush1.bf16.xpose.msra.mxu0 0
        %661 = vmatprep.subr.bf16.mxu0 0
        %662 = vmatpush1.bf16.xpose.msra.mxu0 0
        %663 = vmatprep.subr.bf16.mxu0 0
        %664 = vmatpush1.bf16.xpose.msra.mxu0 0
        %665 = vmatprep.subr.bf16.mxu0 0
        %666 = vmatpush1.bf16.xpose.msra.mxu0 0
        %667 = vmatprep.subr.bf16.mxu0 0
        %668 = vmatpush1.bf16.xpose.msra.mxu0 0
        %669 = vmatprep.subr.bf16.mxu0 0
        %670 = vmatpush1.bf16.xpose.msra.mxu0 %v653
        %671 = vmatprep.subr.bf16.mxu0 0
        %672 = vmatpush2.bf16.xpose.msra.mxu0 0
        %673 = vmatprep.subr.bf16.mxu0 0
        %674 = vmatpush2.bf16.xpose.msra.mxu0 0
        %675 = vmatprep.subr.bf16.mxu0 0
        %676 = vmatpush2.bf16.xpose.msra.mxu0 0
        %677 = vmatprep.subr.bf16.mxu0 0
        %678 = vmatpush2.bf16.xpose.msra.mxu0 0
        %679 = vmatprep.subr.bf16.mxu0 0
        %680 = vmatpush2.bf16.xpose.msra.mxu0 0
        %681 = vmatprep.subr.bf16.mxu0 0
        %682 = vmatpush2.bf16.xpose.msra.mxu0 0
        %683 = vmatprep.subr.bf16.mxu0 0
        %684 = vmatpush2.bf16.xpose.msra.mxu0 0
        %685 = vmatprep.subr.bf16.mxu0 0
        %686 = vmatpush2.bf16.xpose.msra.mxu0 0
        %687 = vmatprep.mubr.bf16.mxu0 0
        %688 = vmatmul.mubr.bf16.gmra.mxu0 %v650
        %v689 = vpop.f32.mrf.mxu0
        %v690 = vadd.f32 %v641, %v689
        %v691 = vpop.f32.mrf.mxu0
        %v692 = vpop.f32.mrf.mxu0
        %v693 = vpop.f32.mrf.mxu0
        %694 = vdwg.mxu0
        %v695 = vmul.f32 %v690, 0.25
        %v696 = vsel %vm417, %v695, -1e+30
        %v697 = vsel %vm599, %v696, -inf
        %698 = vmax.xlane.f32.xlu0 %v697
        %v699 = vpop.xlane.xlu0 %698
        %v700 = vsub.f32 %v696, %v699
        %v701 = vmul.f32 %v700, 1.442695
        %v702 = vpow.pop %v701
        %v703 = vsel %vm599, %v702, 0.0
        %704 = vadd.xlane.f32.xlu0 %v703
        %v705 = vpop.xlane.xlu0 %704
        %v706 = vrcp.pop %v705
        %v707 = vmul.f32 %v702, %v706
        %v708 = vpack.c.bf16 %v707, %v707
        %710 = vrot.lane.b32.xlu0 %v542, 32
        %v711 = vpop.permute.xlu0 %710
        %v713 = vsel %vm599, %v708, 0
        %vm715 = vcmask 1043456
        %v717 = vsel %vm715, %v711, 0
        %719 = vmatprep.subr.bf16.mxu0 0
        %720 = vmatpush1.bf16.msra.mxu0 0
        %721 = vmatprep.subr.bf16.mxu0 0
        %722 = vmatpush1.bf16.msra.mxu0 0
        %723 = vmatprep.subr.bf16.mxu0 0
        %724 = vmatpush1.bf16.msra.mxu0 0
        %725 = vmatprep.subr.bf16.mxu0 0
        %726 = vmatpush1.bf16.msra.mxu0 0
        %727 = vmatprep.subr.bf16.mxu0 0
        %728 = vmatpush1.bf16.msra.mxu0 0
        %729 = vmatprep.subr.bf16.mxu0 0
        %730 = vmatpush1.bf16.msra.mxu0 0
        %731 = vmatprep.subr.bf16.mxu0 0
        %732 = vmatpush1.bf16.msra.mxu0 0
        %733 = vmatprep.subr.bf16.mxu0 0
        %734 = vmatpush1.bf16.msra.mxu0 %v717
        %735 = vmatprep.subr.bf16.mxu0 0
        %736 = vmatpush2.bf16.msra.mxu0 0
        %737 = vmatprep.subr.bf16.mxu0 0
        %738 = vmatpush2.bf16.msra.mxu0 0
        %739 = vmatprep.subr.bf16.mxu0 0
        %740 = vmatpush2.bf16.msra.mxu0 0
        %741 = vmatprep.subr.bf16.mxu0 0
        %742 = vmatpush2.bf16.msra.mxu0 0
        %743 = vmatprep.subr.bf16.mxu0 0
        %744 = vmatpush2.bf16.msra.mxu0 0
        %745 = vmatprep.subr.bf16.mxu0 0
        %746 = vmatpush2.bf16.msra.mxu0 0
        %747 = vmatprep.subr.bf16.mxu0 0
        %748 = vmatpush2.bf16.msra.mxu0 0
        %749 = vmatprep.subr.bf16.mxu0 0
        %750 = vmatpush2.bf16.msra.mxu0 0
        %751 = vmatprep.mubr.bf16.mxu0 0
        %752 = vmatmul.mubr.bf16.gmra.mxu0 %v713
        %v753 = vpop.f32.mrf.mxu0
        %v754 = vadd.f32 0.0, %v753
        %v755 = vpop.f32.mrf.mxu0
        %v756 = vpop.f32.mrf.mxu0
        %v757 = vpop.f32.mrf.mxu0
        %758 = vdwg.mxu0
        %v759 = vpack.c.bf16 %v754, %v754
        %v760 = vld [vmem:[%s5] sm:$0xf]
        %v761 = vld [vmem:[%s5 + $0x4] sm:$0xf]
        %762 = vrot.lane.b32.xlu0 %v411, 16
        %v763 = vpop.permute.xlu0 %762
        %v765 = vmul.f32 %v507, %v763
        %766 = vrot.lane.b32.xlu0 %v412, 24
        %v767 = vpop.permute.xlu0 %766
        %v769 = vmul.f32 %v507, %v767
        %771 = vrot.lane.b32.xlu0 %v769, 120
        %v772 = vpop.permute.xlu0 %771
        %v774 = vsub.f32 %v765, %v772
        %775 = vrot.lane.b32.xlu0 %v411, 24
        %v776 = vpop.permute.xlu0 %775
        %v778 = vmul.f32 %v507, %v776
        %779 = vrot.lane.b32.xlu0 %v412, 16
        %v780 = vpop.permute.xlu0 %779
        %v782 = vmul.f32 %v507, %v780
        %784 = vrot.lane.b32.xlu0 %v782, 8
        %v785 = vpop.permute.xlu0 %784
        %v787 = vadd.f32 %v778, %v785
        %v788 = vpack.c.bf16 %v774, %v774
        %v789 = vpack.c.bf16 %v787, %v787
        %791 = vrot.lane.b32.xlu0 %v789, 104
        %v792 = vpop.permute.xlu0 %791
        %v794 = vsel %vm599, %v792, 0
        %796 = vmatprep.subr.bf16.mxu0 0
        %797 = vmatpush1.bf16.xpose.msra.mxu0 0
        %798 = vmatprep.subr.bf16.mxu0 0
        %799 = vmatpush1.bf16.xpose.msra.mxu0 0
        %800 = vmatprep.subr.bf16.mxu0 0
        %801 = vmatpush1.bf16.xpose.msra.mxu0 0
        %802 = vmatprep.subr.bf16.mxu0 0
        %803 = vmatpush1.bf16.xpose.msra.mxu0 0
        %804 = vmatprep.subr.bf16.mxu0 0
        %805 = vmatpush1.bf16.xpose.msra.mxu0 0
        %806 = vmatprep.subr.bf16.mxu0 0
        %807 = vmatpush1.bf16.xpose.msra.mxu0 0
        %808 = vmatprep.subr.bf16.mxu0 0
        %809 = vmatpush1.bf16.xpose.msra.mxu0 0
        %810 = vmatprep.subr.bf16.mxu0 0
        %811 = vmatpush1.bf16.xpose.msra.mxu0 %v604
        %812 = vmatprep.subr.bf16.mxu0 0
        %813 = vmatpush2.bf16.xpose.msra.mxu0 0
        %814 = vmatprep.subr.bf16.mxu0 0
        %815 = vmatpush2.bf16.xpose.msra.mxu0 0
        %816 = vmatprep.subr.bf16.mxu0 0
        %817 = vmatpush2.bf16.xpose.msra.mxu0 0
        %818 = vmatprep.subr.bf16.mxu0 0
        %819 = vmatpush2.bf16.xpose.msra.mxu0 0
        %820 = vmatprep.subr.bf16.mxu0 0
        %821 = vmatpush2.bf16.xpose.msra.mxu0 0
        %822 = vmatprep.subr.bf16.mxu0 0
        %823 = vmatpush2.bf16.xpose.msra.mxu0 0
        %824 = vmatprep.subr.bf16.mxu0 0
        %825 = vmatpush2.bf16.xpose.msra.mxu0 0
        %826 = vmatprep.subr.bf16.mxu0 0
        %827 = vmatpush2.bf16.xpose.msra.mxu0 0
        %828 = vmatprep.mubr.bf16.mxu0 0
        %829 = vmatmul.mubr.bf16.gmra.mxu0 %v794
        %v830 = vpop.f32.mrf.mxu0
        %v831 = vadd.f32 0.0, %v830
        %v832 = vpop.f32.mrf.mxu0
        %v833 = vpop.f32.mrf.mxu0
        %v834 = vpop.f32.mrf.mxu0
        %835 = vdwg.mxu0
        %837 = vrot.lane.b32.xlu0 %v788, 112
        %v838 = vpop.permute.xlu0 %837
        %v840 = vsel %vm599, %v838, 0
        %842 = vmatprep.subr.bf16.mxu0 0
        %843 = vmatpush1.bf16.xpose.msra.mxu0 0
        %844 = vmatprep.subr.bf16.mxu0 0
        %845 = vmatpush1.bf16.xpose.msra.mxu0 0
        %846 = vmatprep.subr.bf16.mxu0 0
        %847 = vmatpush1.bf16.xpose.msra.mxu0 0
        %848 = vmatprep.subr.bf16.mxu0 0
        %849 = vmatpush1.bf16.xpose.msra.mxu0 0
        %850 = vmatprep.subr.bf16.mxu0 0
        %851 = vmatpush1.bf16.xpose.msra.mxu0 0
        %852 = vmatprep.subr.bf16.mxu0 0
        %853 = vmatpush1.bf16.xpose.msra.mxu0 0
        %854 = vmatprep.subr.bf16.mxu0 0
        %855 = vmatpush1.bf16.xpose.msra.mxu0 0
        %856 = vmatprep.subr.bf16.mxu0 0
        %857 = vmatpush1.bf16.xpose.msra.mxu0 %v653
        %858 = vmatprep.subr.bf16.mxu0 0
        %859 = vmatpush2.bf16.xpose.msra.mxu0 0
        %860 = vmatprep.subr.bf16.mxu0 0
        %861 = vmatpush2.bf16.xpose.msra.mxu0 0
        %862 = vmatprep.subr.bf16.mxu0 0
        %863 = vmatpush2.bf16.xpose.msra.mxu0 0
        %864 = vmatprep.subr.bf16.mxu0 0
        %865 = vmatpush2.bf16.xpose.msra.mxu0 0
        %866 = vmatprep.subr.bf16.mxu0 0
        %867 = vmatpush2.bf16.xpose.msra.mxu0 0
        %868 = vmatprep.subr.bf16.mxu0 0
        %869 = vmatpush2.bf16.xpose.msra.mxu0 0
        %870 = vmatprep.subr.bf16.mxu0 0
        %871 = vmatpush2.bf16.xpose.msra.mxu0 0
        %872 = vmatprep.subr.bf16.mxu0 0
        %873 = vmatpush2.bf16.xpose.msra.mxu0 0
        %874 = vmatprep.mubr.bf16.mxu0 0
        %875 = vmatmul.mubr.bf16.gmra.mxu0 %v840
        %v876 = vpop.f32.mrf.mxu0
        %v877 = vadd.f32 %v831, %v876
        %v878 = vpop.f32.mrf.mxu0
        %v879 = vpop.f32.mrf.mxu0
        %v880 = vpop.f32.mrf.mxu0
        %881 = vdwg.mxu0
        %v882 = vmul.f32 %v877, 0.25
        %v883 = vsel %vm417, %v882, -1e+30
        %v884 = vsel %vm599, %v883, -inf
        %885 = vmax.xlane.f32.xlu0 %v884
        %v886 = vpop.xlane.xlu0 %885
        %v887 = vsub.f32 %v883, %v886
        %v888 = vmul.f32 %v887, 1.442695
        %v889 = vpow.pop %v888
        %v890 = vsel %vm599, %v889, 0.0
        %891 = vadd.xlane.f32.xlu0 %v890
        %v892 = vpop.xlane.xlu0 %891
        %v893 = vrcp.pop %v892
        %v894 = vmul.f32 %v889, %v893
        %v895 = vpack.c.bf16 %v894, %v894
        %v897 = vsel %vm599, %v895, 0
        %899 = vmatprep.subr.bf16.mxu0 0
        %900 = vmatpush1.bf16.msra.mxu0 0
        %901 = vmatprep.subr.bf16.mxu0 0
        %902 = vmatpush1.bf16.msra.mxu0 0
        %903 = vmatprep.subr.bf16.mxu0 0
        %904 = vmatpush1.bf16.msra.mxu0 0
        %905 = vmatprep.subr.bf16.mxu0 0
        %906 = vmatpush1.bf16.msra.mxu0 0
        %907 = vmatprep.subr.bf16.mxu0 0
        %908 = vmatpush1.bf16.msra.mxu0 0
        %909 = vmatprep.subr.bf16.mxu0 0
        %910 = vmatpush1.bf16.msra.mxu0 0
        %911 = vmatprep.subr.bf16.mxu0 0
        %912 = vmatpush1.bf16.msra.mxu0 0
        %913 = vmatprep.subr.bf16.mxu0 0
        %914 = vmatpush1.bf16.msra.mxu0 %v717
        %915 = vmatprep.subr.bf16.mxu0 0
        %916 = vmatpush2.bf16.msra.mxu0 0
        %917 = vmatprep.subr.bf16.mxu0 0
        %918 = vmatpush2.bf16.msra.mxu0 0
        %919 = vmatprep.subr.bf16.mxu0 0
        %920 = vmatpush2.bf16.msra.mxu0 0
        %921 = vmatprep.subr.bf16.mxu0 0
        %922 = vmatpush2.bf16.msra.mxu0 0
        %923 = vmatprep.subr.bf16.mxu0 0
        %924 = vmatpush2.bf16.msra.mxu0 0
        %925 = vmatprep.subr.bf16.mxu0 0
        %926 = vmatpush2.bf16.msra.mxu0 0
        %927 = vmatprep.subr.bf16.mxu0 0
        %928 = vmatpush2.bf16.msra.mxu0 0
        %929 = vmatprep.subr.bf16.mxu0 0
        %930 = vmatpush2.bf16.msra.mxu0 0
        %931 = vmatprep.mubr.bf16.mxu0 0
        %932 = vmatmul.mubr.bf16.gmra.mxu0 %v897
        %v933 = vpop.f32.mrf.mxu0
        %v934 = vadd.f32 0.0, %v933
        %v935 = vpop.f32.mrf.mxu0
        %v936 = vpop.f32.mrf.mxu0
        %v937 = vpop.f32.mrf.mxu0
        %938 = vdwg.mxu0
        %v939 = vpack.c.bf16 %v934, %v934
        %v940 = vld [vmem:[%s5 + $0x8] sm:$0xf]
        %v941 = vld [vmem:[%s5 + $0xc] sm:$0xf]
        %v944 = vunpack.c.l.b16 %v940
        %v945 = vunpack.c.l.b16 %v941
        %v946 = vpack.c.b16 %v945, %v944
        %vm948 = vcmask 130048
        %v950 = vsel %vm948, %v939, 0
        %952 = vmatprep.subr.bf16.mxu0 0
        %953 = vmatpush1.bf16.msra.mxu0 0
        %954 = vmatprep.subr.bf16.mxu0 0
        %955 = vmatpush1.bf16.msra.mxu0 0
        %956 = vmatprep.subr.bf16.mxu0 0
        %957 = vmatpush1.bf16.msra.mxu0 0
        %958 = vmatprep.subr.bf16.mxu0 0
        %959 = vmatpush1.bf16.msra.mxu0 0
        %960 = vmatprep.subr.bf16.mxu0 0
        %961 = vmatpush1.bf16.msra.mxu0 0
        %962 = vmatprep.subr.bf16.mxu0 0
        %963 = vmatpush1.bf16.msra.mxu0 0
        %964 = vmatprep.subr.bf16.mxu0 0
        %965 = vmatpush1.bf16.msra.mxu0 0
        %966 = vmatprep.subr.bf16.mxu0 0
        %967 = vmatpush1.bf16.msra.mxu0 %v946
        %968 = vmatprep.subr.bf16.mxu0 0
        %969 = vmatpush2.bf16.msra.mxu0 0
        %970 = vmatprep.subr.bf16.mxu0 0
        %971 = vmatpush2.bf16.msra.mxu0 0
        %972 = vmatprep.subr.bf16.mxu0 0
        %973 = vmatpush2.bf16.msra.mxu0 0
        %974 = vmatprep.subr.bf16.mxu0 0
        %975 = vmatpush2.bf16.msra.mxu0 0
        %976 = vmatprep.subr.bf16.mxu0 0
        %977 = vmatpush2.bf16.msra.mxu0 0
        %978 = vmatprep.subr.bf16.mxu0 0
        %979 = vmatpush2.bf16.msra.mxu0 0
        %980 = vmatprep.subr.bf16.mxu0 0
        %981 = vmatpush2.bf16.msra.mxu0 0
        %982 = vmatprep.subr.bf16.mxu0 0
        %983 = vmatpush2.bf16.msra.mxu0 0
        %984 = vmatprep.mubr.bf16.mxu0 0
        %985 = vmatmul.mubr.bf16.gmra.mxu0 %v950
        %v986 = vpop.f32.mrf.mxu0
        %v987 = vadd.f32 0.0, %v986
        %v988 = vpop.f32.mrf.mxu0
        %v989 = vpop.f32.mrf.mxu0
        %v990 = vpop.f32.mrf.mxu0
        %991 = vdwg.mxu0
        %v994 = vunpack.c.l.b16 %v760
        %v995 = vunpack.c.l.b16 %v761
        %v996 = vpack.c.b16 %v995, %v994
        %v999 = vsel %vm948, %v759, 0
        %1001 = vmatprep.subr.bf16.mxu0 0
        %1002 = vmatpush1.bf16.msra.mxu0 0
        %1003 = vmatprep.subr.bf16.mxu0 0
        %1004 = vmatpush1.bf16.msra.mxu0 0
        %1005 = vmatprep.subr.bf16.mxu0 0
        %1006 = vmatpush1.bf16.msra.mxu0 0
        %1007 = vmatprep.subr.bf16.mxu0 0
        %1008 = vmatpush1.bf16.msra.mxu0 0
        %1009 = vmatprep.subr.bf16.mxu0 0
        %1010 = vmatpush1.bf16.msra.mxu0 0
        %1011 = vmatprep.subr.bf16.mxu0 0
        %1012 = vmatpush1.bf16.msra.mxu0 0
        %1013 = vmatprep.subr.bf16.mxu0 0
        %1014 = vmatpush1.bf16.msra.mxu0 0
        %1015 = vmatprep.subr.bf16.mxu0 0
        %1016 = vmatpush1.bf16.msra.mxu0 %v996
        %1017 = vmatprep.subr.bf16.mxu0 0
        %1018 = vmatpush2.bf16.msra.mxu0 0
        %1019 = vmatprep.subr.bf16.mxu0 0
        %1020 = vmatpush2.bf16.msra.mxu0 0
        %1021 = vmatprep.subr.bf16.mxu0 0
        %1022 = vmatpush2.bf16.msra.mxu0 0
        %1023 = vmatprep.subr.bf16.mxu0 0
        %1024 = vmatpush2.bf16.msra.mxu0 0
        %1025 = vmatprep.subr.bf16.mxu0 0
        %1026 = vmatpush2.bf16.msra.mxu0 0
        %1027 = vmatprep.subr.bf16.mxu0 0
        %1028 = vmatpush2.bf16.msra.mxu0 0
        %1029 = vmatprep.subr.bf16.mxu0 0
        %1030 = vmatpush2.bf16.msra.mxu0 0
        %1031 = vmatprep.subr.bf16.mxu0 0
        %1032 = vmatpush2.bf16.msra.mxu0 0
        %1033 = vmatprep.mubr.bf16.mxu0 0
        %1034 = vmatmul.mubr.bf16.gmra.mxu0 %v999
        %v1035 = vpop.f32.mrf.mxu0
        %v1036 = vadd.f32 %v987, %v1035
        %v1037 = vpop.f32.mrf.mxu0
        %v1038 = vpop.f32.mrf.mxu0
        %v1039 = vpop.f32.mrf.mxu0
        %1040 = vdwg.mxu0
        %1041 = vrot.lane.b32.xlu0 %v411, 32
        %v1042 = vpop.permute.xlu0 %1041
        %v1044 = vmul.f32 %v507, %v1042
        %1045 = vrot.lane.b32.xlu0 %v412, 40
        %v1046 = vpop.permute.xlu0 %1045
        %v1048 = vmul.f32 %v507, %v1046
        %1050 = vrot.lane.b32.xlu0 %v1048, 120
        %v1051 = vpop.permute.xlu0 %1050
        %v1053 = vsub.f32 %v1044, %v1051
        %1054 = vrot.lane.b32.xlu0 %v411, 40
        %v1055 = vpop.permute.xlu0 %1054
        %v1057 = vmul.f32 %v507, %v1055
        %1058 = vrot.lane.b32.xlu0 %v412, 32
        %v1059 = vpop.permute.xlu0 %1058
        %v1061 = vmul.f32 %v507, %v1059
        %1063 = vrot.lane.b32.xlu0 %v1061, 8
        %v1064 = vpop.permute.xlu0 %1063
        %v1066 = vadd.f32 %v1057, %v1064
        %v1067 = vpack.c.bf16 %v1053, %v1053
        %v1068 = vpack.c.bf16 %v1066, %v1066
        %1070 = vrot.lane.b32.xlu0 %v1068, 88
        %v1071 = vpop.permute.xlu0 %1070
        %1073 = vrot.lane.b32.xlu0 %v570, 40
        %v1074 = vpop.permute.xlu0 %1073
        %v1076 = vsel %vm599, %v1071, 0
        %v1079 = vsel %vm599, %v1074, 0
        %1081 = vmatprep.subr.bf16.mxu0 0
        %1082 = vmatpush1.bf16.xpose.msra.mxu0 0
        %1083 = vmatprep.subr.bf16.mxu0 0
        %1084 = vmatpush1.bf16.xpose.msra.mxu0 0
        %1085 = vmatprep.subr.bf16.mxu0 0
        %1086 = vmatpush1.bf16.xpose.msra.mxu0 0
        %1087 = vmatprep.subr.bf16.mxu0 0
        %1088 = vmatpush1.bf16.xpose.msra.mxu0 0
        %1089 = vmatprep.subr.bf16.mxu0 0
        %1090 = vmatpush1.bf16.xpose.msra.mxu0 0
        %1091 = vmatprep.subr.bf16.mxu0 0
        %1092 = vmatpush1.bf16.xpose.msra.mxu0 0
        %1093 = vmatprep.subr.bf16.mxu0 0
        %1094 = vmatpush1.bf16.xpose.msra.mxu0 0
        %1095 = vmatprep.subr.bf16.mxu0 0
        %1096 = vmatpush1.bf16.xpose.msra.mxu0 %v1079
        %1097 = vmatprep.subr.bf16.mxu0 0
        %1098 = vmatpush2.bf16.xpose.msra.mxu0 0
        %1099 = vmatprep.subr.bf16.mxu0 0
        %1100 = vmatpush2.bf16.xpose.msra.mxu0 0
        %1101 = vmatprep.subr.bf16.mxu0 0
        %1102 = vmatpush2.bf16.xpose.msra.mxu0 0
        %1103 = vmatprep.subr.bf16.mxu0 0
        %1104 = vmatpush2.bf16.xpose.msra.mxu0 0
        %1105 = vmatprep.subr.bf16.mxu0 0
        %1106 = vmatpush2.bf16.xpose.msra.mxu0 0
        %1107 = vmatprep.subr.bf16.mxu0 0
        %1108 = vmatpush2.bf16.xpose.msra.mxu0 0
        %1109 = vmatprep.subr.bf16.mxu0 0
        %1110 = vmatpush2.bf16.xpose.msra.mxu0 0
        %1111 = vmatprep.subr.bf16.mxu0 0
        %1112 = vmatpush2.bf16.xpose.msra.mxu0 0
        %1113 = vmatprep.mubr.bf16.mxu0 0
        %1114 = vmatmul.mubr.bf16.gmra.mxu0 %v1076
        %v1115 = vpop.f32.mrf.mxu0
        %v1116 = vadd.f32 0.0, %v1115
        %v1117 = vpop.f32.mrf.mxu0
        %v1118 = vpop.f32.mrf.mxu0
        %v1119 = vpop.f32.mrf.mxu0
        %1120 = vdwg.mxu0
        %1122 = vrot.lane.b32.xlu0 %v1067, 96
        %v1123 = vpop.permute.xlu0 %1122
        %1125 = vrot.lane.b32.xlu0 %v569, 48
        %v1126 = vpop.permute.xlu0 %1125
        %v1128 = vsel %vm599, %v1123, 0
        %v1131 = vsel %vm599, %v1126, 0
        %1133 = vmatprep.subr.bf16.mxu0 0
        %1134 = vmatpush1.bf16.xpose.msra.mxu0 0
        %1135 = vmatprep.subr.bf16.mxu0 0
        %1136 = vmatpush1.bf16.xpose.msra.mxu0 0
        %1137 = vmatprep.subr.bf16.mxu0 0
        %1138 = vmatpush1.bf16.xpose.msra.mxu0 0
        %1139 = vmatprep.subr.bf16.mxu0 0
        %1140 = vmatpush1.bf16.xpose.msra.mxu0 0
        %1141 = vmatprep.subr.bf16.mxu0 0
        %1142 = vmatpush1.bf16.xpose.msra.mxu0 0
        %1143 = vmatprep.subr.bf16.mxu0 0
        %1144 = vmatpush1.bf16.xpose.msra.mxu0 0
        %1145 = vmatprep.subr.bf16.mxu0 0
        %1146 = vmatpush1.bf16.xpose.msra.mxu0 0
        %1147 = vmatprep.subr.bf16.mxu0 0
        %1148 = vmatpush1.bf16.xpose.msra.mxu0 %v1131
        %1149 = vmatprep.subr.bf16.mxu0 0
        %1150 = vmatpush2.bf16.xpose.msra.mxu0 0
        %1151 = vmatprep.subr.bf16.mxu0 0
        %1152 = vmatpush2.bf16.xpose.msra.mxu0 0
        %1153 = vmatprep.subr.bf16.mxu0 0
        %1154 = vmatpush2.bf16.xpose.msra.mxu0 0
        %1155 = vmatprep.subr.bf16.mxu0 0
        %1156 = vmatpush2.bf16.xpose.msra.mxu0 0
        %1157 = vmatprep.subr.bf16.mxu0 0
        %1158 = vmatpush2.bf16.xpose.msra.mxu0 0
        %1159 = vmatprep.subr.bf16.mxu0 0
        %1160 = vmatpush2.bf16.xpose.msra.mxu0 0
        %1161 = vmatprep.subr.bf16.mxu0 0
        %1162 = vmatpush2.bf16.xpose.msra.mxu0 0
        %1163 = vmatprep.subr.bf16.mxu0 0
        %1164 = vmatpush2.bf16.xpose.msra.mxu0 0
        %1165 = vmatprep.mubr.bf16.mxu0 0
        %1166 = vmatmul.mubr.bf16.gmra.mxu0 %v1128
        %v1167 = vpop.f32.mrf.mxu0
        %v1168 = vadd.f32 %v1116, %v1167
        %v1169 = vpop.f32.mrf.mxu0
        %v1170 = vpop.f32.mrf.mxu0
        %v1171 = vpop.f32.mrf.mxu0
        %1172 = vdwg.mxu0
        %v1173 = vmul.f32 %v1168, 0.25
        %v1174 = vsel %vm417, %v1173, -1e+30
        %v1175 = vsel %vm599, %v1174, -inf
        %1176 = vmax.xlane.f32.xlu0 %v1175
        %v1177 = vpop.xlane.xlu0 %1176
        %v1178 = vsub.f32 %v1174, %v1177
        %v1179 = vmul.f32 %v1178, 1.442695
        %v1180 = vpow.pop %v1179
        %v1181 = vsel %vm599, %v1180, 0.0
        %1182 = vadd.xlane.f32.xlu0 %v1181
        %v1183 = vpop.xlane.xlu0 %1182
        %v1184 = vrcp.pop %v1183
        %v1185 = vmul.f32 %v1180, %v1184
        %v1186 = vpack.c.bf16 %v1185, %v1185
        %1187 = vrot.lane.b32.xlu0 %v542, 16
        %v1188 = vpop.permute.xlu0 %1187
        %v1190 = vsel %vm599, %v1186, 0
        %v1193 = vsel %vm715, %v1188, 0
        %1195 = vmatprep.subr.bf16.mxu0 0
        %1196 = vmatpush1.bf16.msra.mxu0 0
        %1197 = vmatprep.subr.bf16.mxu0 0
        %1198 = vmatpush1.bf16.msra.mxu0 0
        %1199 = vmatprep.subr.bf16.mxu0 0
        %1200 = vmatpush1.bf16.msra.mxu0 0
        %1201 = vmatprep.subr.bf16.mxu0 0
        %1202 = vmatpush1.bf16.msra.mxu0 0
        %1203 = vmatprep.subr.bf16.mxu0 0
        %1204 = vmatpush1.bf16.msra.mxu0 0
        %1205 = vmatprep.subr.bf16.mxu0 0
        %1206 = vmatpush1.bf16.msra.mxu0 0
        %1207 = vmatprep.subr.bf16.mxu0 0
        %1208 = vmatpush1.bf16.msra.mxu0 0
        %1209 = vmatprep.subr.bf16.mxu0 0
        %1210 = vmatpush1.bf16.msra.mxu0 %v1193
        %1211 = vmatprep.subr.bf16.mxu0 0
        %1212 = vmatpush2.bf16.msra.mxu0 0
        %1213 = vmatprep.subr.bf16.mxu0 0
        %1214 = vmatpush2.bf16.msra.mxu0 0
        %1215 = vmatprep.subr.bf16.mxu0 0
        %1216 = vmatpush2.bf16.msra.mxu0 0
        %1217 = vmatprep.subr.bf16.mxu0 0
        %1218 = vmatpush2.bf16.msra.mxu0 0
        %1219 = vmatprep.subr.bf16.mxu0 0
        %1220 = vmatpush2.bf16.msra.mxu0 0
        %1221 = vmatprep.subr.bf16.mxu0 0
        %1222 = vmatpush2.bf16.msra.mxu0 0
        %1223 = vmatprep.subr.bf16.mxu0 0
        %1224 = vmatpush2.bf16.msra.mxu0 0
        %1225 = vmatprep.subr.bf16.mxu0 0
        %1226 = vmatpush2.bf16.msra.mxu0 0
        %1227 = vmatprep.mubr.bf16.mxu0 0
        %1228 = vmatmul.mubr.bf16.gmra.mxu0 %v1190
        %v1229 = vpop.f32.mrf.mxu0
        %v1230 = vadd.f32 0.0, %v1229
        %v1231 = vpop.f32.mrf.mxu0
        %v1232 = vpop.f32.mrf.mxu0
        %v1233 = vpop.f32.mrf.mxu0
        %1234 = vdwg.mxu0
        %v1235 = vpack.c.bf16 %v1230, %v1230
        %v1236 = vld [vmem:[%s5 + $0x10] sm:$0xf]
        %v1237 = vld [vmem:[%s5 + $0x14] sm:$0xf]
        %v1240 = vunpack.c.l.b16 %v1236
        %v1241 = vunpack.c.l.b16 %v1237
        %v1242 = vpack.c.b16 %v1241, %v1240
        %v1245 = vsel %vm948, %v1235, 0
        %1247 = vmatprep.subr.bf16.mxu0 0
        %1248 = vmatpush1.bf16.msra.mxu0 0
        %1249 = vmatprep.subr.bf16.mxu0 0
        %1250 = vmatpush1.bf16.msra.mxu0 0
        %1251 = vmatprep.subr.bf16.mxu0 0
        %1252 = vmatpush1.bf16.msra.mxu0 0
        %1253 = vmatprep.subr.bf16.mxu0 0
        %1254 = vmatpush1.bf16.msra.mxu0 0
        %1255 = vmatprep.subr.bf16.mxu0 0
        %1256 = vmatpush1.bf16.msra.mxu0 0
        %1257 = vmatprep.subr.bf16.mxu0 0
        %1258 = vmatpush1.bf16.msra.mxu0 0
        %1259 = vmatprep.subr.bf16.mxu0 0
        %1260 = vmatpush1.bf16.msra.mxu0 0
        %1261 = vmatprep.subr.bf16.mxu0 0
        %1262 = vmatpush1.bf16.msra.mxu0 %v1242
        %1263 = vmatprep.subr.bf16.mxu0 0
        %1264 = vmatpush2.bf16.msra.mxu0 0
        %1265 = vmatprep.subr.bf16.mxu0 0
        %1266 = vmatpush2.bf16.msra.mxu0 0
        %1267 = vmatprep.subr.bf16.mxu0 0
        %1268 = vmatpush2.bf16.msra.mxu0 0
        %1269 = vmatprep.subr.bf16.mxu0 0
        %1270 = vmatpush2.bf16.msra.mxu0 0
        %1271 = vmatprep.subr.bf16.mxu0 0
        %1272 = vmatpush2.bf16.msra.mxu0 0
        %1273 = vmatprep.subr.bf16.mxu0 0
        %1274 = vmatpush2.bf16.msra.mxu0 0
        %1275 = vmatprep.subr.bf16.mxu0 0
        %1276 = vmatpush2.bf16.msra.mxu0 0
        %1277 = vmatprep.subr.bf16.mxu0 0
        %1278 = vmatpush2.bf16.msra.mxu0 0
        %1279 = vmatprep.mubr.bf16.mxu0 0
        %1280 = vmatmul.mubr.bf16.gmra.mxu0 %v1245
        %v1281 = vpop.f32.mrf.mxu0
        %v1282 = vadd.f32 0.0, %v1281
        %v1283 = vpop.f32.mrf.mxu0
        %v1284 = vpop.f32.mrf.mxu0
        %v1285 = vpop.f32.mrf.mxu0
        %1286 = vdwg.mxu0
        %v1287 = vadd.f32 %v1036, %v1282
        %1288 = vrot.lane.b32.xlu0 %v411, 48
        %v1289 = vpop.permute.xlu0 %1288
        %v1291 = vmul.f32 %v507, %v1289
        %1292 = vrot.lane.b32.xlu0 %v412, 56
        %v1293 = vpop.permute.xlu0 %1292
        %v1295 = vmul.f32 %v507, %v1293
        %1297 = vrot.lane.b32.xlu0 %v1295, 120
        %v1298 = vpop.permute.xlu0 %1297
        %v1300 = vsub.f32 %v1291, %v1298
        %1301 = vrot.lane.b32.xlu0 %v411, 56
        %v1302 = vpop.permute.xlu0 %1301
        %v1304 = vmul.f32 %v507, %v1302
        %1305 = vrot.lane.b32.xlu0 %v412, 48
        %v1306 = vpop.permute.xlu0 %1305
        %v1308 = vmul.f32 %v507, %v1306
        %1310 = vrot.lane.b32.xlu0 %v1308, 8
        %v1311 = vpop.permute.xlu0 %1310
        %v1313 = vadd.f32 %v1304, %v1311
        %v1314 = vpack.c.bf16 %v1300, %v1300
        %v1315 = vpack.c.bf16 %v1313, %v1313
        %1317 = vrot.lane.b32.xlu0 %v1315, 72
        %v1318 = vpop.permute.xlu0 %1317
        %v1320 = vsel %vm599, %v1318, 0
        %1322 = vmatprep.subr.bf16.mxu0 0
        %1323 = vmatpush1.bf16.xpose.msra.mxu0 0
        %1324 = vmatprep.subr.bf16.mxu0 0
        %1325 = vmatpush1.bf16.xpose.msra.mxu0 0
        %1326 = vmatprep.subr.bf16.mxu0 0
        %1327 = vmatpush1.bf16.xpose.msra.mxu0 0
        %1328 = vmatprep.subr.bf16.mxu0 0
        %1329 = vmatpush1.bf16.xpose.msra.mxu0 0
        %1330 = vmatprep.subr.bf16.mxu0 0
        %1331 = vmatpush1.bf16.xpose.msra.mxu0 0
        %1332 = vmatprep.subr.bf16.mxu0 0
        %1333 = vmatpush1.bf16.xpose.msra.mxu0 0
        %1334 = vmatprep.subr.bf16.mxu0 0
        %1335 = vmatpush1.bf16.xpose.msra.mxu0 0
        %1336 = vmatprep.subr.bf16.mxu0 0
        %1337 = vmatpush1.bf16.xpose.msra.mxu0 %v1079
        %1338 = vmatprep.subr.bf16.mxu0 0
        %1339 = vmatpush2.bf16.xpose.msra.mxu0 0
        %1340 = vmatprep.subr.bf16.mxu0 0
        %1341 = vmatpush2.bf16.xpose.msra.mxu0 0
        %1342 = vmatprep.subr.bf16.mxu0 0
        %1343 = vmatpush2.bf16.xpose.msra.mxu0 0
        %1344 = vmatprep.subr.bf16.mxu0 0
        %1345 = vmatpush2.bf16.xpose.msra.mxu0 0
        %1346 = vmatprep.subr.bf16.mxu0 0
        %1347 = vmatpush2.bf16.xpose.msra.mxu0 0
        %1348 = vmatprep.subr.bf16.mxu0 0
        %1349 = vmatpush2.bf16.xpose.msra.mxu0 0
        %1350 = vmatprep.subr.bf16.mxu0 0
        %1351 = vmatpush2.bf16.xpose.msra.mxu0 0
        %1352 = vmatprep.subr.bf16.mxu0 0
        %1353 = vmatpush2.bf16.xpose.msra.mxu0 0
        %1354 = vmatprep.mubr.bf16.mxu0 0
        %1355 = vmatmul.mubr.bf16.gmra.mxu0 %v1320
        %v1356 = vpop.f32.mrf.mxu0
        %v1357 = vadd.f32 0.0, %v1356
        %v1358 = vpop.f32.mrf.mxu0
        %v1359 = vpop.f32.mrf.mxu0
        %v1360 = vpop.f32.mrf.mxu0
        %1361 = vdwg.mxu0
        %1363 = vrot.lane.b32.xlu0 %v1314, 80
        %v1364 = vpop.permute.xlu0 %1363
        %v1366 = vsel %vm599, %v1364, 0
        %1368 = vmatprep.subr.bf16.mxu0 0
        %1369 = vmatpush1.bf16.xpose.msra.mxu0 0
        %1370 = vmatprep.subr.bf16.mxu0 0
        %1371 = vmatpush1.bf16.xpose.msra.mxu0 0
        %1372 = vmatprep.subr.bf16.mxu0 0
        %1373 = vmatpush1.bf16.xpose.msra.mxu0 0
        %1374 = vmatprep.subr.bf16.mxu0 0
        %1375 = vmatpush1.bf16.xpose.msra.mxu0 0
        %1376 = vmatprep.subr.bf16.mxu0 0
        %1377 = vmatpush1.bf16.xpose.msra.mxu0 0
        %1378 = vmatprep.subr.bf16.mxu0 0
        %1379 = vmatpush1.bf16.xpose.msra.mxu0 0
        %1380 = vmatprep.subr.bf16.mxu0 0
        %1381 = vmatpush1.bf16.xpose.msra.mxu0 0
        %1382 = vmatprep.subr.bf16.mxu0 0
        %1383 = vmatpush1.bf16.xpose.msra.mxu0 %v1131
        %1384 = vmatprep.subr.bf16.mxu0 0
        %1385 = vmatpush2.bf16.xpose.msra.mxu0 0
        %1386 = vmatprep.subr.bf16.mxu0 0
        %1387 = vmatpush2.bf16.xpose.msra.mxu0 0
        %1388 = vmatprep.subr.bf16.mxu0 0
        %1389 = vmatpush2.bf16.xpose.msra.mxu0 0
        %1390 = vmatprep.subr.bf16.mxu0 0
        %1391 = vmatpush2.bf16.xpose.msra.mxu0 0
        %1392 = vmatprep.subr.bf16.mxu0 0
        %1393 = vmatpush2.bf16.xpose.msra.mxu0 0
        %1394 = vmatprep.subr.bf16.mxu0 0
        %1395 = vmatpush2.bf16.xpose.msra.mxu0 0
        %1396 = vmatprep.subr.bf16.mxu0 0
        %1397 = vmatpush2.bf16.xpose.msra.mxu0 0
        %1398 = vmatprep.subr.bf16.mxu0 0
        %1399 = vmatpush2.bf16.xpose.msra.mxu0 0
        %1400 = vmatprep.mubr.bf16.mxu0 0
        %1401 = vmatmul.mubr.bf16.gmra.mxu0 %v1366
        %v1402 = vpop.f32.mrf.mxu0
        %v1403 = vadd.f32 %v1357, %v1402
        %v1404 = vpop.f32.mrf.mxu0
        %v1405 = vpop.f32.mrf.mxu0
        %v1406 = vpop.f32.mrf.mxu0
        %1407 = vdwg.mxu0
        %v1408 = vmul.f32 %v1403, 0.25
        %v1409 = vsel %vm417, %v1408, -1e+30
        %v1410 = vsel %vm599, %v1409, -inf
        %1411 = vmax.xlane.f32.xlu0 %v1410
        %v1412 = vpop.xlane.xlu0 %1411
        %v1413 = vsub.f32 %v1409, %v1412
        %v1414 = vmul.f32 %v1413, 1.442695
        %v1415 = vpow.pop %v1414
        %v1416 = vsel %vm599, %v1415, 0.0
        %1417 = vadd.xlane.f32.xlu0 %v1416
        %v1418 = vpop.xlane.xlu0 %1417
        %v1419 = vrcp.pop %v1418
        %v1420 = vmul.f32 %v1415, %v1419
        %v1421 = vpack.c.bf16 %v1420, %v1420
        %v1423 = vsel %vm599, %v1421, 0
        %1425 = vmatprep.subr.bf16.mxu0 0
        %1426 = vmatpush1.bf16.msra.mxu0 0
        %1427 = vmatprep.subr.bf16.mxu0 0
        %1428 = vmatpush1.bf16.msra.mxu0 0
        %1429 = vmatprep.subr.bf16.mxu0 0
        %1430 = vmatpush1.bf16.msra.mxu0 0
        %1431 = vmatprep.subr.bf16.mxu0 0
        %1432 = vmatpush1.bf16.msra.mxu0 0
        %1433 = vmatprep.subr.bf16.mxu0 0
        %1434 = vmatpush1.bf16.msra.mxu0 0
        %1435 = vmatprep.subr.bf16.mxu0 0
        %1436 = vmatpush1.bf16.msra.mxu0 0
        %1437 = vmatprep.subr.bf16.mxu0 0
        %1438 = vmatpush1.bf16.msra.mxu0 0
        %1439 = vmatprep.subr.bf16.mxu0 0
        %1440 = vmatpush1.bf16.msra.mxu0 %v1193
        %1441 = vmatprep.subr.bf16.mxu0 0
        %1442 = vmatpush2.bf16.msra.mxu0 0
        %1443 = vmatprep.subr.bf16.mxu0 0
        %1444 = vmatpush2.bf16.msra.mxu0 0
        %1445 = vmatprep.subr.bf16.mxu0 0
        %1446 = vmatpush2.bf16.msra.mxu0 0
        %1447 = vmatprep.subr.bf16.mxu0 0
        %1448 = vmatpush2.bf16.msra.mxu0 0
        %1449 = vmatprep.subr.bf16.mxu0 0
        %1450 = vmatpush2.bf16.msra.mxu0 0
        %1451 = vmatprep.subr.bf16.mxu0 0
        %1452 = vmatpush2.bf16.msra.mxu0 0
        %1453 = vmatprep.subr.bf16.mxu0 0
        %1454 = vmatpush2.bf16.msra.mxu0 0
        %1455 = vmatprep.subr.bf16.mxu0 0
        %1456 = vmatpush2.bf16.msra.mxu0 0
        %1457 = vmatprep.mubr.bf16.mxu0 0
        %1458 = vmatmul.mubr.bf16.gmra.mxu0 %v1423
        %v1459 = vpop.f32.mrf.mxu0
        %v1460 = vadd.f32 0.0, %v1459
        %v1461 = vpop.f32.mrf.mxu0
        %v1462 = vpop.f32.mrf.mxu0
        %v1463 = vpop.f32.mrf.mxu0
        %1464 = vdwg.mxu0
        %v1465 = vpack.c.bf16 %v1460, %v1460
        %v1466 = vld [vmem:[%s5 + $0x18] sm:$0xf]
        %v1467 = vld [vmem:[%s5 + $0x1c] sm:$0xf]
        %v1470 = vunpack.c.l.b16 %v1466
        %v1471 = vunpack.c.l.b16 %v1467
        %v1472 = vpack.c.b16 %v1471, %v1470
        %v1475 = vsel %vm948, %v1465, 0
        %1477 = vmatprep.subr.bf16.mxu0 0
        %1478 = vmatpush1.bf16.msra.mxu0 0
        %1479 = vmatprep.subr.bf16.mxu0 0
        %1480 = vmatpush1.bf16.msra.mxu0 0
        %1481 = vmatprep.subr.bf16.mxu0 0
        %1482 = vmatpush1.bf16.msra.mxu0 0
        %1483 = vmatprep.subr.bf16.mxu0 0
        %1484 = vmatpush1.bf16.msra.mxu0 0
        %1485 = vmatprep.subr.bf16.mxu0 0
        %1486 = vmatpush1.bf16.msra.mxu0 0
        %1487 = vmatprep.subr.bf16.mxu0 0
        %1488 = vmatpush1.bf16.msra.mxu0 0
        %1489 = vmatprep.subr.bf16.mxu0 0
        %1490 = vmatpush1.bf16.msra.mxu0 0
        %1491 = vmatprep.subr.bf16.mxu0 0
        %1492 = vmatpush1.bf16.msra.mxu0 %v1472
        %1493 = vmatprep.subr.bf16.mxu0 0
        %1494 = vmatpush2.bf16.msra.mxu0 0
        %1495 = vmatprep.subr.bf16.mxu0 0
        %1496 = vmatpush2.bf16.msra.mxu0 0
        %1497 = vmatprep.subr.bf16.mxu0 0
        %1498 = vmatpush2.bf16.msra.mxu0 0
        %1499 = vmatprep.subr.bf16.mxu0 0
        %1500 = vmatpush2.bf16.msra.mxu0 0
        %1501 = vmatprep.subr.bf16.mxu0 0
        %1502 = vmatpush2.bf16.msra.mxu0 0
        %1503 = vmatprep.subr.bf16.mxu0 0
        %1504 = vmatpush2.bf16.msra.mxu0 0
        %1505 = vmatprep.subr.bf16.mxu0 0
        %1506 = vmatpush2.bf16.msra.mxu0 0
        %1507 = vmatprep.subr.bf16.mxu0 0
        %1508 = vmatpush2.bf16.msra.mxu0 0
        %1509 = vmatprep.mubr.bf16.mxu0 0
        %1510 = vmatmul.mubr.bf16.gmra.mxu0 %v1475
        %v1511 = vpop.f32.mrf.mxu0
        %v1512 = vadd.f32 0.0, %v1511
        %v1513 = vpop.f32.mrf.mxu0
        %v1514 = vpop.f32.mrf.mxu0
        %v1515 = vpop.f32.mrf.mxu0
        %1516 = vdwg.mxu0
        %v1517 = vadd.f32 %v1287, %v1512
        %v1518 = vadd.f32 %v410, %v1517
        %v1519 = vld [vmem:[%s6] sm:$0x1]
        %v1520 = vmul.f32 %v1518, %v1518
        %v1521 = vsel %vm420, %v1520, 0.0
        %1522 = vadd.xlane.f32.xlu0 %v1521
        %v1523 = vpop.xlane.xlu0 %1522
        %v1524 = vmul.f32 %v1523, %v424
        %v1525 = vadd.f32 %v1524, 1e-06
        %v1526 = vrsqrt.pop %v1525
        %v1527 = vmul.f32 %v1518, %v1526
        %v1529 = vlaneseq
        %v1530 = vshrl.u32 %v1529, 7
        %v1531 = vsub.s32 0, %v1530
        %v1532 = vrot.slane %v1519, %v1531
        %v1534 = vmul.f32 %v1527, %v1532
        %v1535 = vpack.c.bf16 %v1534, %v1534
        %v1536 = vld [vmem:[%s7] sm:$0xff]
        %v1537 = vld [vmem:[%s7 + $0x8] sm:$0xff]
        %v1538 = vld [vmem:[%s7 + $0x10] sm:$0xff]
        %v1539 = vld [vmem:[%s7 + $0x18] sm:$0xff]
        %v1540 = vld [vmem:[%s7 + $0x20] sm:$0xff]
        %v1541 = vld [vmem:[%s7 + $0x28] sm:$0xff]
        %v1542 = vld [vmem:[%s7 + $0x30] sm:$0xff]
        %v1543 = vld [vmem:[%s7 + $0x38] sm:$0xff]
        %v1552 = vunpack.c.l.b16 %v1536
        %v1553 = vunpack.c.h.b16 %v1536
        %v1554 = vunpack.c.l.b16 %v1537
        %v1555 = vunpack.c.h.b16 %v1537
        %v1556 = vunpack.c.l.b16 %v1538
        %v1557 = vunpack.c.h.b16 %v1538
        %v1558 = vunpack.c.l.b16 %v1539
        %v1559 = vunpack.c.h.b16 %v1539
        %v1560 = vunpack.c.l.b16 %v1540
        %v1561 = vunpack.c.h.b16 %v1540
        %v1562 = vunpack.c.l.b16 %v1541
        %v1563 = vunpack.c.h.b16 %v1541
        %v1564 = vunpack.c.l.b16 %v1542
        %v1565 = vunpack.c.h.b16 %v1542
        %v1566 = vunpack.c.l.b16 %v1543
        %v1567 = vunpack.c.h.b16 %v1543
        %v1568 = vpack.c.b16 %v1554, %v1552
        %v1569 = vpack.c.b16 %v1555, %v1553
        %v1570 = vpack.c.b16 %v1558, %v1556
        %v1571 = vpack.c.b16 %v1559, %v1557
        %v1572 = vpack.c.b16 %v1562, %v1560
        %v1573 = vpack.c.b16 %v1563, %v1561
        %v1574 = vpack.c.b16 %v1566, %v1564
        %v1575 = vpack.c.b16 %v1567, %v1565
        %v1585 = vsel %vm420, %v1535, 0
        %1587 = vmatprep.subr.bf16.mxu0 0
        %1588 = vmatpush1.bf16.msra.mxu0 0
        %1589 = vmatprep.subr.bf16.mxu0 0
        %1590 = vmatpush1.bf16.msra.mxu0 0
        %1591 = vmatprep.subr.bf16.mxu0 0
        %1592 = vmatpush1.bf16.msra.mxu0 0
        %1593 = vmatprep.subr.bf16.mxu0 0
        %1594 = vmatpush1.bf16.msra.mxu0 0
        %1595 = vmatprep.subr.bf16.mxu0 %v1575
        %1596 = vmatpush1.bf16.msra.mxu0 %v1574
        %1597 = vmatprep.subr.bf16.mxu0 %v1573
        %1598 = vmatpush1.bf16.msra.mxu0 %v1572
        %1599 = vmatprep.subr.bf16.mxu0 %v1571
        %1600 = vmatpush1.bf16.msra.mxu0 %v1570
        %1601 = vmatprep.subr.bf16.mxu0 %v1569
        %1602 = vmatpush1.bf16.msra.mxu0 %v1568
        %1603 = vmatprep.subr.bf16.mxu0 0
        %1604 = vmatpush2.bf16.msra.mxu0 0
        %1605 = vmatprep.subr.bf16.mxu0 0
        %1606 = vmatpush2.bf16.msra.mxu0 0
        %1607 = vmatprep.subr.bf16.mxu0 0
        %1608 = vmatpush2.bf16.msra.mxu0 0
        %1609 = vmatprep.subr.bf16.mxu0 0
        %1610 = vmatpush2.bf16.msra.mxu0 0
        %1611 = vmatprep.subr.bf16.mxu0 0
        %1612 = vmatpush2.bf16.msra.mxu0 0
        %1613 = vmatprep.subr.bf16.mxu0 0
        %1614 = vmatpush2.bf16.msra.mxu0 0
        %1615 = vmatprep.subr.bf16.mxu0 0
        %1616 = vmatpush2.bf16.msra.mxu0 0
        %1617 = vmatprep.subr.bf16.mxu0 0
        %1618 = vmatpush2.bf16.msra.mxu0 0
        %1619 = vmatprep.mubr.bf16.mxu0 0
        %1620 = vmatmul.mubr.bf16.gmra.mxu0 %v1585
        %v1621 = vpop.f32.mrf.mxu0
        %v1622 = vadd.f32 0.0, %v1621
        %v1623 = vpop.f32.mrf.mxu0
        %v1624 = vadd.f32 0.0, %v1623
        %v1625 = vpop.f32.mrf.mxu0
        %v1626 = vpop.f32.mrf.mxu0
        %1627 = vdwg.mxu0
        %v1628 = vld [vmem:[%s8] sm:$0xff]
        %v1629 = vld [vmem:[%s8 + $0x8] sm:$0xff]
        %v1630 = vld [vmem:[%s8 + $0x10] sm:$0xff]
        %v1631 = vld [vmem:[%s8 + $0x18] sm:$0xff]
        %v1632 = vld [vmem:[%s8 + $0x20] sm:$0xff]
        %v1633 = vld [vmem:[%s8 + $0x28] sm:$0xff]
        %v1634 = vld [vmem:[%s8 + $0x30] sm:$0xff]
        %v1635 = vld [vmem:[%s8 + $0x38] sm:$0xff]
        %v1644 = vunpack.c.l.b16 %v1628
        %v1645 = vunpack.c.h.b16 %v1628
        %v1646 = vunpack.c.l.b16 %v1629
        %v1647 = vunpack.c.h.b16 %v1629
        %v1648 = vunpack.c.l.b16 %v1630
        %v1649 = vunpack.c.h.b16 %v1630
        %v1650 = vunpack.c.l.b16 %v1631
        %v1651 = vunpack.c.h.b16 %v1631
        %v1652 = vunpack.c.l.b16 %v1632
        %v1653 = vunpack.c.h.b16 %v1632
        %v1654 = vunpack.c.l.b16 %v1633
        %v1655 = vunpack.c.h.b16 %v1633
        %v1656 = vunpack.c.l.b16 %v1634
        %v1657 = vunpack.c.h.b16 %v1634
        %v1658 = vunpack.c.l.b16 %v1635
        %v1659 = vunpack.c.h.b16 %v1635
        %v1660 = vpack.c.b16 %v1646, %v1644
        %v1661 = vpack.c.b16 %v1647, %v1645
        %v1662 = vpack.c.b16 %v1650, %v1648
        %v1663 = vpack.c.b16 %v1651, %v1649
        %v1664 = vpack.c.b16 %v1654, %v1652
        %v1665 = vpack.c.b16 %v1655, %v1653
        %v1666 = vpack.c.b16 %v1658, %v1656
        %v1667 = vpack.c.b16 %v1659, %v1657
        %1676 = vmatprep.subr.bf16.mxu0 0
        %1677 = vmatpush1.bf16.msra.mxu0 0
        %1678 = vmatprep.subr.bf16.mxu0 0
        %1679 = vmatpush1.bf16.msra.mxu0 0
        %1680 = vmatprep.subr.bf16.mxu0 0
        %1681 = vmatpush1.bf16.msra.mxu0 0
        %1682 = vmatprep.subr.bf16.mxu0 0
        %1683 = vmatpush1.bf16.msra.mxu0 0
        %1684 = vmatprep.subr.bf16.mxu0 %v1667
        %1685 = vmatpush1.bf16.msra.mxu0 %v1666
        %1686 = vmatprep.subr.bf16.mxu0 %v1665
        %1687 = vmatpush1.bf16.msra.mxu0 %v1664
        %1688 = vmatprep.subr.bf16.mxu0 %v1663
        %1689 = vmatpush1.bf16.msra.mxu0 %v1662
        %1690 = vmatprep.subr.bf16.mxu0 %v1661
        %1691 = vmatpush1.bf16.msra.mxu0 %v1660
        %1692 = vmatprep.subr.bf16.mxu0 0
        %1693 = vmatpush2.bf16.msra.mxu0 0
        %1694 = vmatprep.subr.bf16.mxu0 0
        %1695 = vmatpush2.bf16.msra.mxu0 0
        %1696 = vmatprep.subr.bf16.mxu0 0
        %1697 = vmatpush2.bf16.msra.mxu0 0
        %1698 = vmatprep.subr.bf16.mxu0 0
        %1699 = vmatpush2.bf16.msra.mxu0 0
        %1700 = vmatprep.subr.bf16.mxu0 0
        %1701 = vmatpush2.bf16.msra.mxu0 0
        %1702 = vmatprep.subr.bf16.mxu0 0
        %1703 = vmatpush2.bf16.msra.mxu0 0
        %1704 = vmatprep.subr.bf16.mxu0 0
        %1705 = vmatpush2.bf16.msra.mxu0 0
        %1706 = vmatprep.subr.bf16.mxu0 0
        %1707 = vmatpush2.bf16.msra.mxu0 0
        %1708 = vmatprep.mubr.bf16.mxu0 0
        %1709 = vmatmul.mubr.bf16.gmra.mxu0 %v1585
        %v1710 = vpop.f32.mrf.mxu0
        %v1711 = vadd.f32 0.0, %v1710
        %v1712 = vpop.f32.mrf.mxu0
        %v1713 = vadd.f32 0.0, %v1712
        %v1714 = vpop.f32.mrf.mxu0
        %v1715 = vpop.f32.mrf.mxu0
        %1716 = vdwg.mxu0
        %v1717 = vxor.u32 %v1622, 2147483648
        %v1718 = vxor.u32 %v1624, 2147483648
        %v1719 = vmul.f32 %v1717, 1.442695
        %v1720 = vpow.pop %v1719
        %v1721 = vmul.f32 %v1718, 1.442695
        %v1722 = vpow.pop %v1721
        %v1723 = vadd.f32 %v1720, 1.0
        %v1724 = vadd.f32 %v1722, 1.0
        %v1725 = vrcp.pop %v1723
        %v1726 = vmul.f32 1.0, %v1725
        %v1727 = vrcp.pop %v1724
        %v1728 = vmul.f32 1.0, %v1727
        %v1729 = vmul.f32 %v1622, %v1726
        %v1730 = vmul.f32 %v1624, %v1728
        %v1731 = vmul.f32 %v1729, %v1711
        %v1732 = vmul.f32 %v1730, %v1713
        %v1733 = vpack.c.bf16 %v1731, %v1731
        %v1734 = vpack.c.bf16 %v1732, %v1732
        %v1735 = vld [vmem:[%s9] sm:$0xf]
        %v1736 = vld [vmem:[%s9 + $0x4] sm:$0xf]
        %v1737 = vld [vmem:[%s9 + $0x8] sm:$0xf]
        %v1738 = vld [vmem:[%s9 + $0xc] sm:$0xf]
        %v1739 = vld [vmem:[%s9 + $0x10] sm:$0xf]
        %v1740 = vld [vmem:[%s9 + $0x14] sm:$0xf]
        %v1741 = vld [vmem:[%s9 + $0x18] sm:$0xf]
        %v1742 = vld [vmem:[%s9 + $0x1c] sm:$0xf]
        %v1743 = vld [vmem:[%s9 + $0x20] sm:$0xf]
        %v1744 = vld [vmem:[%s9 + $0x24] sm:$0xf]
        %v1745 = vld [vmem:[%s9 + $0x28] sm:$0xf]
        %v1746 = vld [vmem:[%s9 + $0x2c] sm:$0xf]
        %v1747 = vld [vmem:[%s9 + $0x30] sm:$0xf]
        %v1748 = vld [vmem:[%s9 + $0x34] sm:$0xf]
        %v1749 = vld [vmem:[%s9 + $0x38] sm:$0xf]
        %v1750 = vld [vmem:[%s9 + $0x3c] sm:$0xf]
        %v1751 = vld [vmem:[%s9 + $0x40] sm:$0xf]
        %v1752 = vld [vmem:[%s9 + $0x44] sm:$0xf]
        %v1753 = vld [vmem:[%s9 + $0x48] sm:$0xf]
        %v1754 = vld [vmem:[%s9 + $0x4c] sm:$0xf]
        %v1755 = vld [vmem:[%s9 + $0x50] sm:$0xf]
        %v1756 = vld [vmem:[%s9 + $0x54] sm:$0xf]
        %v1757 = vld [vmem:[%s9 + $0x58] sm:$0xf]
        %v1758 = vld [vmem:[%s9 + $0x5c] sm:$0xf]
        %v1783 = vunpack.c.l.b16 %v1735
        %v1784 = vunpack.c.l.b16 %v1736
        %v1785 = vunpack.c.l.b16 %v1737
        %v1786 = vunpack.c.l.b16 %v1738
        %v1787 = vunpack.c.l.b16 %v1739
        %v1788 = vunpack.c.l.b16 %v1740
        %v1789 = vunpack.c.l.b16 %v1741
        %v1790 = vunpack.c.l.b16 %v1742
        %v1791 = vunpack.c.l.b16 %v1743
        %v1792 = vunpack.c.l.b16 %v1744
        %v1793 = vunpack.c.l.b16 %v1745
        %v1794 = vunpack.c.l.b16 %v1746
        %v1795 = vunpack.c.l.b16 %v1747
        %v1796 = vunpack.c.l.b16 %v1748
        %v1797 = vunpack.c.l.b16 %v1749
        %v1798 = vunpack.c.l.b16 %v1750
        %v1799 = vunpack.c.l.b16 %v1751
        %v1800 = vunpack.c.l.b16 %v1752
        %v1801 = vunpack.c.l.b16 %v1753
        %v1802 = vunpack.c.l.b16 %v1754
        %v1803 = vunpack.c.l.b16 %v1755
        %v1804 = vunpack.c.l.b16 %v1756
        %v1805 = vunpack.c.l.b16 %v1757
        %v1806 = vunpack.c.l.b16 %v1758
        %v1807 = vpack.c.b16 %v1784, %v1783
        %v1808 = vpack.c.b16 %v1786, %v1785
        %v1809 = vpack.c.b16 %v1788, %v1787
        %v1810 = vpack.c.b16 %v1790, %v1789
        %v1811 = vpack.c.b16 %v1792, %v1791
        %v1812 = vpack.c.b16 %v1794, %v1793
        %v1813 = vpack.c.b16 %v1796, %v1795
        %v1814 = vpack.c.b16 %v1798, %v1797
        %v1815 = vpack.c.b16 %v1800, %v1799
        %v1816 = vpack.c.b16 %v1802, %v1801
        %v1817 = vpack.c.b16 %v1804, %v1803
        %v1818 = vpack.c.b16 %v1806, %v1805
        %v1832 = vsel %vm420, %v1734, 0
        %1834 = vmatprep.subr.bf16.mxu0 0
        %1835 = vmatpush1.bf16.msra.mxu0 %v1814
        %1836 = vmatprep.subr.bf16.mxu0 0
        %1837 = vmatpush1.bf16.msra.mxu0 %v1813
        %1838 = vmatprep.subr.bf16.mxu0 0
        %1839 = vmatpush1.bf16.msra.mxu0 %v1812
        %1840 = vmatprep.subr.bf16.mxu0 0
        %1841 = vmatpush1.bf16.msra.mxu0 %v1811
        %1842 = vmatprep.subr.bf16.mxu0 0
        %1843 = vmatpush1.bf16.msra.mxu0 %v1810
        %1844 = vmatprep.subr.bf16.mxu0 0
        %1845 = vmatpush1.bf16.msra.mxu0 %v1809
        %1846 = vmatprep.subr.bf16.mxu0 0
        %1847 = vmatpush1.bf16.msra.mxu0 %v1808
        %1848 = vmatprep.subr.bf16.mxu0 0
        %1849 = vmatpush1.bf16.msra.mxu0 %v1807
        %1850 = vmatprep.subr.bf16.mxu0 0
        %1851 = vmatpush2.bf16.msra.mxu0 0
        %1852 = vmatprep.subr.bf16.mxu0 0
        %1853 = vmatpush2.bf16.msra.mxu0 0
        %1854 = vmatprep.subr.bf16.mxu0 0
        %1855 = vmatpush2.bf16.msra.mxu0 0
        %1856 = vmatprep.subr.bf16.mxu0 0
        %1857 = vmatpush2.bf16.msra.mxu0 0
        %1858 = vmatprep.subr.bf16.mxu0 0
        %1859 = vmatpush2.bf16.msra.mxu0 %v1818
        %1860 = vmatprep.subr.bf16.mxu0 0
        %1861 = vmatpush2.bf16.msra.mxu0 %v1817
        %1862 = vmatprep.subr.bf16.mxu0 0
        %1863 = vmatpush2.bf16.msra.mxu0 %v1816
        %1864 = vmatprep.subr.bf16.mxu0 0
        %1865 = vmatpush2.bf16.msra.mxu0 %v1815
        %1866 = vmatprep.mubr.bf16.mxu0 %v1832
        %1867 = vmatmul.mubr.bf16.gmra.mxu0 %v1733
        %v1868 = vpop.f32.mrf.mxu0
        %v1869 = vadd.f32 0.0, %v1868
        %v1870 = vpop.f32.mrf.mxu0
        %v1871 = vpop.f32.mrf.mxu0
        %v1872 = vpop.f32.mrf.mxu0
        %1873 = vdwg.mxu0
        %v1874 = vadd.f32 %v1518, %v1869
        %s1875 = scalar_lea.vmem %s3, 1
        %v1876 = vld [vmem:[%s1875] sm:$0x1]
        %v1877 = vmul.f32 %v1874, %v1874
        %v1878 = vsel %vm420, %v1877, 0.0
        %1879 = vadd.xlane.f32.xlu0 %v1878
        %v1880 = vpop.xlane.xlu0 %1879
        %v1881 = vmul.f32 %v1880, %v424
        %v1882 = vadd.f32 %v1881, 1e-06
        %v1883 = vrsqrt.pop %v1882
        %v1884 = vmul.f32 %v1874, %v1883
        %v1886 = vlaneseq
        %v1887 = vshrl.u32 %v1886, 7
        %v1888 = vsub.s32 0, %v1887
        %v1889 = vrot.slane %v1876, %v1888
        %v1891 = vmul.f32 %v1884, %v1889
        %v1892 = vpack.c.bf16 %v1891, %v1891
        %s1893 = scalar_lea.vmem %s4, 32
        %v1894 = vld [vmem:[%s1893] sm:$0xf]
        %v1895 = vld [vmem:[%s1893 + $0x4] sm:$0xf]
        %v1896 = vld [vmem:[%s1893 + $0x8] sm:$0xf]
        %v1897 = vld [vmem:[%s1893 + $0xc] sm:$0xf]
        %v1898 = vld [vmem:[%s1893 + $0x10] sm:$0xf]
        %v1899 = vld [vmem:[%s1893 + $0x14] sm:$0xf]
        %v1900 = vld [vmem:[%s1893 + $0x18] sm:$0xf]
        %v1901 = vld [vmem:[%s1893 + $0x1c] sm:$0xf]
        %v1910 = vunpack.c.l.b16 %v1894
        %v1911 = vunpack.c.l.b16 %v1895
        %v1912 = vunpack.c.l.b16 %v1896
        %v1913 = vunpack.c.l.b16 %v1897
        %v1914 = vunpack.c.l.b16 %v1898
        %v1915 = vunpack.c.l.b16 %v1899
        %v1916 = vunpack.c.l.b16 %v1900
        %v1917 = vunpack.c.l.b16 %v1901
        %v1918 = vpack.c.b16 %v1911, %v1910
        %v1919 = vpack.c.b16 %v1913, %v1912
        %v1920 = vpack.c.b16 %v1915, %v1914
        %v1921 = vpack.c.b16 %v1917, %v1916
        %v1927 = vsel %vm420, %v1892, 0
        %1929 = vmatprep.subr.bf16.mxu0 0
        %1930 = vmatpush1.bf16.msra.mxu0 0
        %1931 = vmatprep.subr.bf16.mxu0 0
        %1932 = vmatpush1.bf16.msra.mxu0 0
        %1933 = vmatprep.subr.bf16.mxu0 0
        %1934 = vmatpush1.bf16.msra.mxu0 0
        %1935 = vmatprep.subr.bf16.mxu0 0
        %1936 = vmatpush1.bf16.msra.mxu0 0
        %1937 = vmatprep.subr.bf16.mxu0 0
        %1938 = vmatpush1.bf16.msra.mxu0 %v1921
        %1939 = vmatprep.subr.bf16.mxu0 0
        %1940 = vmatpush1.bf16.msra.mxu0 %v1920
        %1941 = vmatprep.subr.bf16.mxu0 0
        %1942 = vmatpush1.bf16.msra.mxu0 %v1919
        %1943 = vmatprep.subr.bf16.mxu0 0
        %1944 = vmatpush1.bf16.msra.mxu0 %v1918
        %1945 = vmatprep.subr.bf16.mxu0 0
        %1946 = vmatpush2.bf16.msra.mxu0 0
        %1947 = vmatprep.subr.bf16.mxu0 0
        %1948 = vmatpush2.bf16.msra.mxu0 0
        %1949 = vmatprep.subr.bf16.mxu0 0
        %1950 = vmatpush2.bf16.msra.mxu0 0
        %1951 = vmatprep.subr.bf16.mxu0 0
        %1952 = vmatpush2.bf16.msra.mxu0 0
        %1953 = vmatprep.subr.bf16.mxu0 0
        %1954 = vmatpush2.bf16.msra.mxu0 0
        %1955 = vmatprep.subr.bf16.mxu0 0
        %1956 = vmatpush2.bf16.msra.mxu0 0
        %1957 = vmatprep.subr.bf16.mxu0 0
        %1958 = vmatpush2.bf16.msra.mxu0 0
        %1959 = vmatprep.subr.bf16.mxu0 0
        %1960 = vmatpush2.bf16.msra.mxu0 0
        %1961 = vmatprep.mubr.bf16.mxu0 0
        %1962 = vmatmul.mubr.bf16.gmra.mxu0 %v1927
        %v1963 = vpop.f32.mrf.mxu0
        %v1964 = vadd.f32 0.0, %v1963
        %v1965 = vpop.f32.mrf.mxu0
        %v1966 = vpop.f32.mrf.mxu0
        %v1967 = vpop.f32.mrf.mxu0
        %1968 = vdwg.mxu0
        %v1969 = vmul.f32 %v1964, %v514
        %v1970 = vmul.f32 %v1964, %v519
        %1972 = vrot.lane.b32.xlu0 %v1970, 120
        %v1973 = vpop.permute.xlu0 %1972
        %v1975 = vsub.f32 %v1969, %v1973
        %v1976 = vmul.f32 %v1964, %v528
        %v1977 = vmul.f32 %v1964, %v532
        %1979 = vrot.lane.b32.xlu0 %v1977, 8
        %v1980 = vpop.permute.xlu0 %1979
        %v1982 = vadd.f32 %v1976, %v1980
        %v1983 = vpack.c.bf16 %v1975, %v1975
        %v1984 = vpack.c.bf16 %v1982, %v1982
        %v1985 = vpack.c.bf16 %v1964, %v1964
        %v1986 = vmul.f32 %v1964, %v544
        %v1987 = vmul.f32 %v1964, %v548
        %1989 = vrot.lane.b32.xlu0 %v1987, 120
        %v1990 = vpop.permute.xlu0 %1989
        %v1992 = vsub.f32 %v1986, %v1990
        %v1993 = vmul.f32 %v1964, %v557
        %v1994 = vmul.f32 %v1964, %v561
        %1996 = vrot.lane.b32.xlu0 %v1994, 8
        %v1997 = vpop.permute.xlu0 %1996
        %v1999 = vadd.f32 %v1993, %v1997
        %v2000 = vpack.c.bf16 %v1992, %v1992
        %v2001 = vpack.c.bf16 %v1999, %v1999
        %v2002 = vmul.f32 %v1964, %v411
        %v2003 = vmul.f32 %v1964, %v573
        %2005 = vrot.lane.b32.xlu0 %v2003, 120
        %v2006 = vpop.permute.xlu0 %2005
        %v2008 = vsub.f32 %v2002, %v2006
        %v2009 = vmul.f32 %v1964, %v582
        %v2010 = vmul.f32 %v1964, %v412
        %2012 = vrot.lane.b32.xlu0 %v2010, 8
        %v2013 = vpop.permute.xlu0 %2012
        %v2015 = vadd.f32 %v2009, %v2013
        %v2016 = vpack.c.bf16 %v2008, %v2008
        %v2017 = vpack.c.bf16 %v2015, %v2015
        %2019 = vrot.lane.b32.xlu0 %v2017, 120
        %v2020 = vpop.permute.xlu0 %2019
        %2022 = vrot.lane.b32.xlu0 %v1984, 56
        %v2023 = vpop.permute.xlu0 %2022
        %v2025 = vsel %vm599, %v2020, 0
        %v2028 = vsel %vm599, %v2023, 0
        %2030 = vmatprep.subr.bf16.mxu0 0
        %2031 = vmatpush1.bf16.xpose.msra.mxu0 0
        %2032 = vmatprep.subr.bf16.mxu0 0
        %2033 = vmatpush1.bf16.xpose.msra.mxu0 0
        %2034 = vmatprep.subr.bf16.mxu0 0
        %2035 = vmatpush1.bf16.xpose.msra.mxu0 0
        %2036 = vmatprep.subr.bf16.mxu0 0
        %2037 = vmatpush1.bf16.xpose.msra.mxu0 0
        %2038 = vmatprep.subr.bf16.mxu0 0
        %2039 = vmatpush1.bf16.xpose.msra.mxu0 0
        %2040 = vmatprep.subr.bf16.mxu0 0
        %2041 = vmatpush1.bf16.xpose.msra.mxu0 0
        %2042 = vmatprep.subr.bf16.mxu0 0
        %2043 = vmatpush1.bf16.xpose.msra.mxu0 0
        %2044 = vmatprep.subr.bf16.mxu0 0
        %2045 = vmatpush1.bf16.xpose.msra.mxu0 %v2028
        %2046 = vmatprep.subr.bf16.mxu0 0
        %2047 = vmatpush2.bf16.xpose.msra.mxu0 0
        %2048 = vmatprep.subr.bf16.mxu0 0
        %2049 = vmatpush2.bf16.xpose.msra.mxu0 0
        %2050 = vmatprep.subr.bf16.mxu0 0
        %2051 = vmatpush2.bf16.xpose.msra.mxu0 0
        %2052 = vmatprep.subr.bf16.mxu0 0
        %2053 = vmatpush2.bf16.xpose.msra.mxu0 0
        %2054 = vmatprep.subr.bf16.mxu0 0
        %2055 = vmatpush2.bf16.xpose.msra.mxu0 0
        %2056 = vmatprep.subr.bf16.mxu0 0
        %2057 = vmatpush2.bf16.xpose.msra.mxu0 0
        %2058 = vmatprep.subr.bf16.mxu0 0
        %2059 = vmatpush2.bf16.xpose.msra.mxu0 0
        %2060 = vmatprep.subr.bf16.mxu0 0
        %2061 = vmatpush2.bf16.xpose.msra.mxu0 0
        %2062 = vmatprep.mubr.bf16.mxu0 0
        %2063 = vmatmul.mubr.bf16.gmra.mxu0 %v2025
        %v2064 = vpop.f32.mrf.mxu0
        %v2065 = vadd.f32 0.0, %v2064
        %v2066 = vpop.f32.mrf.mxu0
        %v2067 = vpop.f32.mrf.mxu0
        %v2068 = vpop.f32.mrf.mxu0
        %2069 = vdwg.mxu0
        %2071 = vrot.lane.b32.xlu0 %v1983, 64
        %v2072 = vpop.permute.xlu0 %2071
        %v2074 = vsel %vm599, %v2016, 0
        %v2077 = vsel %vm599, %v2072, 0
        %2079 = vmatprep.subr.bf16.mxu0 0
        %2080 = vmatpush1.bf16.xpose.msra.mxu0 0
        %2081 = vmatprep.subr.bf16.mxu0 0
        %2082 = vmatpush1.bf16.xpose.msra.mxu0 0
        %2083 = vmatprep.subr.bf16.mxu0 0
        %2084 = vmatpush1.bf16.xpose.msra.mxu0 0
        %2085 = vmatprep.subr.bf16.mxu0 0
        %2086 = vmatpush1.bf16.xpose.msra.mxu0 0
        %2087 = vmatprep.subr.bf16.mxu0 0
        %2088 = vmatpush1.bf16.xpose.msra.mxu0 0
        %2089 = vmatprep.subr.bf16.mxu0 0
        %2090 = vmatpush1.bf16.xpose.msra.mxu0 0
        %2091 = vmatprep.subr.bf16.mxu0 0
        %2092 = vmatpush1.bf16.xpose.msra.mxu0 0
        %2093 = vmatprep.subr.bf16.mxu0 0
        %2094 = vmatpush1.bf16.xpose.msra.mxu0 %v2077
        %2095 = vmatprep.subr.bf16.mxu0 0
        %2096 = vmatpush2.bf16.xpose.msra.mxu0 0
        %2097 = vmatprep.subr.bf16.mxu0 0
        %2098 = vmatpush2.bf16.xpose.msra.mxu0 0
        %2099 = vmatprep.subr.bf16.mxu0 0
        %2100 = vmatpush2.bf16.xpose.msra.mxu0 0
        %2101 = vmatprep.subr.bf16.mxu0 0
        %2102 = vmatpush2.bf16.xpose.msra.mxu0 0
        %2103 = vmatprep.subr.bf16.mxu0 0
        %2104 = vmatpush2.bf16.xpose.msra.mxu0 0
        %2105 = vmatprep.subr.bf16.mxu0 0
        %2106 = vmatpush2.bf16.xpose.msra.mxu0 0
        %2107 = vmatprep.subr.bf16.mxu0 0
        %2108 = vmatpush2.bf16.xpose.msra.mxu0 0
        %2109 = vmatprep.subr.bf16.mxu0 0
        %2110 = vmatpush2.bf16.xpose.msra.mxu0 0
        %2111 = vmatprep.mubr.bf16.mxu0 0
        %2112 = vmatmul.mubr.bf16.gmra.mxu0 %v2074
        %v2113 = vpop.f32.mrf.mxu0
        %v2114 = vadd.f32 %v2065, %v2113
        %v2115 = vpop.f32.mrf.mxu0
        %v2116 = vpop.f32.mrf.mxu0
        %v2117 = vpop.f32.mrf.mxu0
        %2118 = vdwg.mxu0
        %v2119 = vmul.f32 %v2114, 0.25
        %v2120 = vsel %vm417, %v2119, -1e+30
        %v2121 = vsel %vm599, %v2120, -inf
        %2122 = vmax.xlane.f32.xlu0 %v2121
        %v2123 = vpop.xlane.xlu0 %2122
        %v2124 = vsub.f32 %v2120, %v2123
        %v2125 = vmul.f32 %v2124, 1.442695
        %v2126 = vpow.pop %v2125
        %v2127 = vsel %vm599, %v2126, 0.0
        %2128 = vadd.xlane.f32.xlu0 %v2127
        %v2129 = vpop.xlane.xlu0 %2128
        %v2130 = vrcp.pop %v2129
        %v2131 = vmul.f32 %v2126, %v2130
        %v2132 = vpack.c.bf16 %v2131, %v2131
        %2134 = vrot.lane.b32.xlu0 %v1985, 32
        %v2135 = vpop.permute.xlu0 %2134
        %v2137 = vsel %vm599, %v2132, 0
        %v2140 = vsel %vm715, %v2135, 0
        %2142 = vmatprep.subr.bf16.mxu0 0
        %2143 = vmatpush1.bf16.msra.mxu0 0
        %2144 = vmatprep.subr.bf16.mxu0 0
        %2145 = vmatpush1.bf16.msra.mxu0 0
        %2146 = vmatprep.subr.bf16.mxu0 0
        %2147 = vmatpush1.bf16.msra.mxu0 0
        %2148 = vmatprep.subr.bf16.mxu0 0
        %2149 = vmatpush1.bf16.msra.mxu0 0
        %2150 = vmatprep.subr.bf16.mxu0 0
        %2151 = vmatpush1.bf16.msra.mxu0 0
        %2152 = vmatprep.subr.bf16.mxu0 0
        %2153 = vmatpush1.bf16.msra.mxu0 0
        %2154 = vmatprep.subr.bf16.mxu0 0
        %2155 = vmatpush1.bf16.msra.mxu0 0
        %2156 = vmatprep.subr.bf16.mxu0 0
        %2157 = vmatpush1.bf16.msra.mxu0 %v2140
        %2158 = vmatprep.subr.bf16.mxu0 0
        %2159 = vmatpush2.bf16.msra.mxu0 0
        %2160 = vmatprep.subr.bf16.mxu0 0
        %2161 = vmatpush2.bf16.msra.mxu0 0
        %2162 = vmatprep.subr.bf16.mxu0 0
        %2163 = vmatpush2.bf16.msra.mxu0 0
        %2164 = vmatprep.subr.bf16.mxu0 0
        %2165 = vmatpush2.bf16.msra.mxu0 0
        %2166 = vmatprep.subr.bf16.mxu0 0
        %2167 = vmatpush2.bf16.msra.mxu0 0
        %2168 = vmatprep.subr.bf16.mxu0 0
        %2169 = vmatpush2.bf16.msra.mxu0 0
        %2170 = vmatprep.subr.bf16.mxu0 0
        %2171 = vmatpush2.bf16.msra.mxu0 0
        %2172 = vmatprep.subr.bf16.mxu0 0
        %2173 = vmatpush2.bf16.msra.mxu0 0
        %2174 = vmatprep.mubr.bf16.mxu0 0
        %2175 = vmatmul.mubr.bf16.gmra.mxu0 %v2137
        %v2176 = vpop.f32.mrf.mxu0
        %v2177 = vadd.f32 0.0, %v2176
        %v2178 = vpop.f32.mrf.mxu0
        %v2179 = vpop.f32.mrf.mxu0
        %v2180 = vpop.f32.mrf.mxu0
        %2181 = vdwg.mxu0
        %v2182 = vpack.c.bf16 %v2177, %v2177
        %s2183 = scalar_lea.vmem %s5, 32
        %v2184 = vld [vmem:[%s2183] sm:$0xf]
        %v2185 = vld [vmem:[%s2183 + $0x4] sm:$0xf]
        %v2186 = vmul.f32 %v1964, %v763
        %v2187 = vmul.f32 %v1964, %v767
        %2189 = vrot.lane.b32.xlu0 %v2187, 120
        %v2190 = vpop.permute.xlu0 %2189
        %v2192 = vsub.f32 %v2186, %v2190
        %v2193 = vmul.f32 %v1964, %v776
        %v2194 = vmul.f32 %v1964, %v780
        %2196 = vrot.lane.b32.xlu0 %v2194, 8
        %v2197 = vpop.permute.xlu0 %2196
        %v2199 = vadd.f32 %v2193, %v2197
        %v2200 = vpack.c.bf16 %v2192, %v2192
        %v2201 = vpack.c.bf16 %v2199, %v2199
        %2203 = vrot.lane.b32.xlu0 %v2201, 104
        %v2204 = vpop.permute.xlu0 %2203
        %v2206 = vsel %vm599, %v2204, 0
        %2208 = vmatprep.subr.bf16.mxu0 0
        %2209 = vmatpush1.bf16.xpose.msra.mxu0 0
        %2210 = vmatprep.subr.bf16.mxu0 0
        %2211 = vmatpush1.bf16.xpose.msra.mxu0 0
        %2212 = vmatprep.subr.bf16.mxu0 0
        %2213 = vmatpush1.bf16.xpose.msra.mxu0 0
        %2214 = vmatprep.subr.bf16.mxu0 0
        %2215 = vmatpush1.bf16.xpose.msra.mxu0 0
        %2216 = vmatprep.subr.bf16.mxu0 0
        %2217 = vmatpush1.bf16.xpose.msra.mxu0 0
        %2218 = vmatprep.subr.bf16.mxu0 0
        %2219 = vmatpush1.bf16.xpose.msra.mxu0 0
        %2220 = vmatprep.subr.bf16.mxu0 0
        %2221 = vmatpush1.bf16.xpose.msra.mxu0 0
        %2222 = vmatprep.subr.bf16.mxu0 0
        %2223 = vmatpush1.bf16.xpose.msra.mxu0 %v2028
        %2224 = vmatprep.subr.bf16.mxu0 0
        %2225 = vmatpush2.bf16.xpose.msra.mxu0 0
        %2226 = vmatprep.subr.bf16.mxu0 0
        %2227 = vmatpush2.bf16.xpose.msra.mxu0 0
        %2228 = vmatprep.subr.bf16.mxu0 0
        %2229 = vmatpush2.bf16.xpose.msra.mxu0 0
        %2230 = vmatprep.subr.bf16.mxu0 0
        %2231 = vmatpush2.bf16.xpose.msra.mxu0 0
        %2232 = vmatprep.subr.bf16.mxu0 0
        %2233 = vmatpush2.bf16.xpose.msra.mxu0 0
        %2234 = vmatprep.subr.bf16.mxu0 0
        %2235 = vmatpush2.bf16.xpose.msra.mxu0 0
        %2236 = vmatprep.subr.bf16.mxu0 0
        %2237 = vmatpush2.bf16.xpose.msra.mxu0 0
        %2238 = vmatprep.subr.bf16.mxu0 0
        %2239 = vmatpush2.bf16.xpose.msra.mxu0 0
        %2240 = vmatprep.mubr.bf16.mxu0 0
        %2241 = vmatmul.mubr.bf16.gmra.mxu0 %v2206
        %v2242 = vpop.f32.mrf.mxu0
        %v2243 = vadd.f32 0.0, %v2242
        %v2244 = vpop.f32.mrf.mxu0
        %v2245 = vpop.f32.mrf.mxu0
        %v2246 = vpop.f32.mrf.mxu0
        %2247 = vdwg.mxu0
        %2249 = vrot.lane.b32.xlu0 %v2200, 112
        %v2250 = vpop.permute.xlu0 %2249
        %v2252 = vsel %vm599, %v2250, 0
        %2254 = vmatprep.subr.bf16.mxu0 0
        %2255 = vmatpush1.bf16.xpose.msra.mxu0 0
        %2256 = vmatprep.subr.bf16.mxu0 0
        %2257 = vmatpush1.bf16.xpose.msra.mxu0 0
        %2258 = vmatprep.subr.bf16.mxu0 0
        %2259 = vmatpush1.bf16.xpose.msra.mxu0 0
        %2260 = vmatprep.subr.bf16.mxu0 0
        %2261 = vmatpush1.bf16.xpose.msra.mxu0 0
        %2262 = vmatprep.subr.bf16.mxu0 0
        %2263 = vmatpush1.bf16.xpose.msra.mxu0 0
        %2264 = vmatprep.subr.bf16.mxu0 0
        %2265 = vmatpush1.bf16.xpose.msra.mxu0 0
        %2266 = vmatprep.subr.bf16.mxu0 0
        %2267 = vmatpush1.bf16.xpose.msra.mxu0 0
        %2268 = vmatprep.subr.bf16.mxu0 0
        %2269 = vmatpush1.bf16.xpose.msra.mxu0 %v2077
        %2270 = vmatprep.subr.bf16.mxu0 0
        %2271 = vmatpush2.bf16.xpose.msra.mxu0 0
        %2272 = vmatprep.subr.bf16.mxu0 0
        %2273 = vmatpush2.bf16.xpose.msra.mxu0 0
        %2274 = vmatprep.subr.bf16.mxu0 0
        %2275 = vmatpush2.bf16.xpose.msra.mxu0 0
        %2276 = vmatprep.subr.bf16.mxu0 0
        %2277 = vmatpush2.bf16.xpose.msra.mxu0 0
        %2278 = vmatprep.subr.bf16.mxu0 0
        %2279 = vmatpush2.bf16.xpose.msra.mxu0 0
        %2280 = vmatprep.subr.bf16.mxu0 0
        %2281 = vmatpush2.bf16.xpose.msra.mxu0 0
        %2282 = vmatprep.subr.bf16.mxu0 0
        %2283 = vmatpush2.bf16.xpose.msra.mxu0 0
        %2284 = vmatprep.subr.bf16.mxu0 0
        %2285 = vmatpush2.bf16.xpose.msra.mxu0 0
        %2286 = vmatprep.mubr.bf16.mxu0 0
        %2287 = vmatmul.mubr.bf16.gmra.mxu0 %v2252
        %v2288 = vpop.f32.mrf.mxu0
        %v2289 = vadd.f32 %v2243, %v2288
        %v2290 = vpop.f32.mrf.mxu0
        %v2291 = vpop.f32.mrf.mxu0
        %v2292 = vpop.f32.mrf.mxu0
        %2293 = vdwg.mxu0
        %v2294 = vmul.f32 %v2289, 0.25
        %v2295 = vsel %vm417, %v2294, -1e+30
        %v2296 = vsel %vm599, %v2295, -inf
        %2297 = vmax.xlane.f32.xlu0 %v2296
        %v2298 = vpop.xlane.xlu0 %2297
        %v2299 = vsub.f32 %v2295, %v2298
        %v2300 = vmul.f32 %v2299, 1.442695
        %v2301 = vpow.pop %v2300
        %v2302 = vsel %vm599, %v2301, 0.0
        %2303 = vadd.xlane.f32.xlu0 %v2302
        %v2304 = vpop.xlane.xlu0 %2303
        %v2305 = vrcp.pop %v2304
        %v2306 = vmul.f32 %v2301, %v2305
        %v2307 = vpack.c.bf16 %v2306, %v2306
        %v2309 = vsel %vm599, %v2307, 0
        %2311 = vmatprep.subr.bf16.mxu0 0
        %2312 = vmatpush1.bf16.msra.mxu0 0
        %2313 = vmatprep.subr.bf16.mxu0 0
        %2314 = vmatpush1.bf16.msra.mxu0 0
        %2315 = vmatprep.subr.bf16.mxu0 0
        %2316 = vmatpush1.bf16.msra.mxu0 0
        %2317 = vmatprep.subr.bf16.mxu0 0
        %2318 = vmatpush1.bf16.msra.mxu0 0
        %2319 = vmatprep.subr.bf16.mxu0 0
        %2320 = vmatpush1.bf16.msra.mxu0 0
        %2321 = vmatprep.subr.bf16.mxu0 0
        %2322 = vmatpush1.bf16.msra.mxu0 0
        %2323 = vmatprep.subr.bf16.mxu0 0
        %2324 = vmatpush1.bf16.msra.mxu0 0
        %2325 = vmatprep.subr.bf16.mxu0 0
        %2326 = vmatpush1.bf16.msra.mxu0 %v2140
        %2327 = vmatprep.subr.bf16.mxu0 0
        %2328 = vmatpush2.bf16.msra.mxu0 0
        %2329 = vmatprep.subr.bf16.mxu0 0
        %2330 = vmatpush2.bf16.msra.mxu0 0
        %2331 = vmatprep.subr.bf16.mxu0 0
        %2332 = vmatpush2.bf16.msra.mxu0 0
        %2333 = vmatprep.subr.bf16.mxu0 0
        %2334 = vmatpush2.bf16.msra.mxu0 0
        %2335 = vmatprep.subr.bf16.mxu0 0
        %2336 = vmatpush2.bf16.msra.mxu0 0
        %2337 = vmatprep.subr.bf16.mxu0 0
        %2338 = vmatpush2.bf16.msra.mxu0 0
        %2339 = vmatprep.subr.bf16.mxu0 0
        %2340 = vmatpush2.bf16.msra.mxu0 0
        %2341 = vmatprep.subr.bf16.mxu0 0
        %2342 = vmatpush2.bf16.msra.mxu0 0
        %2343 = vmatprep.mubr.bf16.mxu0 0
        %2344 = vmatmul.mubr.bf16.gmra.mxu0 %v2309
        %v2345 = vpop.f32.mrf.mxu0
        %v2346 = vadd.f32 0.0, %v2345
        %v2347 = vpop.f32.mrf.mxu0
        %v2348 = vpop.f32.mrf.mxu0
        %v2349 = vpop.f32.mrf.mxu0
        %2350 = vdwg.mxu0
        %v2351 = vpack.c.bf16 %v2346, %v2346
        %v2352 = vld [vmem:[%s2183 + $0x8] sm:$0xf]
        %v2353 = vld [vmem:[%s2183 + $0xc] sm:$0xf]
        %v2356 = vunpack.c.l.b16 %v2352
        %v2357 = vunpack.c.l.b16 %v2353
        %v2358 = vpack.c.b16 %v2357, %v2356
        %v2361 = vsel %vm948, %v2351, 0
        %2363 = vmatprep.subr.bf16.mxu0 0
        %2364 = vmatpush1.bf16.msra.mxu0 0
        %2365 = vmatprep.subr.bf16.mxu0 0
        %2366 = vmatpush1.bf16.msra.mxu0 0
        %2367 = vmatprep.subr.bf16.mxu0 0
        %2368 = vmatpush1.bf16.msra.mxu0 0
        %2369 = vmatprep.subr.bf16.mxu0 0
        %2370 = vmatpush1.bf16.msra.mxu0 0
        %2371 = vmatprep.subr.bf16.mxu0 0
        %2372 = vmatpush1.bf16.msra.mxu0 0
        %2373 = vmatprep.subr.bf16.mxu0 0
        %2374 = vmatpush1.bf16.msra.mxu0 0
        %2375 = vmatprep.subr.bf16.mxu0 0
        %2376 = vmatpush1.bf16.msra.mxu0 0
        %2377 = vmatprep.subr.bf16.mxu0 0
        %2378 = vmatpush1.bf16.msra.mxu0 %v2358
        %2379 = vmatprep.subr.bf16.mxu0 0
        %2380 = vmatpush2.bf16.msra.mxu0 0
        %2381 = vmatprep.subr.bf16.mxu0 0
        %2382 = vmatpush2.bf16.msra.mxu0 0
        %2383 = vmatprep.subr.bf16.mxu0 0
        %2384 = vmatpush2.bf16.msra.mxu0 0
        %2385 = vmatprep.subr.bf16.mxu0 0
        %2386 = vmatpush2.bf16.msra.mxu0 0
        %2387 = vmatprep.subr.bf16.mxu0 0
        %2388 = vmatpush2.bf16.msra.mxu0 0
        %2389 = vmatprep.subr.bf16.mxu0 0
        %2390 = vmatpush2.bf16.msra.mxu0 0
        %2391 = vmatprep.subr.bf16.mxu0 0
        %2392 = vmatpush2.bf16.msra.mxu0 0
        %2393 = vmatprep.subr.bf16.mxu0 0
        %2394 = vmatpush2.bf16.msra.mxu0 0
        %2395 = vmatprep.mubr.bf16.mxu0 0
        %2396 = vmatmul.mubr.bf16.gmra.mxu0 %v2361
        %v2397 = vpop.f32.mrf.mxu0
        %v2398 = vadd.f32 0.0, %v2397
        %v2399 = vpop.f32.mrf.mxu0
        %v2400 = vpop.f32.mrf.mxu0
        %v2401 = vpop.f32.mrf.mxu0
        %2402 = vdwg.mxu0
        %v2405 = vunpack.c.l.b16 %v2184
        %v2406 = vunpack.c.l.b16 %v2185
        %v2407 = vpack.c.b16 %v2406, %v2405
        %v2410 = vsel %vm948, %v2182, 0
        %2412 = vmatprep.subr.bf16.mxu0 0
        %2413 = vmatpush1.bf16.msra.mxu0 0
        %2414 = vmatprep.subr.bf16.mxu0 0
        %2415 = vmatpush1.bf16.msra.mxu0 0
        %2416 = vmatprep.subr.bf16.mxu0 0
        %2417 = vmatpush1.bf16.msra.mxu0 0
        %2418 = vmatprep.subr.bf16.mxu0 0
        %2419 = vmatpush1.bf16.msra.mxu0 0
        %2420 = vmatprep.subr.bf16.mxu0 0
        %2421 = vmatpush1.bf16.msra.mxu0 0
        %2422 = vmatprep.subr.bf16.mxu0 0
        %2423 = vmatpush1.bf16.msra.mxu0 0
        %2424 = vmatprep.subr.bf16.mxu0 0
        %2425 = vmatpush1.bf16.msra.mxu0 0
        %2426 = vmatprep.subr.bf16.mxu0 0
        %2427 = vmatpush1.bf16.msra.mxu0 %v2407
        %2428 = vmatprep.subr.bf16.mxu0 0
        %2429 = vmatpush2.bf16.msra.mxu0 0
        %2430 = vmatprep.subr.bf16.mxu0 0
        %2431 = vmatpush2.bf16.msra.mxu0 0
        %2432 = vmatprep.subr.bf16.mxu0 0
        %2433 = vmatpush2.bf16.msra.mxu0 0
        %2434 = vmatprep.subr.bf16.mxu0 0
        %2435 = vmatpush2.bf16.msra.mxu0 0
        %2436 = vmatprep.subr.bf16.mxu0 0
        %2437 = vmatpush2.bf16.msra.mxu0 0
        %2438 = vmatprep.subr.bf16.mxu0 0
        %2439 = vmatpush2.bf16.msra.mxu0 0
        %2440 = vmatprep.subr.bf16.mxu0 0
        %2441 = vmatpush2.bf16.msra.mxu0 0
        %2442 = vmatprep.subr.bf16.mxu0 0
        %2443 = vmatpush2.bf16.msra.mxu0 0
        %2444 = vmatprep.mubr.bf16.mxu0 0
        %2445 = vmatmul.mubr.bf16.gmra.mxu0 %v2410
        %v2446 = vpop.f32.mrf.mxu0
        %v2447 = vadd.f32 %v2398, %v2446
        %v2448 = vpop.f32.mrf.mxu0
        %v2449 = vpop.f32.mrf.mxu0
        %v2450 = vpop.f32.mrf.mxu0
        %2451 = vdwg.mxu0
        %v2452 = vmul.f32 %v1964, %v1042
        %v2453 = vmul.f32 %v1964, %v1046
        %2455 = vrot.lane.b32.xlu0 %v2453, 120
        %v2456 = vpop.permute.xlu0 %2455
        %v2458 = vsub.f32 %v2452, %v2456
        %v2459 = vmul.f32 %v1964, %v1055
        %v2460 = vmul.f32 %v1964, %v1059
        %2462 = vrot.lane.b32.xlu0 %v2460, 8
        %v2463 = vpop.permute.xlu0 %2462
        %v2465 = vadd.f32 %v2459, %v2463
        %v2466 = vpack.c.bf16 %v2458, %v2458
        %v2467 = vpack.c.bf16 %v2465, %v2465
        %2469 = vrot.lane.b32.xlu0 %v2467, 88
        %v2470 = vpop.permute.xlu0 %2469
        %2472 = vrot.lane.b32.xlu0 %v2001, 40
        %v2473 = vpop.permute.xlu0 %2472
        %v2475 = vsel %vm599, %v2470, 0
        %v2478 = vsel %vm599, %v2473, 0
        %2480 = vmatprep.subr.bf16.mxu0 0
        %2481 = vmatpush1.bf16.xpose.msra.mxu0 0
        %2482 = vmatprep.subr.bf16.mxu0 0
        %2483 = vmatpush1.bf16.xpose.msra.mxu0 0
        %2484 = vmatprep.subr.bf16.mxu0 0
        %2485 = vmatpush1.bf16.xpose.msra.mxu0 0
        %2486 = vmatprep.subr.bf16.mxu0 0
        %2487 = vmatpush1.bf16.xpose.msra.mxu0 0
        %2488 = vmatprep.subr.bf16.mxu0 0
        %2489 = vmatpush1.bf16.xpose.msra.mxu0 0
        %2490 = vmatprep.subr.bf16.mxu0 0
        %2491 = vmatpush1.bf16.xpose.msra.mxu0 0
        %2492 = vmatprep.subr.bf16.mxu0 0
        %2493 = vmatpush1.bf16.xpose.msra.mxu0 0
        %2494 = vmatprep.subr.bf16.mxu0 0
        %2495 = vmatpush1.bf16.xpose.msra.mxu0 %v2478
        %2496 = vmatprep.subr.bf16.mxu0 0
        %2497 = vmatpush2.bf16.xpose.msra.mxu0 0
        %2498 = vmatprep.subr.bf16.mxu0 0
        %2499 = vmatpush2.bf16.xpose.msra.mxu0 0
        %2500 = vmatprep.subr.bf16.mxu0 0
        %2501 = vmatpush2.bf16.xpose.msra.mxu0 0
        %2502 = vmatprep.subr.bf16.mxu0 0
        %2503 = vmatpush2.bf16.xpose.msra.mxu0 0
        %2504 = vmatprep.subr.bf16.mxu0 0
        %2505 = vmatpush2.bf16.xpose.msra.mxu0 0
        %2506 = vmatprep.subr.bf16.mxu0 0
        %2507 = vmatpush2.bf16.xpose.msra.mxu0 0
        %2508 = vmatprep.subr.bf16.mxu0 0
        %2509 = vmatpush2.bf16.xpose.msra.mxu0 0
        %2510 = vmatprep.subr.bf16.mxu0 0
        %2511 = vmatpush2.bf16.xpose.msra.mxu0 0
        %2512 = vmatprep.mubr.bf16.mxu0 0
        %2513 = vmatmul.mubr.bf16.gmra.mxu0 %v2475
        %v2514 = vpop.f32.mrf.mxu0
        %v2515 = vadd.f32 0.0, %v2514
        %v2516 = vpop.f32.mrf.mxu0
        %v2517 = vpop.f32.mrf.mxu0
        %v2518 = vpop.f32.mrf.mxu0
        %2519 = vdwg.mxu0
        %2521 = vrot.lane.b32.xlu0 %v2466, 96
        %v2522 = vpop.permute.xlu0 %2521
        %2524 = vrot.lane.b32.xlu0 %v2000, 48
        %v2525 = vpop.permute.xlu0 %2524
        %v2527 = vsel %vm599, %v2522, 0
        %v2530 = vsel %vm599, %v2525, 0
        %2532 = vmatprep.subr.bf16.mxu0 0
        %2533 = vmatpush1.bf16.xpose.msra.mxu0 0
        %2534 = vmatprep.subr.bf16.mxu0 0
        %2535 = vmatpush1.bf16.xpose.msra.mxu0 0
        %2536 = vmatprep.subr.bf16.mxu0 0
        %2537 = vmatpush1.bf16.xpose.msra.mxu0 0
        %2538 = vmatprep.subr.bf16.mxu0 0
        %2539 = vmatpush1.bf16.xpose.msra.mxu0 0
        %2540 = vmatprep.subr.bf16.mxu0 0
        %2541 = vmatpush1.bf16.xpose.msra.mxu0 0
        %2542 = vmatprep.subr.bf16.mxu0 0
        %2543 = vmatpush1.bf16.xpose.msra.mxu0 0
        %2544 = vmatprep.subr.bf16.mxu0 0
        %2545 = vmatpush1.bf16.xpose.msra.mxu0 0
        %2546 = vmatprep.subr.bf16.mxu0 0
        %2547 = vmatpush1.bf16.xpose.msra.mxu0 %v2530
        %2548 = vmatprep.subr.bf16.mxu0 0
        %2549 = vmatpush2.bf16.xpose.msra.mxu0 0
        %2550 = vmatprep.subr.bf16.mxu0 0
        %2551 = vmatpush2.bf16.xpose.msra.mxu0 0
        %2552 = vmatprep.subr.bf16.mxu0 0
        %2553 = vmatpush2.bf16.xpose.msra.mxu0 0
        %2554 = vmatprep.subr.bf16.mxu0 0
        %2555 = vmatpush2.bf16.xpose.msra.mxu0 0
        %2556 = vmatprep.subr.bf16.mxu0 0
        %2557 = vmatpush2.bf16.xpose.msra.mxu0 0
        %2558 = vmatprep.subr.bf16.mxu0 0
        %2559 = vmatpush2.bf16.xpose.msra.mxu0 0
        %2560 = vmatprep.subr.bf16.mxu0 0
        %2561 = vmatpush2.bf16.xpose.msra.mxu0 0
        %2562 = vmatprep.subr.bf16.mxu0 0
        %2563 = vmatpush2.bf16.xpose.msra.mxu0 0
        %2564 = vmatprep.mubr.bf16.mxu0 0
        %2565 = vmatmul.mubr.bf16.gmra.mxu0 %v2527
        %v2566 = vpop.f32.mrf.mxu0
        %v2567 = vadd.f32 %v2515, %v2566
        %v2568 = vpop.f32.mrf.mxu0
        %v2569 = vpop.f32.mrf.mxu0
        %v2570 = vpop.f32.mrf.mxu0
        %2571 = vdwg.mxu0
        %v2572 = vmul.f32 %v2567, 0.25
        %v2573 = vsel %vm417, %v2572, -1e+30
        %v2574 = vsel %vm599, %v2573, -inf
        %2575 = vmax.xlane.f32.xlu0 %v2574
        %v2576 = vpop.xlane.xlu0 %2575
        %v2577 = vsub.f32 %v2573, %v2576
        %v2578 = vmul.f32 %v2577, 1.442695
        %v2579 = vpow.pop %v2578
        %v2580 = vsel %vm599, %v2579, 0.0
        %2581 = vadd.xlane.f32.xlu0 %v2580
        %v2582 = vpop.xlane.xlu0 %2581
        %v2583 = vrcp.pop %v2582
        %v2584 = vmul.f32 %v2579, %v2583
        %v2585 = vpack.c.bf16 %v2584, %v2584
        %2586 = vrot.lane.b32.xlu0 %v1985, 16
        %v2587 = vpop.permute.xlu0 %2586
        %v2589 = vsel %vm599, %v2585, 0
        %v2592 = vsel %vm715, %v2587, 0
        %2594 = vmatprep.subr.bf16.mxu0 0
        %2595 = vmatpush1.bf16.msra.mxu0 0
        %2596 = vmatprep.subr.bf16.mxu0 0
        %2597 = vmatpush1.bf16.msra.mxu0 0
        %2598 = vmatprep.subr.bf16.mxu0 0
        %2599 = vmatpush1.bf16.msra.mxu0 0
        %2600 = vmatprep.subr.bf16.mxu0 0
        %2601 = vmatpush1.bf16.msra.mxu0 0
        %2602 = vmatprep.subr.bf16.mxu0 0
        %2603 = vmatpush1.bf16.msra.mxu0 0
        %2604 = vmatprep.subr.bf16.mxu0 0
        %2605 = vmatpush1.bf16.msra.mxu0 0
        %2606 = vmatprep.subr.bf16.mxu0 0
        %2607 = vmatpush1.bf16.msra.mxu0 0
        %2608 = vmatprep.subr.bf16.mxu0 0
        %2609 = vmatpush1.bf16.msra.mxu0 %v2592
        %2610 = vmatprep.subr.bf16.mxu0 0
        %2611 = vmatpush2.bf16.msra.mxu0 0
        %2612 = vmatprep.subr.bf16.mxu0 0
        %2613 = vmatpush2.bf16.msra.mxu0 0
        %2614 = vmatprep.subr.bf16.mxu0 0
        %2615 = vmatpush2.bf16.msra.mxu0 0
        %2616 = vmatprep.subr.bf16.mxu0 0
        %2617 = vmatpush2.bf16.msra.mxu0 0
        %2618 = vmatprep.subr.bf16.mxu0 0
        %2619 = vmatpush2.bf16.msra.mxu0 0
        %2620 = vmatprep.subr.bf16.mxu0 0
        %2621 = vmatpush2.bf16.msra.mxu0 0
        %2622 = vmatprep.subr.bf16.mxu0 0
        %2623 = vmatpush2.bf16.msra.mxu0 0
        %2624 = vmatprep.subr.bf16.mxu0 0
        %2625 = vmatpush2.bf16.msra.mxu0 0
        %2626 = vmatprep.mubr.bf16.mxu0 0
        %2627 = vmatmul.mubr.bf16.gmra.mxu0 %v2589
        %v2628 = vpop.f32.mrf.mxu0
        %v2629 = vadd.f32 0.0, %v2628
        %v2630 = vpop.f32.mrf.mxu0
        %v2631 = vpop.f32.mrf.mxu0
        %v2632 = vpop.f32.mrf.mxu0
        %2633 = vdwg.mxu0
        %v2634 = vpack.c.bf16 %v2629, %v2629
        %v2635 = vld [vmem:[%s2183 + $0x10] sm:$0xf]
        %v2636 = vld [vmem:[%s2183 + $0x14] sm:$0xf]
        %v2639 = vunpack.c.l.b16 %v2635
        %v2640 = vunpack.c.l.b16 %v2636
        %v2641 = vpack.c.b16 %v2640, %v2639
        %v2644 = vsel %vm948, %v2634, 0
        %2646 = vmatprep.subr.bf16.mxu0 0
        %2647 = vmatpush1.bf16.msra.mxu0 0
        %2648 = vmatprep.subr.bf16.mxu0 0
        %2649 = vmatpush1.bf16.msra.mxu0 0
        %2650 = vmatprep.subr.bf16.mxu0 0
        %2651 = vmatpush1.bf16.msra.mxu0 0
        %2652 = vmatprep.subr.bf16.mxu0 0
        %2653 = vmatpush1.bf16.msra.mxu0 0
        %2654 = vmatprep.subr.bf16.mxu0 0
        %2655 = vmatpush1.bf16.msra.mxu0 0
        %2656 = vmatprep.subr.bf16.mxu0 0
        %2657 = vmatpush1.bf16.msra.mxu0 0
        %2658 = vmatprep.subr.bf16.mxu0 0
        %2659 = vmatpush1.bf16.msra.mxu0 0
        %2660 = vmatprep.subr.bf16.mxu0 0
        %2661 = vmatpush1.bf16.msra.mxu0 %v2641
        %2662 = vmatprep.subr.bf16.mxu0 0
        %2663 = vmatpush2.bf16.msra.mxu0 0
        %2664 = vmatprep.subr.bf16.mxu0 0
        %2665 = vmatpush2.bf16.msra.mxu0 0
        %2666 = vmatprep.subr.bf16.mxu0 0
        %2667 = vmatpush2.bf16.msra.mxu0 0
        %2668 = vmatprep.subr.bf16.mxu0 0
        %2669 = vmatpush2.bf16.msra.mxu0 0
        %2670 = vmatprep.subr.bf16.mxu0 0
        %2671 = vmatpush2.bf16.msra.mxu0 0
        %2672 = vmatprep.subr.bf16.mxu0 0
        %2673 = vmatpush2.bf16.msra.mxu0 0
        %2674 = vmatprep.subr.bf16.mxu0 0
        %2675 = vmatpush2.bf16.msra.mxu0 0
        %2676 = vmatprep.subr.bf16.mxu0 0
        %2677 = vmatpush2.bf16.msra.mxu0 0
        %2678 = vmatprep.mubr.bf16.mxu0 0
        %2679 = vmatmul.mubr.bf16.gmra.mxu0 %v2644
        %v2680 = vpop.f32.mrf.mxu0
        %v2681 = vadd.f32 0.0, %v2680
        %v2682 = vpop.f32.mrf.mxu0
        %v2683 = vpop.f32.mrf.mxu0
        %v2684 = vpop.f32.mrf.mxu0
        %2685 = vdwg.mxu0
        %v2686 = vadd.f32 %v2447, %v2681
        %v2687 = vmul.f32 %v1964, %v1289
        %v2688 = vmul.f32 %v1964, %v1293
        %2690 = vrot.lane.b32.xlu0 %v2688, 120
        %v2691 = vpop.permute.xlu0 %2690
        %v2693 = vsub.f32 %v2687, %v2691
        %v2694 = vmul.f32 %v1964, %v1302
        %v2695 = vmul.f32 %v1964, %v1306
        %2697 = vrot.lane.b32.xlu0 %v2695, 8
        %v2698 = vpop.permute.xlu0 %2697
        %v2700 = vadd.f32 %v2694, %v2698
        %v2701 = vpack.c.bf16 %v2693, %v2693
        %v2702 = vpack.c.bf16 %v2700, %v2700
        %2704 = vrot.lane.b32.xlu0 %v2702, 72
        %v2705 = vpop.permute.xlu0 %2704
        %v2707 = vsel %vm599, %v2705, 0
        %2709 = vmatprep.subr.bf16.mxu0 0
        %2710 = vmatpush1.bf16.xpose.msra.mxu0 0
        %2711 = vmatprep.subr.bf16.mxu0 0
        %2712 = vmatpush1.bf16.xpose.msra.mxu0 0
        %2713 = vmatprep.subr.bf16.mxu0 0
        %2714 = vmatpush1.bf16.xpose.msra.mxu0 0
        %2715 = vmatprep.subr.bf16.mxu0 0
        %2716 = vmatpush1.bf16.xpose.msra.mxu0 0
        %2717 = vmatprep.subr.bf16.mxu0 0
        %2718 = vmatpush1.bf16.xpose.msra.mxu0 0
        %2719 = vmatprep.subr.bf16.mxu0 0
        %2720 = vmatpush1.bf16.xpose.msra.mxu0 0
        %2721 = vmatprep.subr.bf16.mxu0 0
        %2722 = vmatpush1.bf16.xpose.msra.mxu0 0
        %2723 = vmatprep.subr.bf16.mxu0 0
        %2724 = vmatpush1.bf16.xpose.msra.mxu0 %v2478
        %2725 = vmatprep.subr.bf16.mxu0 0
        %2726 = vmatpush2.bf16.xpose.msra.mxu0 0
        %2727 = vmatprep.subr.bf16.mxu0 0
        %2728 = vmatpush2.bf16.xpose.msra.mxu0 0
        %2729 = vmatprep.subr.bf16.mxu0 0
        %2730 = vmatpush2.bf16.xpose.msra.mxu0 0
        %2731 = vmatprep.subr.bf16.mxu0 0
        %2732 = vmatpush2.bf16.xpose.msra.mxu0 0
        %2733 = vmatprep.subr.bf16.mxu0 0
        %2734 = vmatpush2.bf16.xpose.msra.mxu0 0
        %2735 = vmatprep.subr.bf16.mxu0 0
        %2736 = vmatpush2.bf16.xpose.msra.mxu0 0
        %2737 = vmatprep.subr.bf16.mxu0 0
        %2738 = vmatpush2.bf16.xpose.msra.mxu0 0
        %2739 = vmatprep.subr.bf16.mxu0 0
        %2740 = vmatpush2.bf16.xpose.msra.mxu0 0
        %2741 = vmatprep.mubr.bf16.mxu0 0
        %2742 = vmatmul.mubr.bf16.gmra.mxu0 %v2707
        %v2743 = vpop.f32.mrf.mxu0
        %v2744 = vadd.f32 0.0, %v2743
        %v2745 = vpop.f32.mrf.mxu0
        %v2746 = vpop.f32.mrf.mxu0
        %v2747 = vpop.f32.mrf.mxu0
        %2748 = vdwg.mxu0
        %2750 = vrot.lane.b32.xlu0 %v2701, 80
        %v2751 = vpop.permute.xlu0 %2750
        %v2753 = vsel %vm599, %v2751, 0
        %2755 = vmatprep.subr.bf16.mxu0 0
        %2756 = vmatpush1.bf16.xpose.msra.mxu0 0
        %2757 = vmatprep.subr.bf16.mxu0 0
        %2758 = vmatpush1.bf16.xpose.msra.mxu0 0
        %2759 = vmatprep.subr.bf16.mxu0 0
        %2760 = vmatpush1.bf16.xpose.msra.mxu0 0
        %2761 = vmatprep.subr.bf16.mxu0 0
        %2762 = vmatpush1.bf16.xpose.msra.mxu0 0
        %2763 = vmatprep.subr.bf16.mxu0 0
        %2764 = vmatpush1.bf16.xpose.msra.mxu0 0
        %2765 = vmatprep.subr.bf16.mxu0 0
        %2766 = vmatpush1.bf16.xpose.msra.mxu0 0
        %2767 = vmatprep.subr.bf16.mxu0 0
        %2768 = vmatpush1.bf16.xpose.msra.mxu0 0
        %2769 = vmatprep.subr.bf16.mxu0 0
        %2770 = vmatpush1.bf16.xpose.msra.mxu0 %v2530
        %2771 = vmatprep.subr.bf16.mxu0 0
        %2772 = vmatpush2.bf16.xpose.msra.mxu0 0
        %2773 = vmatprep.subr.bf16.mxu0 0
        %2774 = vmatpush2.bf16.xpose.msra.mxu0 0
        %2775 = vmatprep.subr.bf16.mxu0 0
        %2776 = vmatpush2.bf16.xpose.msra.mxu0 0
        %2777 = vmatprep.subr.bf16.mxu0 0
        %2778 = vmatpush2.bf16.xpose.msra.mxu0 0
        %2779 = vmatprep.subr.bf16.mxu0 0
        %2780 = vmatpush2.bf16.xpose.msra.mxu0 0
        %2781 = vmatprep.subr.bf16.mxu0 0
        %2782 = vmatpush2.bf16.xpose.msra.mxu0 0
        %2783 = vmatprep.subr.bf16.mxu0 0
        %2784 = vmatpush2.bf16.xpose.msra.mxu0 0
        %2785 = vmatprep.subr.bf16.mxu0 0
        %2786 = vmatpush2.bf16.xpose.msra.mxu0 0
        %2787 = vmatprep.mubr.bf16.mxu0 0
        %2788 = vmatmul.mubr.bf16.gmra.mxu0 %v2753
        %v2789 = vpop.f32.mrf.mxu0
        %v2790 = vadd.f32 %v2744, %v2789
        %v2791 = vpop.f32.mrf.mxu0
        %v2792 = vpop.f32.mrf.mxu0
        %v2793 = vpop.f32.mrf.mxu0
        %2794 = vdwg.mxu0
        %v2795 = vmul.f32 %v2790, 0.25
        %v2796 = vsel %vm417, %v2795, -1e+30
        %v2797 = vsel %vm599, %v2796, -inf
        %2798 = vmax.xlane.f32.xlu0 %v2797
        %v2799 = vpop.xlane.xlu0 %2798
        %v2800 = vsub.f32 %v2796, %v2799
        %v2801 = vmul.f32 %v2800, 1.442695
        %v2802 = vpow.pop %v2801
        %v2803 = vsel %vm599, %v2802, 0.0
        %2804 = vadd.xlane.f32.xlu0 %v2803
        %v2805 = vpop.xlane.xlu0 %2804
        %v2806 = vrcp.pop %v2805
        %v2807 = vmul.f32 %v2802, %v2806
        %v2808 = vpack.c.bf16 %v2807, %v2807
        %v2810 = vsel %vm599, %v2808, 0
        %2812 = vmatprep.subr.bf16.mxu0 0
        %2813 = vmatpush1.bf16.msra.mxu0 0
        %2814 = vmatprep.subr.bf16.mxu0 0
        %2815 = vmatpush1.bf16.msra.mxu0 0
        %2816 = vmatprep.subr.bf16.mxu0 0
        %2817 = vmatpush1.bf16.msra.mxu0 0
        %2818 = vmatprep.subr.bf16.mxu0 0
        %2819 = vmatpush1.bf16.msra.mxu0 0
        %2820 = vmatprep.subr.bf16.mxu0 0
        %2821 = vmatpush1.bf16.msra.mxu0 0
        %2822 = vmatprep.subr.bf16.mxu0 0
        %2823 = vmatpush1.bf16.msra.mxu0 0
        %2824 = vmatprep.subr.bf16.mxu0 0
        %2825 = vmatpush1.bf16.msra.mxu0 0
        %2826 = vmatprep.subr.bf16.mxu0 0
        %2827 = vmatpush1.bf16.msra.mxu0 %v2592
        %2828 = vmatprep.subr.bf16.mxu0 0
        %2829 = vmatpush2.bf16.msra.mxu0 0
        %2830 = vmatprep.subr.bf16.mxu0 0
        %2831 = vmatpush2.bf16.msra.mxu0 0
        %2832 = vmatprep.subr.bf16.mxu0 0
        %2833 = vmatpush2.bf16.msra.mxu0 0
        %2834 = vmatprep.subr.bf16.mxu0 0
        %2835 = vmatpush2.bf16.msra.mxu0 0
        %2836 = vmatprep.subr.bf16.mxu0 0
        %2837 = vmatpush2.bf16.msra.mxu0 0
        %2838 = vmatprep.subr.bf16.mxu0 0
        %2839 = vmatpush2.bf16.msra.mxu0 0
        %2840 = vmatprep.subr.bf16.mxu0 0
        %2841 = vmatpush2.bf16.msra.mxu0 0
        %2842 = vmatprep.subr.bf16.mxu0 0
        %2843 = vmatpush2.bf16.msra.mxu0 0
        %2844 = vmatprep.mubr.bf16.mxu0 0
        %2845 = vmatmul.mubr.bf16.gmra.mxu0 %v2810
        %v2846 = vpop.f32.mrf.mxu0
        %v2847 = vadd.f32 0.0, %v2846
        %v2848 = vpop.f32.mrf.mxu0
        %v2849 = vpop.f32.mrf.mxu0
        %v2850 = vpop.f32.mrf.mxu0
        %2851 = vdwg.mxu0
        %v2852 = vpack.c.bf16 %v2847, %v2847
        %v2853 = vld [vmem:[%s2183 + $0x18] sm:$0xf]
        %v2854 = vld [vmem:[%s2183 + $0x1c] sm:$0xf]
        %v2857 = vunpack.c.l.b16 %v2853
        %v2858 = vunpack.c.l.b16 %v2854
        %v2859 = vpack.c.b16 %v2858, %v2857
        %v2862 = vsel %vm948, %v2852, 0
        %2864 = vmatprep.subr.bf16.mxu0 0
        %2865 = vmatpush1.bf16.msra.mxu0 0
        %2866 = vmatprep.subr.bf16.mxu0 0
        %2867 = vmatpush1.bf16.msra.mxu0 0
        %2868 = vmatprep.subr.bf16.mxu0 0
        %2869 = vmatpush1.bf16.msra.mxu0 0
        %2870 = vmatprep.subr.bf16.mxu0 0
        %2871 = vmatpush1.bf16.msra.mxu0 0
        %2872 = vmatprep.subr.bf16.mxu0 0
        %2873 = vmatpush1.bf16.msra.mxu0 0
        %2874 = vmatprep.subr.bf16.mxu0 0
        %2875 = vmatpush1.bf16.msra.mxu0 0
        %2876 = vmatprep.subr.bf16.mxu0 0
        %2877 = vmatpush1.bf16.msra.mxu0 0
        %2878 = vmatprep.subr.bf16.mxu0 0
        %2879 = vmatpush1.bf16.msra.mxu0 %v2859
        %2880 = vmatprep.subr.bf16.mxu0 0
        %2881 = vmatpush2.bf16.msra.mxu0 0
        %2882 = vmatprep.subr.bf16.mxu0 0
        %2883 = vmatpush2.bf16.msra.mxu0 0
        %2884 = vmatprep.subr.bf16.mxu0 0
        %2885 = vmatpush2.bf16.msra.mxu0 0
        %2886 = vmatprep.subr.bf16.mxu0 0
        %2887 = vmatpush2.bf16.msra.mxu0 0
        %2888 = vmatprep.subr.bf16.mxu0 0
        %2889 = vmatpush2.bf16.msra.mxu0 0
        %2890 = vmatprep.subr.bf16.mxu0 0
        %2891 = vmatpush2.bf16.msra.mxu0 0
        %2892 = vmatprep.subr.bf16.mxu0 0
        %2893 = vmatpush2.bf16.msra.mxu0 0
        %2894 = vmatprep.subr.bf16.mxu0 0
        %2895 = vmatpush2.bf16.msra.mxu0 0
        %2896 = vmatprep.mubr.bf16.mxu0 0
        %2897 = vmatmul.mubr.bf16.gmra.mxu0 %v2862
        %v2898 = vpop.f32.mrf.mxu0
        %v2899 = vadd.f32 0.0, %v2898
        %v2900 = vpop.f32.mrf.mxu0
        %v2901 = vpop.f32.mrf.mxu0
        %v2902 = vpop.f32.mrf.mxu0
        %2903 = vdwg.mxu0
        %v2904 = vadd.f32 %v2686, %v2899
        %v2905 = vadd.f32 %v1874, %v2904
        %s2906 = scalar_lea.vmem %s6, 1
        %v2907 = vld [vmem:[%s2906] sm:$0x1]
        %v2908 = vmul.f32 %v2905, %v2905
        %v2909 = vsel %vm420, %v2908, 0.0
        %2910 = vadd.xlane.f32.xlu0 %v2909
        %v2911 = vpop.xlane.xlu0 %2910
        %v2912 = vmul.f32 %v2911, %v424
        %v2913 = vadd.f32 %v2912, 1e-06
        %v2914 = vrsqrt.pop %v2913
        %v2915 = vmul.f32 %v2905, %v2914
        %v2917 = vlaneseq
        %v2918 = vshrl.u32 %v2917, 7
        %v2919 = vsub.s32 0, %v2918
        %v2920 = vrot.slane %v2907, %v2919
        %v2922 = vmul.f32 %v2915, %v2920
        %v2923 = vpack.c.bf16 %v2922, %v2922
        %s2924 = scalar_lea.vmem %s7, 64
        %v2925 = vld [vmem:[%s2924] sm:$0xff]
        %v2926 = vld [vmem:[%s2924 + $0x8] sm:$0xff]
        %v2927 = vld [vmem:[%s2924 + $0x10] sm:$0xff]
        %v2928 = vld [vmem:[%s2924 + $0x18] sm:$0xff]
        %v2929 = vld [vmem:[%s2924 + $0x20] sm:$0xff]
        %v2930 = vld [vmem:[%s2924 + $0x28] sm:$0xff]
        %v2931 = vld [vmem:[%s2924 + $0x30] sm:$0xff]
        %v2932 = vld [vmem:[%s2924 + $0x38] sm:$0xff]
        %v2941 = vunpack.c.l.b16 %v2925
        %v2942 = vunpack.c.h.b16 %v2925
        %v2943 = vunpack.c.l.b16 %v2926
        %v2944 = vunpack.c.h.b16 %v2926
        %v2945 = vunpack.c.l.b16 %v2927
        %v2946 = vunpack.c.h.b16 %v2927
        %v2947 = vunpack.c.l.b16 %v2928
        %v2948 = vunpack.c.h.b16 %v2928
        %v2949 = vunpack.c.l.b16 %v2929
        %v2950 = vunpack.c.h.b16 %v2929
        %v2951 = vunpack.c.l.b16 %v2930
        %v2952 = vunpack.c.h.b16 %v2930
        %v2953 = vunpack.c.l.b16 %v2931
        %v2954 = vunpack.c.h.b16 %v2931
        %v2955 = vunpack.c.l.b16 %v2932
        %v2956 = vunpack.c.h.b16 %v2932
        %v2957 = vpack.c.b16 %v2943, %v2941
        %v2958 = vpack.c.b16 %v2944, %v2942
        %v2959 = vpack.c.b16 %v2947, %v2945
        %v2960 = vpack.c.b16 %v2948, %v2946
        %v2961 = vpack.c.b16 %v2951, %v2949
        %v2962 = vpack.c.b16 %v2952, %v2950
        %v2963 = vpack.c.b16 %v2955, %v2953
        %v2964 = vpack.c.b16 %v2956, %v2954
        %v2974 = vsel %vm420, %v2923, 0
        %2976 = vmatprep.subr.bf16.mxu0 0
        %2977 = vmatpush1.bf16.msra.mxu0 0
        %2978 = vmatprep.subr.bf16.mxu0 0
        %2979 = vmatpush1.bf16.msra.mxu0 0
        %2980 = vmatprep.subr.bf16.mxu0 0
        %2981 = vmatpush1.bf16.msra.mxu0 0
        %2982 = vmatprep.subr.bf16.mxu0 0
        %2983 = vmatpush1.bf16.msra.mxu0 0
        %2984 = vmatprep.subr.bf16.mxu0 %v2964
        %2985 = vmatpush1.bf16.msra.mxu0 %v2963
        %2986 = vmatprep.subr.bf16.mxu0 %v2962
        %2987 = vmatpush1.bf16.msra.mxu0 %v2961
        %2988 = vmatprep.subr.bf16.mxu0 %v2960
        %2989 = vmatpush1.bf16.msra.mxu0 %v2959
        %2990 = vmatprep.subr.bf16.mxu0 %v2958
        %2991 = vmatpush1.bf16.msra.mxu0 %v2957
        %2992 = vmatprep.subr.bf16.mxu0 0
        %2993 = vmatpush2.bf16.msra.mxu0 0
        %2994 = vmatprep.subr.bf16.mxu0 0
        %2995 = vmatpush2.bf16.msra.mxu0 0
        %2996 = vmatprep.subr.bf16.mxu0 0
        %2997 = vmatpush2.bf16.msra.mxu0 0
        %2998 = vmatprep.subr.bf16.mxu0 0
        %2999 = vmatpush2.bf16.msra.mxu0 0
        %3000 = vmatprep.subr.bf16.mxu0 0
        %3001 = vmatpush2.bf16.msra.mxu0 0
        %3002 = vmatprep.subr.bf16.mxu0 0
        %3003 = vmatpush2.bf16.msra.mxu0 0
        %3004 = vmatprep.subr.bf16.mxu0 0
        %3005 = vmatpush2.bf16.msra.mxu0 0
        %3006 = vmatprep.subr.bf16.mxu0 0
        %3007 = vmatpush2.bf16.msra.mxu0 0
        %3008 = vmatprep.mubr.bf16.mxu0 0
        %3009 = vmatmul.mubr.bf16.gmra.mxu0 %v2974
        %v3010 = vpop.f32.mrf.mxu0
        %v3011 = vadd.f32 0.0, %v3010
        %v3012 = vpop.f32.mrf.mxu0
        %v3013 = vadd.f32 0.0, %v3012
        %v3014 = vpop.f32.mrf.mxu0
        %v3015 = vpop.f32.mrf.mxu0
        %3016 = vdwg.mxu0
        %s3017 = scalar_lea.vmem %s8, 64
        %v3018 = vld [vmem:[%s3017] sm:$0xff]
        %v3019 = vld [vmem:[%s3017 + $0x8] sm:$0xff]
        %v3020 = vld [vmem:[%s3017 + $0x10] sm:$0xff]
        %v3021 = vld [vmem:[%s3017 + $0x18] sm:$0xff]
        %v3022 = vld [vmem:[%s3017 + $0x20] sm:$0xff]
        %v3023 = vld [vmem:[%s3017 + $0x28] sm:$0xff]
        %v3024 = vld [vmem:[%s3017 + $0x30] sm:$0xff]
        %v3025 = vld [vmem:[%s3017 + $0x38] sm:$0xff]
        %v3034 = vunpack.c.l.b16 %v3018
        %v3035 = vunpack.c.h.b16 %v3018
        %v3036 = vunpack.c.l.b16 %v3019
        %v3037 = vunpack.c.h.b16 %v3019
        %v3038 = vunpack.c.l.b16 %v3020
        %v3039 = vunpack.c.h.b16 %v3020
        %v3040 = vunpack.c.l.b16 %v3021
        %v3041 = vunpack.c.h.b16 %v3021
        %v3042 = vunpack.c.l.b16 %v3022
        %v3043 = vunpack.c.h.b16 %v3022
        %v3044 = vunpack.c.l.b16 %v3023
        %v3045 = vunpack.c.h.b16 %v3023
        %v3046 = vunpack.c.l.b16 %v3024
        %v3047 = vunpack.c.h.b16 %v3024
        %v3048 = vunpack.c.l.b16 %v3025
        %v3049 = vunpack.c.h.b16 %v3025
        %v3050 = vpack.c.b16 %v3036, %v3034
        %v3051 = vpack.c.b16 %v3037, %v3035
        %v3052 = vpack.c.b16 %v3040, %v3038
        %v3053 = vpack.c.b16 %v3041, %v3039
        %v3054 = vpack.c.b16 %v3044, %v3042
        %v3055 = vpack.c.b16 %v3045, %v3043
        %v3056 = vpack.c.b16 %v3048, %v3046
        %v3057 = vpack.c.b16 %v3049, %v3047
        %3066 = vmatprep.subr.bf16.mxu0 0
        %3067 = vmatpush1.bf16.msra.mxu0 0
        %3068 = vmatprep.subr.bf16.mxu0 0
        %3069 = vmatpush1.bf16.msra.mxu0 0
        %3070 = vmatprep.subr.bf16.mxu0 0
        %3071 = vmatpush1.bf16.msra.mxu0 0
        %3072 = vmatprep.subr.bf16.mxu0 0
        %3073 = vmatpush1.bf16.msra.mxu0 0
        %3074 = vmatprep.subr.bf16.mxu0 %v3057
        %3075 = vmatpush1.bf16.msra.mxu0 %v3056
        %3076 = vmatprep.subr.bf16.mxu0 %v3055
        %3077 = vmatpush1.bf16.msra.mxu0 %v3054
        %3078 = vmatprep.subr.bf16.mxu0 %v3053
        %3079 = vmatpush1.bf16.msra.mxu0 %v3052
        %3080 = vmatprep.subr.bf16.mxu0 %v3051
        %3081 = vmatpush1.bf16.msra.mxu0 %v3050
        %3082 = vmatprep.subr.bf16.mxu0 0
        %3083 = vmatpush2.bf16.msra.mxu0 0
        %3084 = vmatprep.subr.bf16.mxu0 0
        %3085 = vmatpush2.bf16.msra.mxu0 0
        %3086 = vmatprep.subr.bf16.mxu0 0
        %3087 = vmatpush2.bf16.msra.mxu0 0
        %3088 = vmatprep.subr.bf16.mxu0 0
        %3089 = vmatpush2.bf16.msra.mxu0 0
        %3090 = vmatprep.subr.bf16.mxu0 0
        %3091 = vmatpush2.bf16.msra.mxu0 0
        %3092 = vmatprep.subr.bf16.mxu0 0
        %3093 = vmatpush2.bf16.msra.mxu0 0
        %3094 = vmatprep.subr.bf16.mxu0 0
        %3095 = vmatpush2.bf16.msra.mxu0 0
        %3096 = vmatprep.subr.bf16.mxu0 0
        %3097 = vmatpush2.bf16.msra.mxu0 0
        %3098 = vmatprep.mubr.bf16.mxu0 0
        %3099 = vmatmul.mubr.bf16.gmra.mxu0 %v2974
        %v3100 = vpop.f32.mrf.mxu0
        %v3101 = vadd.f32 0.0, %v3100
        %v3102 = vpop.f32.mrf.mxu0
        %v3103 = vadd.f32 0.0, %v3102
        %v3104 = vpop.f32.mrf.mxu0
        %v3105 = vpop.f32.mrf.mxu0
        %3106 = vdwg.mxu0
        %v3107 = vxor.u32 %v3011, 2147483648
        %v3108 = vxor.u32 %v3013, 2147483648
        %v3109 = vmul.f32 %v3107, 1.442695
        %v3110 = vpow.pop %v3109
        %v3111 = vmul.f32 %v3108, 1.442695
        %v3112 = vpow.pop %v3111
        %v3113 = vadd.f32 %v3110, 1.0
        %v3114 = vadd.f32 %v3112, 1.0
        %v3115 = vrcp.pop %v3113
        %v3116 = vmul.f32 1.0, %v3115
        %v3117 = vrcp.pop %v3114
        %v3118 = vmul.f32 1.0, %v3117
        %v3119 = vmul.f32 %v3011, %v3116
        %v3120 = vmul.f32 %v3013, %v3118
        %v3121 = vmul.f32 %v3119, %v3101
        %v3122 = vmul.f32 %v3120, %v3103
        %v3123 = vpack.c.bf16 %v3121, %v3121
        %v3124 = vpack.c.bf16 %v3122, %v3122
        %s3125 = scalar_lea.vmem %s9, 96
        %v3126 = vld [vmem:[%s3125] sm:$0xf]
        %v3127 = vld [vmem:[%s3125 + $0x4] sm:$0xf]
        %v3128 = vld [vmem:[%s3125 + $0x8] sm:$0xf]
        %v3129 = vld [vmem:[%s3125 + $0xc] sm:$0xf]
        %v3130 = vld [vmem:[%s3125 + $0x10] sm:$0xf]
        %v3131 = vld [vmem:[%s3125 + $0x14] sm:$0xf]
        %v3132 = vld [vmem:[%s3125 + $0x18] sm:$0xf]
        %v3133 = vld [vmem:[%s3125 + $0x1c] sm:$0xf]
        %v3134 = vld [vmem:[%s3125 + $0x20] sm:$0xf]
        %v3135 = vld [vmem:[%s3125 + $0x24] sm:$0xf]
        %v3136 = vld [vmem:[%s3125 + $0x28] sm:$0xf]
        %v3137 = vld [vmem:[%s3125 + $0x2c] sm:$0xf]
        %v3138 = vld [vmem:[%s3125 + $0x30] sm:$0xf]
        %v3139 = vld [vmem:[%s3125 + $0x34] sm:$0xf]
        %v3140 = vld [vmem:[%s3125 + $0x38] sm:$0xf]
        %v3141 = vld [vmem:[%s3125 + $0x3c] sm:$0xf]
        %v3142 = vld [vmem:[%s3125 + $0x40] sm:$0xf]
        %v3143 = vld [vmem:[%s3125 + $0x44] sm:$0xf]
        %v3144 = vld [vmem:[%s3125 + $0x48] sm:$0xf]
        %v3145 = vld [vmem:[%s3125 + $0x4c] sm:$0xf]
        %v3146 = vld [vmem:[%s3125 + $0x50] sm:$0xf]
        %v3147 = vld [vmem:[%s3125 + $0x54] sm:$0xf]
        %v3148 = vld [vmem:[%s3125 + $0x58] sm:$0xf]
        %v3149 = vld [vmem:[%s3125 + $0x5c] sm:$0xf]
        %v3174 = vunpack.c.l.b16 %v3126
        %v3175 = vunpack.c.l.b16 %v3127
        %v3176 = vunpack.c.l.b16 %v3128
        %v3177 = vunpack.c.l.b16 %v3129
        %v3178 = vunpack.c.l.b16 %v3130
        %v3179 = vunpack.c.l.b16 %v3131
        %v3180 = vunpack.c.l.b16 %v3132
        %v3181 = vunpack.c.l.b16 %v3133
        %v3182 = vunpack.c.l.b16 %v3134
        %v3183 = vunpack.c.l.b16 %v3135
        %v3184 = vunpack.c.l.b16 %v3136
        %v3185 = vunpack.c.l.b16 %v3137
        %v3186 = vunpack.c.l.b16 %v3138
        %v3187 = vunpack.c.l.b16 %v3139
        %v3188 = vunpack.c.l.b16 %v3140
        %v3189 = vunpack.c.l.b16 %v3141
        %v3190 = vunpack.c.l.b16 %v3142
        %v3191 = vunpack.c.l.b16 %v3143
        %v3192 = vunpack.c.l.b16 %v3144
        %v3193 = vunpack.c.l.b16 %v3145
        %v3194 = vunpack.c.l.b16 %v3146
        %v3195 = vunpack.c.l.b16 %v3147
        %v3196 = vunpack.c.l.b16 %v3148
        %v3197 = vunpack.c.l.b16 %v3149
        %v3198 = vpack.c.b16 %v3175, %v3174
        %v3199 = vpack.c.b16 %v3177, %v3176
        %v3200 = vpack.c.b16 %v3179, %v3178
        %v3201 = vpack.c.b16 %v3181, %v3180
        %v3202 = vpack.c.b16 %v3183, %v3182
        %v3203 = vpack.c.b16 %v3185, %v3184
        %v3204 = vpack.c.b16 %v3187, %v3186
        %v3205 = vpack.c.b16 %v3189, %v3188
        %v3206 = vpack.c.b16 %v3191, %v3190
        %v3207 = vpack.c.b16 %v3193, %v3192
        %v3208 = vpack.c.b16 %v3195, %v3194
        %v3209 = vpack.c.b16 %v3197, %v3196
        %v3223 = vsel %vm420, %v3124, 0
        %3225 = vmatprep.subr.bf16.mxu0 0
        %3226 = vmatpush1.bf16.msra.mxu0 %v3205
        %3227 = vmatprep.subr.bf16.mxu0 0
        %3228 = vmatpush1.bf16.msra.mxu0 %v3204
        %3229 = vmatprep.subr.bf16.mxu0 0
        %3230 = vmatpush1.bf16.msra.mxu0 %v3203
        %3231 = vmatprep.subr.bf16.mxu0 0
        %3232 = vmatpush1.bf16.msra.mxu0 %v3202
        %3233 = vmatprep.subr.bf16.mxu0 0
        %3234 = vmatpush1.bf16.msra.mxu0 %v3201
        %3235 = vmatprep.subr.bf16.mxu0 0
        %3236 = vmatpush1.bf16.msra.mxu0 %v3200
        %3237 = vmatprep.subr.bf16.mxu0 0
        %3238 = vmatpush1.bf16.msra.mxu0 %v3199
        %3239 = vmatprep.subr.bf16.mxu0 0
        %3240 = vmatpush1.bf16.msra.mxu0 %v3198
        %3241 = vmatprep.subr.bf16.mxu0 0
        %3242 = vmatpush2.bf16.msra.mxu0 0
        %3243 = vmatprep.subr.bf16.mxu0 0
        %3244 = vmatpush2.bf16.msra.mxu0 0
        %3245 = vmatprep.subr.bf16.mxu0 0
        %3246 = vmatpush2.bf16.msra.mxu0 0
        %3247 = vmatprep.subr.bf16.mxu0 0
        %3248 = vmatpush2.bf16.msra.mxu0 0
        %3249 = vmatprep.subr.bf16.mxu0 0
        %3250 = vmatpush2.bf16.msra.mxu0 %v3209
        %3251 = vmatprep.subr.bf16.mxu0 0
        %3252 = vmatpush2.bf16.msra.mxu0 %v3208
        %3253 = vmatprep.subr.bf16.mxu0 0
        %3254 = vmatpush2.bf16.msra.mxu0 %v3207
        %3255 = vmatprep.subr.bf16.mxu0 0
        %3256 = vmatpush2.bf16.msra.mxu0 %v3206
        %3257 = vmatprep.mubr.bf16.mxu0 %v3223
        %3258 = vmatmul.mubr.bf16.gmra.mxu0 %v3123
        %v3259 = vpop.f32.mrf.mxu0
        %v3260 = vadd.f32 0.0, %v3259
        %v3261 = vpop.f32.mrf.mxu0
        %v3262 = vpop.f32.mrf.mxu0
        %v3263 = vpop.f32.mrf.mxu0
        %3264 = vdwg.mxu0
        %v3265 = vadd.f32 %v2905, %v3260
        %v3266 = vld [vmem:[%s10] sm:$0x1]
        %v3267 = vmul.f32 %v3265, %v3265
        %v3268 = vsel %vm420, %v3267, 0.0
        %3269 = vadd.xlane.f32.xlu0 %v3268
        %v3270 = vpop.xlane.xlu0 %3269
        %v3271 = vmul.f32 %v3270, %v424
        %v3272 = vadd.f32 %v3271, 1e-06
        %v3273 = vrsqrt.pop %v3272
        %v3274 = vmul.f32 %v3265, %v3273
        %v3276 = vlaneseq
        %v3277 = vshrl.u32 %v3276, 7
        %v3278 = vsub.s32 0, %v3277
        %v3279 = vrot.slane %v3266, %v3278
        %v3281 = vmul.f32 %v3274, %v3279
        %v3282 = vpack.c.bf16 %v3281, %v3281
        %v3283 = vld [vmem:[%s11] sm:$0xf]
        %v3284 = vld [vmem:[%s11 + $0x4] sm:$0xf]
        %v3285 = vld [vmem:[%s11 + $0x8] sm:$0xf]
        %v3286 = vld [vmem:[%s11 + $0xc] sm:$0xf]
        %v3287 = vld [vmem:[%s11 + $0x10] sm:$0xf]
        %v3288 = vld [vmem:[%s11 + $0x14] sm:$0xf]
        %v3289 = vld [vmem:[%s11 + $0x18] sm:$0xf]
        %v3290 = vld [vmem:[%s11 + $0x1c] sm:$0xf]
        %v3299 = vunpack.c.l.b16 %v3283
        %v3300 = vunpack.c.l.b16 %v3284
        %v3301 = vunpack.c.l.b16 %v3285
        %v3302 = vunpack.c.l.b16 %v3286
        %v3303 = vunpack.c.l.b16 %v3287
        %v3304 = vunpack.c.l.b16 %v3288
        %v3305 = vunpack.c.l.b16 %v3289
        %v3306 = vunpack.c.l.b16 %v3290
        %v3307 = vpack.c.b16 %v3300, %v3299
        %v3308 = vpack.c.b16 %v3302, %v3301
        %v3309 = vpack.c.b16 %v3304, %v3303
        %v3310 = vpack.c.b16 %v3306, %v3305
        %v3316 = vsel %vm420, %v3282, 0
        %3318 = vmatprep.subr.bf16.mxu0 0
        %3319 = vmatpush1.bf16.msra.mxu0 0
        %3320 = vmatprep.subr.bf16.mxu0 0
        %3321 = vmatpush1.bf16.msra.mxu0 0
        %3322 = vmatprep.subr.bf16.mxu0 0
        %3323 = vmatpush1.bf16.msra.mxu0 0
        %3324 = vmatprep.subr.bf16.mxu0 0
        %3325 = vmatpush1.bf16.msra.mxu0 0
        %3326 = vmatprep.subr.bf16.mxu0 0
        %3327 = vmatpush1.bf16.msra.mxu0 %v3310
        %3328 = vmatprep.subr.bf16.mxu0 0
        %3329 = vmatpush1.bf16.msra.mxu0 %v3309
        %3330 = vmatprep.subr.bf16.mxu0 0
        %3331 = vmatpush1.bf16.msra.mxu0 %v3308
        %3332 = vmatprep.subr.bf16.mxu0 0
        %3333 = vmatpush1.bf16.msra.mxu0 %v3307
        %3334 = vmatprep.subr.bf16.mxu0 0
        %3335 = vmatpush2.bf16.msra.mxu0 0
        %3336 = vmatprep.subr.bf16.mxu0 0
        %3337 = vmatpush2.bf16.msra.mxu0 0
        %3338 = vmatprep.subr.bf16.mxu0 0
        %3339 = vmatpush2.bf16.msra.mxu0 0
        %3340 = vmatprep.subr.bf16.mxu0 0
        %3341 = vmatpush2.bf16.msra.mxu0 0
        %3342 = vmatprep.subr.bf16.mxu0 0
        %3343 = vmatpush2.bf16.msra.mxu0 0
        %3344 = vmatprep.subr.bf16.mxu0 0
        %3345 = vmatpush2.bf16.msra.mxu0 0
        %3346 = vmatprep.subr.bf16.mxu0 0
        %3347 = vmatpush2.bf16.msra.mxu0 0
        %3348 = vmatprep.subr.bf16.mxu0 0
        %3349 = vmatpush2.bf16.msra.mxu0 0
        %3350 = vmatprep.mubr.bf16.mxu0 0
        %3351 = vmatmul.mubr.bf16.gmra.mxu0 %v3316
        %v3352 = vpop.f32.mrf.mxu0
        %v3353 = vadd.f32 0.0, %v3352
        %v3354 = vpop.f32.mrf.mxu0
        %v3355 = vpop.f32.mrf.mxu0
        %v3356 = vpop.f32.mrf.mxu0
        %3357 = vdwg.mxu0
        %3358 = vst [vmem:[%s404] sm:$0xff] %v3353
        %s3359 = sand.u32 %s291, 1
        %s3360 = scalar_lea.sflag [#allocation3], %s3359
        %s3361 = sand.u32 %s291, 1
        %s3362 = smul.addr %s3361, 8
        %s3363 = scalar_lea.vmem [#allocation2], %s3362
        // Predicated region
        $region69: #{llama_forward.1} parent=67 // pred_check
          %p3364 = pneg %p301
        $region70: #{llama_forward.1} parent=67 // pred_check_branch
          %3366 = sbr.rel (%p3364) target = $region72
        $region71: #{llama_forward.1} parent=67 // pred_region
          %s3368 = ssub.s32 128, 128
          %3369 = vsyncadd %s3360, %s3368
          %s3370 = smul.addr %s26, 128
          %s3371 = scalar_lea.hbm %s12, %s3370
          %s3373 = sshll.u32 %s3363, 4
          %s3374 = int_to_ptr.vmem [resolvable:$true] %s3373
          %3376 = dma.vmem_to_hbm [thread:$0]  %s3374, 128, %s3371, %s3360
        $region72: #{llama_forward.1} parent=67 // pred_fallthru
          _
      $region68: #{llama_forward.1} parent=5 // pred_fallthru
        _
      %p3377 = scmp.le.s32.totalorder 2, %s21
      // Predicated region
      $region73: #{llama_forward.1} parent=5 // pred_check
        %p3378 = pneg %p3377
      $region74: #{llama_forward.1} parent=5 // pred_check_branch
        %3380 = sbr.rel (%p3378) target = $region76
      $region75: #{llama_forward.1} parent=5 // pred_region
        %s3381 = ssub.s32 %s21, 2
        // Predicated region
        $region77: #{llama_forward.1} parent=75 // pred_check
          %p3382 = pneg %p307
        $region78: #{llama_forward.1} parent=75 // pred_check_branch
          %3384 = sbr.rel (%p3382) target = $region80
        $region79: #{llama_forward.1} parent=75 // pred_region
          %s3385 = sand.u32 %s292, 1
          %s3386 = scalar_lea.sflag [#allocation3], %s3385
          %s3387 = sand.u32 %s292, 1
          %s3388 = smul.addr %s3387, 8
          %s3389 = scalar_lea.vmem [#allocation2], %s3388
          %3390 = dma.done %s3386, 128
        $region80: #{llama_forward.1} parent=75 // pred_fallthru
          _
      $region76: #{llama_forward.1} parent=5 // pred_fallthru
        _
    $region6: #{llama_forward.1} parent=1 // loop_footer
      %s25 = sadd.s32 1, %s21
    $region7: #{llama_forward.1} parent=1 // loop_footer_branch
      %20 = sbr.rel target = $region3
    $region8: #{llama_forward.1} parent=1 // loop_exit
      _
    %3391 = vsyncpa [#allocation3], 1
    %s3392 = scalar_lea.sflag [#allocation3], 1
    %3393 = vsyncpa %s3392, 1

</llo_original>
